<compile_context>
chip_gen: v6e
topology: v6e:2x2x1
jax: 0.10.0
libtpu: 0.0.40
codegen_flags: <defaults>
</compile_context>

<pallas_src>
import numpy as np

import jax
import jax.numpy as jnp
from jax import lax
from jax.experimental import pallas as pl
from jax.experimental.pallas import tpu as pltpu

# ----------------------------- hparams ------------------------------------
SCALE = 0.5
L = 4                       # hash-grid levels
F = 2                       # features per level
LOG2_T = 10
T = 1 << LOG2_T             # hash table size per level (power of two)
N_MIN = 16
N_MAX = 128
B_GROWTH = float(np.exp(np.log(N_MAX * SCALE / N_MIN) / (L - 1)))
EMBED_SIZE = L * F          # embed_mode == 'sum' requires embed_size == L*F
NUM_SCENE = 3
DENSITY_HIDDEN = 64
DENSITY_OUT = 16
SH_DIM = 16                 # SphericalHarmonics degree 4
RGB_CHANNELS = 64
RGB_LAYERS = 2

# hi/lo factorization of the hash index: idx = hi*LO + lo
LO = 128                    # lane-sized low factor
LO_BITS = 7
HI = T // LO                # 8
assert HI * LO == T and (1 << LO_BITS) == LO

BLOCK_N = 512               # points per grid step (point axis on lanes)
MIN_GRID_STEPS = 4          # keep >=4 steps so v7x's 2 TCs both get work
N_PTS = 512                 # number of query points in the demo

PRIMES = (1, 2654435761, 805459861)


# ------------------------- shared SH helper ---------------------------------
def sh_degree4(x, y, z):
    """Degree-4 spherical harmonics terms (tcnn constants). x/y/z broadcast."""
    xy, xz, yz = x * y, x * z, y * z
    x2, y2, z2 = x * x, y * y, z * z
    return [
        jnp.full_like(x, 0.28209479177387814),
        -0.48860251190291987 * y,
        0.48860251190291987 * z,
        -0.48860251190291987 * x,
        1.0925484305920792 * xy,
        -1.0925484305920792 * yz,
        0.94617469575755997 * z2 - 0.31539156525251999,
        -1.0925484305920792 * xz,
        0.54627421529603959 * (x2 - y2),
        0.59004358992664352 * y * (-3.0 * x2 + y2),
        2.8906114426405538 * xy * z,
        0.45704579946446572 * y * (1.0 - 5.0 * z2),
        0.3731763325901154 * z * (5.0 * z2 - 3.0),
        0.45704579946446572 * x * (1.0 - 5.0 * z2),
        1.4453057213202769 * z * (x2 - y2),
        0.59004358992664352 * x * (x2 - 3.0 * y2),
    ]


# --------------------------- Pallas kernel ---------------------------------
def ngp_forward_kernel(gidx_ref, w_ref, embed_ref, d_ref, tableW_ref,
                       wd1_ref, wd2_ref, wr1sh_ref, wr1h_ref, wr2_ref, wr3_ref,
                       out_ref):
    bn = gidx_ref.shape[1]            # points in this block (lanes)

    # ---- hoisted constants (reused by all 32 corners) ----
    lo_iota = lax.broadcasted_iota(jnp.int32, (LO, bn), 0)            # (128,bn)
    # row r = f*HI + h of the MXU partial corresponds to hi-slot h = r & 7
    hi_iota = lax.broadcasted_iota(jnp.int32, (F * HI, bn), 0) & (HI - 1)

    gidx = gidx_ref[...]                                              # (32,bn)
    w_all = w_ref[...]                                                # (32,bn)
    lo_all = gidx & (LO - 1)
    hi_all = gidx >> LO_BITS
    tblW = tableW_ref[...]                                            # (64,128) bf16

    # ---- hash-grid gather: factorized hi/lo one-hot per corner ----
    # Per corner: (128, bn) unweighted 'lo' one-hot -> MXU contract against the
    # level's (F*8, 128) table view -> (16, bn) partial holding the table value
    # for every hi slot; a tiny (16, bn) hi-mask carrying the f32 trilinear
    # weight selects the right slot and accumulates.  Hash collisions inside a
    # level still add naturally (separate corners, same idx).
    feat_rows = []
    for lvl in range(L):
        w_lvl = tblW[lvl * F * HI:(lvl + 1) * F * HI, :]              # (16,128)
        acc = jnp.zeros((F * HI, bn), jnp.float32)
        for c in range(8):
            k = lvl * 8 + c
            lo = lo_all[k:k + 1, :]                                   # (1,bn)
            hi = hi_all[k:k + 1, :]                                   # (1,bn)
            wgt = w_all[k:k + 1, :]                                   # (1,bn) f32
            # compare/select in 32-bit, single bf16 cast before the dot
            # (v5e-safe; exact since values are 0/1).
            onehot = jnp.where(lo_iota == lo, 1.0, 0.0).astype(jnp.bfloat16)
            part = jnp.dot(w_lvl, onehot,
                           preferred_element_type=jnp.float32)        # (16,bn)
            mask = jnp.where(hi_iota == hi, wgt, 0.0)                 # (16,bn)
            acc = acc + part * mask
        # reduce the 8 hi slots per feature (one cross-sublane sum per feature)
        for f in range(F):
            feat_rows.append(jnp.sum(acc[f * HI:(f + 1) * HI, :],
                                     axis=0, keepdims=True))          # (1,bn)
    feat = jnp.concatenate(feat_rows, axis=0) + embed_ref[...]        # (8,bn)

    # ---- density net (feature-major, bf16 MXU): 8 -> 64 -> 16, ReLU ----
    h1 = jnp.maximum(
        jnp.dot(wd1_ref[...], feat.astype(jnp.bfloat16),
                preferred_element_type=jnp.float32), 0.0)
    h = jnp.dot(wd2_ref[...], h1.astype(jnp.bfloat16),
                preferred_element_type=jnp.float32)                   # (16,bn)
    # TruncExp forward == exp (the clamp in real TruncExp is gradient-only)
    sigma = jnp.exp(h[0:1, :])                                        # (1,bn)

    # ---- direction: normalize + spherical harmonics degree 4 (in regs) ----
    # (d+1)/2 followed by tcnn's internal 2x-1 cancels -> SH of unit d.
    dx = d_ref[0:1, :]
    dy = d_ref[1:2, :]
    dz = d_ref[2:3, :]
    inv_norm = lax.rsqrt(dx * dx + dy * dy + dz * dz)
    x = dx * inv_norm
    y = dy * inv_norm
    z = dz * inv_norm
    sh = jnp.concatenate(sh_degree4(x, y, z), axis=0)                 # (16,bn)

    # ---- rgb net: [sh | h] -> 64 -> 64 -> 3, Sigmoid (wr1 pre-split) ----
    r = jnp.maximum(
        jnp.dot(wr1sh_ref[...], sh.astype(jnp.bfloat16),
                preferred_element_type=jnp.float32)
        + jnp.dot(wr1h_ref[...], h.astype(jnp.bfloat16),
                  preferred_element_type=jnp.float32), 0.0)
    r = jnp.maximum(
        jnp.dot(wr2_ref[...], r.astype(jnp.bfloat16),
                preferred_element_type=jnp.float32), 0.0)
    rgb = jax.nn.sigmoid(
        jnp.dot(wr3_ref[...], r.astype(jnp.bfloat16),
                preferred_element_type=jnp.float32))                  # (3,bn)

    # ---- single fused lane-dense output: row 0 = sigma, rows 1..3 = rgb ----
    out_ref[...] = jnp.concatenate([sigma, rgb], axis=0)


# ------------------------ hash-grid index glue ------------------------------
def hash_grid_indices_weights(x01):
    """x01: (N,3) in [0,1]. Returns per-level hash indices in [0, T) and
    trilinear weights, feature-major shapes (L*8, N) int32 / float32."""
    gidx_rows, w_rows = [], []
    for lvl in range(L):
        scale_l = N_MIN * (B_GROWTH ** lvl) - 1.0
        res = int(np.ceil(scale_l)) + 1
        pos = x01 * scale_l + 0.5
        pos_f = jnp.floor(pos)
        frac = pos - pos_f
        base = pos_f.astype(jnp.uint32)                     # (N, 3)
        dense = (res ** 3) <= T
        for c in range(8):
            off = np.array([(c >> 0) & 1, (c >> 1) & 1, (c >> 2) & 1],
                           dtype=np.uint32)
            corner = base + off[None, :]
            if dense:
                idx = (corner[:, 0] + corner[:, 1] * res
                       + corner[:, 2] * res * res).astype(jnp.int32)
                # guard: keep in [0, T) (never triggers with this config)
                idx = jnp.minimum(idx, T - 1)
            else:
                h = ((corner[:, 0] * jnp.uint32(PRIMES[0]))
                     ^ (corner[:, 1] * jnp.uint32(PRIMES[1]))
                     ^ (corner[:, 2] * jnp.uint32(PRIMES[2])))
                idx = (h & jnp.uint32(T - 1)).astype(jnp.int32)
            gidx_rows.append(idx)
            wc = jnp.prod(jnp.where(off[None, :] == 1, frac, 1.0 - frac),
                          axis=1)
            w_rows.append(wc)
    gidx = jnp.stack(gidx_rows, axis=0).astype(jnp.int32)   # (L*8, N)
    w = jnp.stack(w_rows, axis=0).astype(jnp.float32)       # (L*8, N)
    return gidx, w


# ------------------------------ wrapper -------------------------------------
def ngp_forward(x, d, embed_idx, params, block_n=BLOCK_N):
    """x: (N,3) in [-scale, scale], d: (N,3), embed_idx: (N,) int32.
    Returns (sigmas (N,), rgbs (N,3))."""
    n = x.shape[0]
    # normalize to [0,1]^3   (xyz_min = -scale, xyz_max = +scale)
    x01 = (x + SCALE) / (2.0 * SCALE)
    gidx, w = hash_grid_indices_weights(x01)                # (L*8, N)
    embed_t = params['scene_embed'][embed_idx].T            # (L*F, N)
    d_t = d.T                                               # (3,   N)

    # Pick the block size: large blocks amortize per-step overhead, but keep
    # the grid at >= MIN_GRID_STEPS so the "parallel" axis can shard across
    # TensorCores (v7x) and double-buffering stays active.
    bn = block_n
    while bn > 128 and pl.cdiv(n, bn) < MIN_GRID_STEPS:
        bn //= 2

    # pad the point axis to a multiple of bn (pad dirs with a unit-safe 1)
    n_pad = (-n) % bn
    if n_pad:
        gidx = jnp.pad(gidx, ((0, 0), (0, n_pad)))
        w = jnp.pad(w, ((0, 0), (0, n_pad)))
        embed_t = jnp.pad(embed_t, ((0, 0), (0, n_pad)))
        d_t = jnp.pad(d_t, ((0, 0), (0, n_pad)), constant_values=1.0)
    n_tot = n + n_pad
    grid = (n_tot // bn,)

    pt_map = lambda i: (0, i)          # blocked along the point (lane) axis
    const2 = lambda i: (0, 0)          # resident weights / table

    out = pl.pallas_call(
        ngp_forward_kernel,
        out_shape=jax.ShapeDtypeStruct((4, n_tot), jnp.float32),
        grid_spec=pltpu.PrefetchScalarGridSpec(
            num_scalar_prefetch=0,
            grid=grid,
            in_specs=[
                pl.BlockSpec((L * 8, bn), pt_map),                    # gidx
                pl.BlockSpec((L * 8, bn), pt_map),                    # w
                pl.BlockSpec((EMBED_SIZE, bn), pt_map),               # embed
                pl.BlockSpec((3, bn), pt_map),                        # d
                pl.BlockSpec((L * F * HI, LO), const2),               # table hi/lo view
                pl.BlockSpec((DENSITY_HIDDEN, EMBED_SIZE), const2),   # wd1^T
                pl.BlockSpec((DENSITY_OUT, DENSITY_HIDDEN), const2),  # wd2^T
                pl.BlockSpec((RGB_CHANNELS, SH_DIM), const2),         # wr1_sh^T
                pl.BlockSpec((RGB_CHANNELS, DENSITY_OUT), const2),    # wr1_h^T
                pl.BlockSpec((RGB_CHANNELS, RGB_CHANNELS), const2),   # wr2^T
                pl.BlockSpec((3, RGB_CHANNELS), const2),              # wr3^T
            ],
            out_specs=pl.BlockSpec((4, bn), pt_map),
        ),
        compiler_params=pltpu.CompilerParams(
            dimension_semantics=("parallel",)),
    )(gidx, w, embed_t, d_t,
      params['tableW'], params['wd1T'], params['wd2T'],
      params['wr1shT'], params['wr1hT'], params['wr2T'], params['wr3T'])

    sigmas = out[0, :n]
    rgbs = out[1:4, :n].T
    return sigmas, rgbs


# --------------------- pure-JAX reference (for validation) ------------------
def ngp_forward_ref(x, d, embed_idx, params):
    x01 = (x + SCALE) / (2.0 * SCALE)
    gidx, w = hash_grid_indices_weights(x01)                  # (L*8, N)
    # rebuild the (L, T, F) table from the kernel's hi/lo bf16 layout so both
    # paths share the same quantized values
    tbl = params['tableW'].astype(jnp.float32).reshape(L, F, HI, LO)
    tbl = jnp.transpose(tbl, (0, 2, 3, 1)).reshape(L, T, F)
    n = x.shape[0]
    feat = jnp.zeros((n, L * F), jnp.float32)
    for lvl in range(L):
        for c in range(8):
            k = lvl * 8 + c
            vals = tbl[lvl][gidx[k]]                          # (N, F)
            feat = feat.at[:, lvl * F:(lvl + 1) * F].add(w[k][:, None] * vals)
    feat = feat + params['scene_embed'][embed_idx]
    wd1 = params['wd1T'].astype(jnp.float32)
    wd2 = params['wd2T'].astype(jnp.float32)
    wr1sh = params['wr1shT'].astype(jnp.float32)
    wr1h = params['wr1hT'].astype(jnp.float32)
    wr2 = params['wr2T'].astype(jnp.float32)
    wr3 = params['wr3T'].astype(jnp.float32)
    h1 = jnp.maximum(feat @ wd1.T, 0.0)
    h = h1 @ wd2.T
    sigma = jnp.exp(h[:, 0])
    dn = d / jnp.linalg.norm(d, axis=1, keepdims=True)
    sh = jnp.concatenate(
        sh_degree4(dn[:, 0:1], dn[:, 1:2], dn[:, 2:3]), axis=1)
    r = jnp.maximum(sh @ wr1sh.T + h @ wr1h.T, 0.0)
    r = jnp.maximum(r @ wr2.T, 0.0)
    rgb = jax.nn.sigmoid(r @ wr3.T)
    return sigma, rgb


# --------------------------- parameter init ---------------------------------
def init_params(key):
    ks = jax.random.split(key, 7)
    # hash table: tcnn-style uniform(-1e-4, 1e-4).  Stored in the factorized
    # hi/lo layout: row (lvl*F*8 + f*8 + h), column j  holds
    # table[lvl, h*128 + j, f], cast to bf16 for the in-kernel MXU gather.
    table = jax.random.uniform(ks[0], (L, T, F), jnp.float32, -1e-4, 1e-4)
    tableW = jnp.transpose(table.reshape(L, HI, LO, F), (0, 3, 1, 2))
    tableW = tableW.reshape(L * F * HI, LO).astype(jnp.bfloat16)

    def glorot(k, shape):
        fan_in, fan_out = shape
        lim = float(np.sqrt(6.0 / (fan_in + fan_out)))
        return jax.random.uniform(k, shape, jnp.float32, -lim, lim)

    wd1 = glorot(ks[2], (EMBED_SIZE, DENSITY_HIDDEN))
    wd2 = glorot(ks[3], (DENSITY_HIDDEN, DENSITY_OUT))
    wr1 = glorot(ks[4], (SH_DIM + DENSITY_OUT, RGB_CHANNELS))
    wr2 = glorot(ks[5], (RGB_CHANNELS, RGB_CHANNELS))
    wr3 = glorot(ks[6], (RGB_CHANNELS, 3))

    return dict(
        tableW=tableW,
        scene_embed=jax.random.uniform(ks[1], (NUM_SCENE, EMBED_SIZE),
                                       jnp.float32, 0.0, 1.0),
        # MLP weights stored transposed (out_features, in_features) in bf16
        # for the feature-major (features, points) in-kernel layout; the same
        # bf16 values are upcast in the reference so both paths share them.
        wd1T=wd1.T.astype(jnp.bfloat16),
        wd2T=wd2.T.astype(jnp.bfloat16),
        wr1shT=wr1[:SH_DIM].T.astype(jnp.bfloat16),       # (64, 16)
        wr1hT=wr1[SH_DIM:].T.astype(jnp.bfloat16),        # (64, 16)
        wr2T=wr2.T.astype(jnp.bfloat16),
        wr3T=wr3.T.astype(jnp.bfloat16),
    )


if __name__ == "__main__":
    key = jax.random.PRNGKey(0)
    kx, kd, ki, kp = jax.random.split(key, 4)
    N = N_PTS
    x = jax.random.uniform(kx, (N, 3), jnp.float32, -SCALE, SCALE)
    d = jax.random.normal(kd, (N, 3), jnp.float32)
    embed_idx = jax.random.randint(ki, (N,), 0, NUM_SCENE)
    params = init_params(kp)

    sigmas, rgbs = jax.jit(ngp_forward)(x, d, embed_idx, params)
    jax.block_until_ready((sigmas, rgbs))

    assert sigmas.shape == (N,) and rgbs.shape == (N, 3)
    assert bool(jnp.all(jnp.isfinite(sigmas))) and bool(jnp.all(jnp.isfinite(rgbs)))
    assert bool(jnp.all(rgbs >= 0.0)) and bool(jnp.all(rgbs <= 1.0))

    # validate against the pure-JAX f32 reference (same bf16-quantized params;
    # kernel additionally rounds activations to bf16 before each matmul)
    sig_ref, rgb_ref = jax.jit(ngp_forward_ref)(x, d, embed_idx, params)
    jax.block_until_ready((sig_ref, rgb_ref))
    sig_err = jnp.max(jnp.abs(sigmas - sig_ref) / (jnp.abs(sig_ref) + 1e-3))
    rgb_err = jnp.max(jnp.abs(rgbs - rgb_ref))
    assert bool(sig_err < 2e-2), f"sigma mismatch: {sig_err}"
    assert bool(rgb_err < 2e-2), f"rgb mismatch: {rgb_err}"

    print("KERNEL_OK")
</pallas_src>

<mosaic_0001>
module attributes {stable_mosaic.version = 11 : i64} {
  func.func @ngp_forward_kernel(%arg0: i32, %arg1: memref<32x128xi32, #tpu.memory_space<vmem>>, %arg2: memref<32x128xf32, #tpu.memory_space<vmem>>, %arg3: memref<8x128xf32, #tpu.memory_space<vmem>>, %arg4: memref<3x128xf32, #tpu.memory_space<vmem>>, %arg5: memref<64x128xbf16, #tpu.memory_space<vmem>>, %arg6: memref<64x8xbf16, #tpu.memory_space<vmem>>, %arg7: memref<16x64xbf16, #tpu.memory_space<vmem>>, %arg8: memref<64x16xbf16, #tpu.memory_space<vmem>>, %arg9: memref<64x16xbf16, #tpu.memory_space<vmem>>, %arg10: memref<64x64xbf16, #tpu.memory_space<vmem>>, %arg11: memref<3x64xbf16, #tpu.memory_space<vmem>>, %arg12: memref<4x128xf32, #tpu.memory_space<vmem>>) attributes {dimension_semantics = [#tpu.dimension_semantics<parallel>], iteration_bounds = array<i64: 4>, scalar_prefetch = 0 : i64, scratch_operands = 0 : i64, tpu.core_type = #tpu.core_type<tc>, window_params = [{transform_indices = @transform_0, window_bounds = array<i64: 32, 128>}, {transform_indices = @transform_1, window_bounds = array<i64: 32, 128>}, {transform_indices = @transform_2, window_bounds = array<i64: 8, 128>}, {transform_indices = @transform_3, window_bounds = array<i64: 3, 128>}, {pipeline_mode = #tpu.pipeline_mode<synchronous>, transform_indices = @transform_4, window_bounds = array<i64: 64, 128>}, {pipeline_mode = #tpu.pipeline_mode<synchronous>, transform_indices = @transform_5, window_bounds = array<i64: 64, 8>}, {pipeline_mode = #tpu.pipeline_mode<synchronous>, transform_indices = @transform_6, window_bounds = array<i64: 16, 64>}, {pipeline_mode = #tpu.pipeline_mode<synchronous>, transform_indices = @transform_7, window_bounds = array<i64: 64, 16>}, {pipeline_mode = #tpu.pipeline_mode<synchronous>, transform_indices = @transform_8, window_bounds = array<i64: 64, 16>}, {pipeline_mode = #tpu.pipeline_mode<synchronous>, transform_indices = @transform_9, window_bounds = array<i64: 64, 64>}, {pipeline_mode = #tpu.pipeline_mode<synchronous>, transform_indices = @transform_10, window_bounds = array<i64: 3, 64>}, {transform_indices = @transform_11, window_bounds = array<i64: 4, 128>}]} {
    %0 = tpu.iota {dimensions = array<i32: 0>} : vector<128x128xi32>
    %1 = tpu.iota {dimensions = array<i32: 0>} : vector<16x128xi32>
    %c7_i32 = arith.constant 7 : i32
    %2 = vector.broadcast %c7_i32 : i32 to vector<16x128xi32>
    %3 = arith.andi %1, %2 : vector<16x128xi32>
    %c0 = arith.constant 0 : index
    %c0_0 = arith.constant 0 : index
    %4 = vector.load %arg1[%c0, %c0_0] : memref<32x128xi32, #tpu.memory_space<vmem>>, vector<32x128xi32>
    %c0_1 = arith.constant 0 : index
    %c0_2 = arith.constant 0 : index
    %5 = vector.load %arg2[%c0_1, %c0_2] : memref<32x128xf32, #tpu.memory_space<vmem>>, vector<32x128xf32>
    %c127_i32 = arith.constant 127 : i32
    %6 = vector.broadcast %c127_i32 : i32 to vector<32x128xi32>
    %7 = arith.andi %4, %6 : vector<32x128xi32>
    %c7_i32_3 = arith.constant 7 : i32
    %8 = vector.broadcast %c7_i32_3 : i32 to vector<32x128xi32>
    %9 = arith.shrsi %4, %8 : vector<32x128xi32>
    %c0_4 = arith.constant 0 : index
    %c0_5 = arith.constant 0 : index
    %10 = vector.load %arg5[%c0_4, %c0_5] : memref<64x128xbf16, #tpu.memory_space<vmem>>, vector<64x128xbf16>
    %11 = vector.extract_strided_slice %10 {offsets = [0, 0], sizes = [16, 128], strides = [1, 1]} : vector<64x128xbf16> to vector<16x128xbf16>
    %cst = arith.constant 0.000000e+00 : f32
    %12 = vector.broadcast %cst : f32 to vector<16x128xf32>
    %13 = vector.extract_strided_slice %7 {offsets = [0, 0], sizes = [1, 128], strides = [1, 1]} : vector<32x128xi32> to vector<1x128xi32>
    %14 = vector.extract_strided_slice %9 {offsets = [0, 0], sizes = [1, 128], strides = [1, 1]} : vector<32x128xi32> to vector<1x128xi32>
    %15 = vector.extract_strided_slice %5 {offsets = [0, 0], sizes = [1, 128], strides = [1, 1]} : vector<32x128xf32> to vector<1x128xf32>
    %16 = vector.broadcast %13 : vector<1x128xi32> to vector<128x128xi32>
    %17 = arith.cmpi eq, %0, %16 : vector<128x128xi32>
    %cst_6 = arith.constant 1.000000e+00 : f32
    %cst_7 = arith.constant 0.000000e+00 : f32
    %18 = vector.broadcast %cst_6 : f32 to vector<128x128xf32>
    %19 = vector.broadcast %cst_7 : f32 to vector<128x128xf32>
    %20 = arith.select %17, %18, %19 : vector<128x128xi1>, vector<128x128xf32>
    %21 = arith.truncf %20 : vector<128x128xf32> to vector<128x128xbf16>
    %cst_8 = arith.constant dense<0.000000e+00> : vector<16x128xf32>
    %22 = tpu.matmul %11, %21, %cst_8 {dimension_numbers = #tpu.dot_dimension_numbers<[1], [0], [0], [1], [0, 0, 1, 1], [], []>} : vector<16x128xbf16>, vector<128x128xbf16>, vector<16x128xf32> -> vector<16x128xf32>
    %23 = vector.broadcast %14 : vector<1x128xi32> to vector<16x128xi32>
    %24 = arith.cmpi eq, %3, %23 : vector<16x128xi32>
    %cst_9 = arith.constant 0.000000e+00 : f32
    %25 = vector.shape_cast %15 : vector<1x128xf32> to vector<1x128xf32>
    %26 = vector.broadcast %25 : vector<1x128xf32> to vector<16x128xf32>
    %27 = vector.broadcast %cst_9 : f32 to vector<16x128xf32>
    %28 = arith.select %24, %26, %27 : vector<16x128xi1>, vector<16x128xf32>
    %29 = arith.mulf %22, %28 : vector<16x128xf32>
    %30 = arith.addf %12, %29 : vector<16x128xf32>
    %31 = vector.extract_strided_slice %7 {offsets = [1, 0], sizes = [1, 128], strides = [1, 1]} : vector<32x128xi32> to vector<1x128xi32>
    %32 = vector.extract_strided_slice %9 {offsets = [1, 0], sizes = [1, 128], strides = [1, 1]} : vector<32x128xi32> to vector<1x128xi32>
    %33 = vector.extract_strided_slice %5 {offsets = [1, 0], sizes = [1, 128], strides = [1, 1]} : vector<32x128xf32> to vector<1x128xf32>
    %34 = vector.broadcast %31 : vector<1x128xi32> to vector<128x128xi32>
    %35 = arith.cmpi eq, %0, %34 : vector<128x128xi32>
    %cst_10 = arith.constant 1.000000e+00 : f32
    %cst_11 = arith.constant 0.000000e+00 : f32
    %36 = vector.broadcast %cst_10 : f32 to vector<128x128xf32>
    %37 = vector.broadcast %cst_11 : f32 to vector<128x128xf32>
    %38 = arith.select %35, %36, %37 : vector<128x128xi1>, vector<128x128xf32>
    %39 = arith.truncf %38 : vector<128x128xf32> to vector<128x128xbf16>
    %cst_12 = arith.constant dense<0.000000e+00> : vector<16x128xf32>
    %40 = tpu.matmul %11, %39, %cst_12 {dimension_numbers = #tpu.dot_dimension_numbers<[1], [0], [0], [1], [0, 0, 1, 1], [], []>} : vector<16x128xbf16>, vector<128x128xbf16>, vector<16x128xf32> -> vector<16x128xf32>
    %41 = vector.broadcast %32 : vector<1x128xi32> to vector<16x128xi32>
    %42 = arith.cmpi eq, %3, %41 : vector<16x128xi32>
    %cst_13 = arith.constant 0.000000e+00 : f32
    %43 = vector.shape_cast %33 : vector<1x128xf32> to vector<1x128xf32>
    %44 = vector.broadcast %43 : vector<1x128xf32> to vector<16x128xf32>
    %45 = vector.broadcast %cst_13 : f32 to vector<16x128xf32>
    %46 = arith.select %42, %44, %45 : vector<16x128xi1>, vector<16x128xf32>
    %47 = arith.mulf %40, %46 : vector<16x128xf32>
    %48 = arith.addf %30, %47 : vector<16x128xf32>
    %49 = vector.extract_strided_slice %7 {offsets = [2, 0], sizes = [1, 128], strides = [1, 1]} : vector<32x128xi32> to vector<1x128xi32>
    %50 = vector.extract_strided_slice %9 {offsets = [2, 0], sizes = [1, 128], strides = [1, 1]} : vector<32x128xi32> to vector<1x128xi32>
    %51 = vector.extract_strided_slice %5 {offsets = [2, 0], sizes = [1, 128], strides = [1, 1]} : vector<32x128xf32> to vector<1x128xf32>
    %52 = vector.broadcast %49 : vector<1x128xi32> to vector<128x128xi32>
    %53 = arith.cmpi eq, %0, %52 : vector<128x128xi32>
    %cst_14 = arith.constant 1.000000e+00 : f32
    %cst_15 = arith.constant 0.000000e+00 : f32
    %54 = vector.broadcast %cst_14 : f32 to vector<128x128xf32>
    %55 = vector.broadcast %cst_15 : f32 to vector<128x128xf32>
    %56 = arith.select %53, %54, %55 : vector<128x128xi1>, vector<128x128xf32>
    %57 = arith.truncf %56 : vector<128x128xf32> to vector<128x128xbf16>
    %cst_16 = arith.constant dense<0.000000e+00> : vector<16x128xf32>
    %58 = tpu.matmul %11, %57, %cst_16 {dimension_numbers = #tpu.dot_dimension_numbers<[1], [0], [0], [1], [0, 0, 1, 1], [], []>} : vector<16x128xbf16>, vector<128x128xbf16>, vector<16x128xf32> -> vector<16x128xf32>
    %59 = vector.broadcast %50 : vector<1x128xi32> to vector<16x128xi32>
    %60 = arith.cmpi eq, %3, %59 : vector<16x128xi32>
    %cst_17 = arith.constant 0.000000e+00 : f32
    %61 = vector.shape_cast %51 : vector<1x128xf32> to vector<1x128xf32>
    %62 = vector.broadcast %61 : vector<1x128xf32> to vector<16x128xf32>
    %63 = vector.broadcast %cst_17 : f32 to vector<16x128xf32>
    %64 = arith.select %60, %62, %63 : vector<16x128xi1>, vector<16x128xf32>
    %65 = arith.mulf %58, %64 : vector<16x128xf32>
    %66 = arith.addf %48, %65 : vector<16x128xf32>
    %67 = vector.extract_strided_slice %7 {offsets = [3, 0], sizes = [1, 128], strides = [1, 1]} : vector<32x128xi32> to vector<1x128xi32>
    %68 = vector.extract_strided_slice %9 {offsets = [3, 0], sizes = [1, 128], strides = [1, 1]} : vector<32x128xi32> to vector<1x128xi32>
    %69 = vector.extract_strided_slice %5 {offsets = [3, 0], sizes = [1, 128], strides = [1, 1]} : vector<32x128xf32> to vector<1x128xf32>
    %70 = vector.broadcast %67 : vector<1x128xi32> to vector<128x128xi32>
    %71 = arith.cmpi eq, %0, %70 : vector<128x128xi32>
    %cst_18 = arith.constant 1.000000e+00 : f32
    %cst_19 = arith.constant 0.000000e+00 : f32
    %72 = vector.broadcast %cst_18 : f32 to vector<128x128xf32>
    %73 = vector.broadcast %cst_19 : f32 to vector<128x128xf32>
    %74 = arith.select %71, %72, %73 : vector<128x128xi1>, vector<128x128xf32>
    %75 = arith.truncf %74 : vector<128x128xf32> to vector<128x128xbf16>
    %cst_20 = arith.constant dense<0.000000e+00> : vector<16x128xf32>
    %76 = tpu.matmul %11, %75, %cst_20 {dimension_numbers = #tpu.dot_dimension_numbers<[1], [0], [0], [1], [0, 0, 1, 1], [], []>} : vector<16x128xbf16>, vector<128x128xbf16>, vector<16x128xf32> -> vector<16x128xf32>
    %77 = vector.broadcast %68 : vector<1x128xi32> to vector<16x128xi32>
    %78 = arith.cmpi eq, %3, %77 : vector<16x128xi32>
    %cst_21 = arith.constant 0.000000e+00 : f32
    %79 = vector.shape_cast %69 : vector<1x128xf32> to vector<1x128xf32>
    %80 = vector.broadcast %79 : vector<1x128xf32> to vector<16x128xf32>
    %81 = vector.broadcast %cst_21 : f32 to vector<16x128xf32>
    %82 = arith.select %78, %80, %81 : vector<16x128xi1>, vector<16x128xf32>
    %83 = arith.mulf %76, %82 : vector<16x128xf32>
    %84 = arith.addf %66, %83 : vector<16x128xf32>
    %85 = vector.extract_strided_slice %7 {offsets = [4, 0], sizes = [1, 128], strides = [1, 1]} : vector<32x128xi32> to vector<1x128xi32>
    %86 = vector.extract_strided_slice %9 {offsets = [4, 0], sizes = [1, 128], strides = [1, 1]} : vector<32x128xi32> to vector<1x128xi32>
    %87 = vector.extract_strided_slice %5 {offsets = [4, 0], sizes = [1, 128], strides = [1, 1]} : vector<32x128xf32> to vector<1x128xf32>
    %88 = vector.broadcast %85 : vector<1x128xi32> to vector<128x128xi32>
    %89 = arith.cmpi eq, %0, %88 : vector<128x128xi32>
    %cst_22 = arith.constant 1.000000e+00 : f32
    %cst_23 = arith.constant 0.000000e+00 : f32
    %90 = vector.broadcast %cst_22 : f32 to vector<128x128xf32>
    %91 = vector.broadcast %cst_23 : f32 to vector<128x128xf32>
    %92 = arith.select %89, %90, %91 : vector<128x128xi1>, vector<128x128xf32>
    %93 = arith.truncf %92 : vector<128x128xf32> to vector<128x128xbf16>
    %cst_24 = arith.constant dense<0.000000e+00> : vector<16x128xf32>
    %94 = tpu.matmul %11, %93, %cst_24 {dimension_numbers = #tpu.dot_dimension_numbers<[1], [0], [0], [1], [0, 0, 1, 1], [], []>} : vector<16x128xbf16>, vector<128x128xbf16>, vector<16x128xf32> -> vector<16x128xf32>
    %95 = vector.broadcast %86 : vector<1x128xi32> to vector<16x128xi32>
    %96 = arith.cmpi eq, %3, %95 : vector<16x128xi32>
    %cst_25 = arith.constant 0.000000e+00 : f32
    %97 = vector.shape_cast %87 : vector<1x128xf32> to vector<1x128xf32>
    %98 = vector.broadcast %97 : vector<1x128xf32> to vector<16x128xf32>
    %99 = vector.broadcast %cst_25 : f32 to vector<16x128xf32>
    %100 = arith.select %96, %98, %99 : vector<16x128xi1>, vector<16x128xf32>
    %101 = arith.mulf %94, %100 : vector<16x128xf32>
    %102 = arith.addf %84, %101 : vector<16x128xf32>
    %103 = vector.extract_strided_slice %7 {offsets = [5, 0], sizes = [1, 128], strides = [1, 1]} : vector<32x128xi32> to vector<1x128xi32>
    %104 = vector.extract_strided_slice %9 {offsets = [5, 0], sizes = [1, 128], strides = [1, 1]} : vector<32x128xi32> to vector<1x128xi32>
    %105 = vector.extract_strided_slice %5 {offsets = [5, 0], sizes = [1, 128], strides = [1, 1]} : vector<32x128xf32> to vector<1x128xf32>
    %106 = vector.broadcast %103 : vector<1x128xi32> to vector<128x128xi32>
    %107 = arith.cmpi eq, %0, %106 : vector<128x128xi32>
    %cst_26 = arith.constant 1.000000e+00 : f32
    %cst_27 = arith.constant 0.000000e+00 : f32
    %108 = vector.broadcast %cst_26 : f32 to vector<128x128xf32>
    %109 = vector.broadcast %cst_27 : f32 to vector<128x128xf32>
    %110 = arith.select %107, %108, %109 : vector<128x128xi1>, vector<128x128xf32>
    %111 = arith.truncf %110 : vector<128x128xf32> to vector<128x128xbf16>
    %cst_28 = arith.constant dense<0.000000e+00> : vector<16x128xf32>
    %112 = tpu.matmul %11, %111, %cst_28 {dimension_numbers = #tpu.dot_dimension_numbers<[1], [0], [0], [1], [0, 0, 1, 1], [], []>} : vector<16x128xbf16>, vector<128x128xbf16>, vector<16x128xf32> -> vector<16x128xf32>
    %113 = vector.broadcast %104 : vector<1x128xi32> to vector<16x128xi32>
    %114 = arith.cmpi eq, %3, %113 : vector<16x128xi32>
    %cst_29 = arith.constant 0.000000e+00 : f32
    %115 = vector.shape_cast %105 : vector<1x128xf32> to vector<1x128xf32>
    %116 = vector.broadcast %115 : vector<1x128xf32> to vector<16x128xf32>
    %117 = vector.broadcast %cst_29 : f32 to vector<16x128xf32>
    %118 = arith.select %114, %116, %117 : vector<16x128xi1>, vector<16x128xf32>
    %119 = arith.mulf %112, %118 : vector<16x128xf32>
    %120 = arith.addf %102, %119 : vector<16x128xf32>
    %121 = vector.extract_strided_slice %7 {offsets = [6, 0], sizes = [1, 128], strides = [1, 1]} : vector<32x128xi32> to vector<1x128xi32>
    %122 = vector.extract_strided_slice %9 {offsets = [6, 0], sizes = [1, 128], strides = [1, 1]} : vector<32x128xi32> to vector<1x128xi32>
    %123 = vector.extract_strided_slice %5 {offsets = [6, 0], sizes = [1, 128], strides = [1, 1]} : vector<32x128xf32> to vector<1x128xf32>
    %124 = vector.broadcast %121 : vector<1x128xi32> to vector<128x128xi32>
    %125 = arith.cmpi eq, %0, %124 : vector<128x128xi32>
    %cst_30 = arith.constant 1.000000e+00 : f32
    %cst_31 = arith.constant 0.000000e+00 : f32
    %126 = vector.broadcast %cst_30 : f32 to vector<128x128xf32>
    %127 = vector.broadcast %cst_31 : f32 to vector<128x128xf32>
    %128 = arith.select %125, %126, %127 : vector<128x128xi1>, vector<128x128xf32>
    %129 = arith.truncf %128 : vector<128x128xf32> to vector<128x128xbf16>
    %cst_32 = arith.constant dense<0.000000e+00> : vector<16x128xf32>
    %130 = tpu.matmul %11, %129, %cst_32 {dimension_numbers = #tpu.dot_dimension_numbers<[1], [0], [0], [1], [0, 0, 1, 1], [], []>} : vector<16x128xbf16>, vector<128x128xbf16>, vector<16x128xf32> -> vector<16x128xf32>
    %131 = vector.broadcast %122 : vector<1x128xi32> to vector<16x128xi32>
    %132 = arith.cmpi eq, %3, %131 : vector<16x128xi32>
    %cst_33 = arith.constant 0.000000e+00 : f32
    %133 = vector.shape_cast %123 : vector<1x128xf32> to vector<1x128xf32>
    %134 = vector.broadcast %133 : vector<1x128xf32> to vector<16x128xf32>
    %135 = vector.broadcast %cst_33 : f32 to vector<16x128xf32>
    %136 = arith.select %132, %134, %135 : vector<16x128xi1>, vector<16x128xf32>
    %137 = arith.mulf %130, %136 : vector<16x128xf32>
    %138 = arith.addf %120, %137 : vector<16x128xf32>
    %139 = vector.extract_strided_slice %7 {offsets = [7, 0], sizes = [1, 128], strides = [1, 1]} : vector<32x128xi32> to vector<1x128xi32>
    %140 = vector.extract_strided_slice %9 {offsets = [7, 0], sizes = [1, 128], strides = [1, 1]} : vector<32x128xi32> to vector<1x128xi32>
    %141 = vector.extract_strided_slice %5 {offsets = [7, 0], sizes = [1, 128], strides = [1, 1]} : vector<32x128xf32> to vector<1x128xf32>
    %142 = vector.broadcast %139 : vector<1x128xi32> to vector<128x128xi32>
    %143 = arith.cmpi eq, %0, %142 : vector<128x128xi32>
    %cst_34 = arith.constant 1.000000e+00 : f32
    %cst_35 = arith.constant 0.000000e+00 : f32
    %144 = vector.broadcast %cst_34 : f32 to vector<128x128xf32>
    %145 = vector.broadcast %cst_35 : f32 to vector<128x128xf32>
    %146 = arith.select %143, %144, %145 : vector<128x128xi1>, vector<128x128xf32>
    %147 = arith.truncf %146 : vector<128x128xf32> to vector<128x128xbf16>
    %cst_36 = arith.constant dense<0.000000e+00> : vector<16x128xf32>
    %148 = tpu.matmul %11, %147, %cst_36 {dimension_numbers = #tpu.dot_dimension_numbers<[1], [0], [0], [1], [0, 0, 1, 1], [], []>} : vector<16x128xbf16>, vector<128x128xbf16>, vector<16x128xf32> -> vector<16x128xf32>
    %149 = vector.broadcast %140 : vector<1x128xi32> to vector<16x128xi32>
    %150 = arith.cmpi eq, %3, %149 : vector<16x128xi32>
    %cst_37 = arith.constant 0.000000e+00 : f32
    %151 = vector.shape_cast %141 : vector<1x128xf32> to vector<1x128xf32>
    %152 = vector.broadcast %151 : vector<1x128xf32> to vector<16x128xf32>
    %153 = vector.broadcast %cst_37 : f32 to vector<16x128xf32>
    %154 = arith.select %150, %152, %153 : vector<16x128xi1>, vector<16x128xf32>
    %155 = arith.mulf %148, %154 : vector<16x128xf32>
    %156 = arith.addf %138, %155 : vector<16x128xf32>
    %157 = vector.extract_strided_slice %156 {offsets = [0, 0], sizes = [8, 128], strides = [1, 1]} : vector<16x128xf32> to vector<8x128xf32>
    %cst_38 = arith.constant dense<0.000000e+00> : vector<128xf32>
    %158 = vector.multi_reduction <add>, %157, %cst_38 [0] : vector<8x128xf32> to vector<128xf32>
    %159 = vector.shape_cast %158 : vector<128xf32> to vector<1x128xf32>
    %160 = vector.extract_strided_slice %156 {offsets = [8, 0], sizes = [8, 128], strides = [1, 1]} : vector<16x128xf32> to vector<8x128xf32>
    %cst_39 = arith.constant dense<0.000000e+00> : vector<128xf32>
    %161 = vector.multi_reduction <add>, %160, %cst_39 [0] : vector<8x128xf32> to vector<128xf32>
    %162 = vector.shape_cast %161 : vector<128xf32> to vector<1x128xf32>
    %163 = vector.extract_strided_slice %10 {offsets = [16, 0], sizes = [16, 128], strides = [1, 1]} : vector<64x128xbf16> to vector<16x128xbf16>
    %cst_40 = arith.constant 0.000000e+00 : f32
    %164 = vector.broadcast %cst_40 : f32 to vector<16x128xf32>
    %165 = vector.extract_strided_slice %7 {offsets = [8, 0], sizes = [1, 128], strides = [1, 1]} : vector<32x128xi32> to vector<1x128xi32>
    %166 = vector.extract_strided_slice %9 {offsets = [8, 0], sizes = [1, 128], strides = [1, 1]} : vector<32x128xi32> to vector<1x128xi32>
    %167 = vector.extract_strided_slice %5 {offsets = [8, 0], sizes = [1, 128], strides = [1, 1]} : vector<32x128xf32> to vector<1x128xf32>
    %168 = vector.broadcast %165 : vector<1x128xi32> to vector<128x128xi32>
    %169 = arith.cmpi eq, %0, %168 : vector<128x128xi32>
    %cst_41 = arith.constant 1.000000e+00 : f32
    %cst_42 = arith.constant 0.000000e+00 : f32
    %170 = vector.broadcast %cst_41 : f32 to vector<128x128xf32>
    %171 = vector.broadcast %cst_42 : f32 to vector<128x128xf32>
    %172 = arith.select %169, %170, %171 : vector<128x128xi1>, vector<128x128xf32>
    %173 = arith.truncf %172 : vector<128x128xf32> to vector<128x128xbf16>
    %cst_43 = arith.constant dense<0.000000e+00> : vector<16x128xf32>
    %174 = tpu.matmul %163, %173, %cst_43 {dimension_numbers = #tpu.dot_dimension_numbers<[1], [0], [0], [1], [0, 0, 1, 1], [], []>} : vector<16x128xbf16>, vector<128x128xbf16>, vector<16x128xf32> -> vector<16x128xf32>
    %175 = vector.broadcast %166 : vector<1x128xi32> to vector<16x128xi32>
    %176 = arith.cmpi eq, %3, %175 : vector<16x128xi32>
    %cst_44 = arith.constant 0.000000e+00 : f32
    %177 = vector.shape_cast %167 : vector<1x128xf32> to vector<1x128xf32>
    %178 = vector.broadcast %177 : vector<1x128xf32> to vector<16x128xf32>
    %179 = vector.broadcast %cst_44 : f32 to vector<16x128xf32>
    %180 = arith.select %176, %178, %179 : vector<16x128xi1>, vector<16x128xf32>
    %181 = arith.mulf %174, %180 : vector<16x128xf32>
    %182 = arith.addf %164, %181 : vector<16x128xf32>
    %183 = vector.extract_strided_slice %7 {offsets = [9, 0], sizes = [1, 128], strides = [1, 1]} : vector<32x128xi32> to vector<1x128xi32>
    %184 = vector.extract_strided_slice %9 {offsets = [9, 0], sizes = [1, 128], strides = [1, 1]} : vector<32x128xi32> to vector<1x128xi32>
    %185 = vector.extract_strided_slice %5 {offsets = [9, 0], sizes = [1, 128], strides = [1, 1]} : vector<32x128xf32> to vector<1x128xf32>
    %186 = vector.broadcast %183 : vector<1x128xi32> to vector<128x128xi32>
    %187 = arith.cmpi eq, %0, %186 : vector<128x128xi32>
    %cst_45 = arith.constant 1.000000e+00 : f32
    %cst_46 = arith.constant 0.000000e+00 : f32
    %188 = vector.broadcast %cst_45 : f32 to vector<128x128xf32>
    %189 = vector.broadcast %cst_46 : f32 to vector<128x128xf32>
    %190 = arith.select %187, %188, %189 : vector<128x128xi1>, vector<128x128xf32>
    %191 = arith.truncf %190 : vector<128x128xf32> to vector<128x128xbf16>
    %cst_47 = arith.constant dense<0.000000e+00> : vector<16x128xf32>
    %192 = tpu.matmul %163, %191, %cst_47 {dimension_numbers = #tpu.dot_dimension_numbers<[1], [0], [0], [1], [0, 0, 1, 1], [], []>} : vector<16x128xbf16>, vector<128x128xbf16>, vector<16x128xf32> -> vector<16x128xf32>
    %193 = vector.broadcast %184 : vector<1x128xi32> to vector<16x128xi32>
    %194 = arith.cmpi eq, %3, %193 : vector<16x128xi32>
    %cst_48 = arith.constant 0.000000e+00 : f32
    %195 = vector.shape_cast %185 : vector<1x128xf32> to vector<1x128xf32>
    %196 = vector.broadcast %195 : vector<1x128xf32> to vector<16x128xf32>
    %197 = vector.broadcast %cst_48 : f32 to vector<16x128xf32>
    %198 = arith.select %194, %196, %197 : vector<16x128xi1>, vector<16x128xf32>
    %199 = arith.mulf %192, %198 : vector<16x128xf32>
    %200 = arith.addf %182, %199 : vector<16x128xf32>
    %201 = vector.extract_strided_slice %7 {offsets = [10, 0], sizes = [1, 128], strides = [1, 1]} : vector<32x128xi32> to vector<1x128xi32>
    %202 = vector.extract_strided_slice %9 {offsets = [10, 0], sizes = [1, 128], strides = [1, 1]} : vector<32x128xi32> to vector<1x128xi32>
    %203 = vector.extract_strided_slice %5 {offsets = [10, 0], sizes = [1, 128], strides = [1, 1]} : vector<32x128xf32> to vector<1x128xf32>
    %204 = vector.broadcast %201 : vector<1x128xi32> to vector<128x128xi32>
    %205 = arith.cmpi eq, %0, %204 : vector<128x128xi32>
    %cst_49 = arith.constant 1.000000e+00 : f32
    %cst_50 = arith.constant 0.000000e+00 : f32
    %206 = vector.broadcast %cst_49 : f32 to vector<128x128xf32>
    %207 = vector.broadcast %cst_50 : f32 to vector<128x128xf32>
    %208 = arith.select %205, %206, %207 : vector<128x128xi1>, vector<128x128xf32>
    %209 = arith.truncf %208 : vector<128x128xf32> to vector<128x128xbf16>
    %cst_51 = arith.constant dense<0.000000e+00> : vector<16x128xf32>
    %210 = tpu.matmul %163, %209, %cst_51 {dimension_numbers = #tpu.dot_dimension_numbers<[1], [0], [0], [1], [0, 0, 1, 1], [], []>} : vector<16x128xbf16>, vector<128x128xbf16>, vector<16x128xf32> -> vector<16x128xf32>
    %211 = vector.broadcast %202 : vector<1x128xi32> to vector<16x128xi32>
    %212 = arith.cmpi eq, %3, %211 : vector<16x128xi32>
    %cst_52 = arith.constant 0.000000e+00 : f32
    %213 = vector.shape_cast %203 : vector<1x128xf32> to vector<1x128xf32>
    %214 = vector.broadcast %213 : vector<1x128xf32> to vector<16x128xf32>
    %215 = vector.broadcast %cst_52 : f32 to vector<16x128xf32>
    %216 = arith.select %212, %214, %215 : vector<16x128xi1>, vector<16x128xf32>
    %217 = arith.mulf %210, %216 : vector<16x128xf32>
    %218 = arith.addf %200, %217 : vector<16x128xf32>
    %219 = vector.extract_strided_slice %7 {offsets = [11, 0], sizes = [1, 128], strides = [1, 1]} : vector<32x128xi32> to vector<1x128xi32>
    %220 = vector.extract_strided_slice %9 {offsets = [11, 0], sizes = [1, 128], strides = [1, 1]} : vector<32x128xi32> to vector<1x128xi32>
    %221 = vector.extract_strided_slice %5 {offsets = [11, 0], sizes = [1, 128], strides = [1, 1]} : vector<32x128xf32> to vector<1x128xf32>
    %222 = vector.broadcast %219 : vector<1x128xi32> to vector<128x128xi32>
    %223 = arith.cmpi eq, %0, %222 : vector<128x128xi32>
    %cst_53 = arith.constant 1.000000e+00 : f32
    %cst_54 = arith.constant 0.000000e+00 : f32
    %224 = vector.broadcast %cst_53 : f32 to vector<128x128xf32>
    %225 = vector.broadcast %cst_54 : f32 to vector<128x128xf32>
    %226 = arith.select %223, %224, %225 : vector<128x128xi1>, vector<128x128xf32>
    %227 = arith.truncf %226 : vector<128x128xf32> to vector<128x128xbf16>
    %cst_55 = arith.constant dense<0.000000e+00> : vector<16x128xf32>
    %228 = tpu.matmul %163, %227, %cst_55 {dimension_numbers = #tpu.dot_dimension_numbers<[1], [0], [0], [1], [0, 0, 1, 1], [], []>} : vector<16x128xbf16>, vector<128x128xbf16>, vector<16x128xf32> -> vector<16x128xf32>
    %229 = vector.broadcast %220 : vector<1x128xi32> to vector<16x128xi32>
    %230 = arith.cmpi eq, %3, %229 : vector<16x128xi32>
    %cst_56 = arith.constant 0.000000e+00 : f32
    %231 = vector.shape_cast %221 : vector<1x128xf32> to vector<1x128xf32>
    %232 = vector.broadcast %231 : vector<1x128xf32> to vector<16x128xf32>
    %233 = vector.broadcast %cst_56 : f32 to vector<16x128xf32>
    %234 = arith.select %230, %232, %233 : vector<16x128xi1>, vector<16x128xf32>
    %235 = arith.mulf %228, %234 : vector<16x128xf32>
    %236 = arith.addf %218, %235 : vector<16x128xf32>
    %237 = vector.extract_strided_slice %7 {offsets = [12, 0], sizes = [1, 128], strides = [1, 1]} : vector<32x128xi32> to vector<1x128xi32>
    %238 = vector.extract_strided_slice %9 {offsets = [12, 0], sizes = [1, 128], strides = [1, 1]} : vector<32x128xi32> to vector<1x128xi32>
    %239 = vector.extract_strided_slice %5 {offsets = [12, 0], sizes = [1, 128], strides = [1, 1]} : vector<32x128xf32> to vector<1x128xf32>
    %240 = vector.broadcast %237 : vector<1x128xi32> to vector<128x128xi32>
    %241 = arith.cmpi eq, %0, %240 : vector<128x128xi32>
    %cst_57 = arith.constant 1.000000e+00 : f32
    %cst_58 = arith.constant 0.000000e+00 : f32
    %242 = vector.broadcast %cst_57 : f32 to vector<128x128xf32>
    %243 = vector.broadcast %cst_58 : f32 to vector<128x128xf32>
    %244 = arith.select %241, %242, %243 : vector<128x128xi1>, vector<128x128xf32>
    %245 = arith.truncf %244 : vector<128x128xf32> to vector<128x128xbf16>
    %cst_59 = arith.constant dense<0.000000e+00> : vector<16x128xf32>
    %246 = tpu.matmul %163, %245, %cst_59 {dimension_numbers = #tpu.dot_dimension_numbers<[1], [0], [0], [1], [0, 0, 1, 1], [], []>} : vector<16x128xbf16>, vector<128x128xbf16>, vector<16x128xf32> -> vector<16x128xf32>
    %247 = vector.broadcast %238 : vector<1x128xi32> to vector<16x128xi32>
    %248 = arith.cmpi eq, %3, %247 : vector<16x128xi32>
    %cst_60 = arith.constant 0.000000e+00 : f32
    %249 = vector.shape_cast %239 : vector<1x128xf32> to vector<1x128xf32>
    %250 = vector.broadcast %249 : vector<1x128xf32> to vector<16x128xf32>
    %251 = vector.broadcast %cst_60 : f32 to vector<16x128xf32>
    %252 = arith.select %248, %250, %251 : vector<16x128xi1>, vector<16x128xf32>
    %253 = arith.mulf %246, %252 : vector<16x128xf32>
    %254 = arith.addf %236, %253 : vector<16x128xf32>
    %255 = vector.extract_strided_slice %7 {offsets = [13, 0], sizes = [1, 128], strides = [1, 1]} : vector<32x128xi32> to vector<1x128xi32>
    %256 = vector.extract_strided_slice %9 {offsets = [13, 0], sizes = [1, 128], strides = [1, 1]} : vector<32x128xi32> to vector<1x128xi32>
    %257 = vector.extract_strided_slice %5 {offsets = [13, 0], sizes = [1, 128], strides = [1, 1]} : vector<32x128xf32> to vector<1x128xf32>
    %258 = vector.broadcast %255 : vector<1x128xi32> to vector<128x128xi32>
    %259 = arith.cmpi eq, %0, %258 : vector<128x128xi32>
    %cst_61 = arith.constant 1.000000e+00 : f32
    %cst_62 = arith.constant 0.000000e+00 : f32
    %260 = vector.broadcast %cst_61 : f32 to vector<128x128xf32>
    %261 = vector.broadcast %cst_62 : f32 to vector<128x128xf32>
    %262 = arith.select %259, %260, %261 : vector<128x128xi1>, vector<128x128xf32>
    %263 = arith.truncf %262 : vector<128x128xf32> to vector<128x128xbf16>
    %cst_63 = arith.constant dense<0.000000e+00> : vector<16x128xf32>
    %264 = tpu.matmul %163, %263, %cst_63 {dimension_numbers = #tpu.dot_dimension_numbers<[1], [0], [0], [1], [0, 0, 1, 1], [], []>} : vector<16x128xbf16>, vector<128x128xbf16>, vector<16x128xf32> -> vector<16x128xf32>
    %265 = vector.broadcast %256 : vector<1x128xi32> to vector<16x128xi32>
    %266 = arith.cmpi eq, %3, %265 : vector<16x128xi32>
    %cst_64 = arith.constant 0.000000e+00 : f32
    %267 = vector.shape_cast %257 : vector<1x128xf32> to vector<1x128xf32>
    %268 = vector.broadcast %267 : vector<1x128xf32> to vector<16x128xf32>
    %269 = vector.broadcast %cst_64 : f32 to vector<16x128xf32>
    %270 = arith.select %266, %268, %269 : vector<16x128xi1>, vector<16x128xf32>
    %271 = arith.mulf %264, %270 : vector<16x128xf32>
    %272 = arith.addf %254, %271 : vector<16x128xf32>
    %273 = vector.extract_strided_slice %7 {offsets = [14, 0], sizes = [1, 128], strides = [1, 1]} : vector<32x128xi32> to vector<1x128xi32>
    %274 = vector.extract_strided_slice %9 {offsets = [14, 0], sizes = [1, 128], strides = [1, 1]} : vector<32x128xi32> to vector<1x128xi32>
    %275 = vector.extract_strided_slice %5 {offsets = [14, 0], sizes = [1, 128], strides = [1, 1]} : vector<32x128xf32> to vector<1x128xf32>
    %276 = vector.broadcast %273 : vector<1x128xi32> to vector<128x128xi32>
    %277 = arith.cmpi eq, %0, %276 : vector<128x128xi32>
    %cst_65 = arith.constant 1.000000e+00 : f32
    %cst_66 = arith.constant 0.000000e+00 : f32
    %278 = vector.broadcast %cst_65 : f32 to vector<128x128xf32>
    %279 = vector.broadcast %cst_66 : f32 to vector<128x128xf32>
    %280 = arith.select %277, %278, %279 : vector<128x128xi1>, vector<128x128xf32>
    %281 = arith.truncf %280 : vector<128x128xf32> to vector<128x128xbf16>
    %cst_67 = arith.constant dense<0.000000e+00> : vector<16x128xf32>
    %282 = tpu.matmul %163, %281, %cst_67 {dimension_numbers = #tpu.dot_dimension_numbers<[1], [0], [0], [1], [0, 0, 1, 1], [], []>} : vector<16x128xbf16>, vector<128x128xbf16>, vector<16x128xf32> -> vector<16x128xf32>
    %283 = vector.broadcast %274 : vector<1x128xi32> to vector<16x128xi32>
    %284 = arith.cmpi eq, %3, %283 : vector<16x128xi32>
    %cst_68 = arith.constant 0.000000e+00 : f32
    %285 = vector.shape_cast %275 : vector<1x128xf32> to vector<1x128xf32>
    %286 = vector.broadcast %285 : vector<1x128xf32> to vector<16x128xf32>
    %287 = vector.broadcast %cst_68 : f32 to vector<16x128xf32>
    %288 = arith.select %284, %286, %287 : vector<16x128xi1>, vector<16x128xf32>
    %289 = arith.mulf %282, %288 : vector<16x128xf32>
    %290 = arith.addf %272, %289 : vector<16x128xf32>
    %291 = vector.extract_strided_slice %7 {offsets = [15, 0], sizes = [1, 128], strides = [1, 1]} : vector<32x128xi32> to vector<1x128xi32>
    %292 = vector.extract_strided_slice %9 {offsets = [15, 0], sizes = [1, 128], strides = [1, 1]} : vector<32x128xi32> to vector<1x128xi32>
    %293 = vector.extract_strided_slice %5 {offsets = [15, 0], sizes = [1, 128], strides = [1, 1]} : vector<32x128xf32> to vector<1x128xf32>
    %294 = vector.broadcast %291 : vector<1x128xi32> to vector<128x128xi32>
    %295 = arith.cmpi eq, %0, %294 : vector<128x128xi32>
    %cst_69 = arith.constant 1.000000e+00 : f32
    %cst_70 = arith.constant 0.000000e+00 : f32
    %296 = vector.broadcast %cst_69 : f32 to vector<128x128xf32>
    %297 = vector.broadcast %cst_70 : f32 to vector<128x128xf32>
    %298 = arith.select %295, %296, %297 : vector<128x128xi1>, vector<128x128xf32>
    %299 = arith.truncf %298 : vector<128x128xf32> to vector<128x128xbf16>
    %cst_71 = arith.constant dense<0.000000e+00> : vector<16x128xf32>
    %300 = tpu.matmul %163, %299, %cst_71 {dimension_numbers = #tpu.dot_dimension_numbers<[1], [0], [0], [1], [0, 0, 1, 1], [], []>} : vector<16x128xbf16>, vector<128x128xbf16>, vector<16x128xf32> -> vector<16x128xf32>
    %301 = vector.broadcast %292 : vector<1x128xi32> to vector<16x128xi32>
    %302 = arith.cmpi eq, %3, %301 : vector<16x128xi32>
    %cst_72 = arith.constant 0.000000e+00 : f32
    %303 = vector.shape_cast %293 : vector<1x128xf32> to vector<1x128xf32>
    %304 = vector.broadcast %303 : vector<1x128xf32> to vector<16x128xf32>
    %305 = vector.broadcast %cst_72 : f32 to vector<16x128xf32>
    %306 = arith.select %302, %304, %305 : vector<16x128xi1>, vector<16x128xf32>
    %307 = arith.mulf %300, %306 : vector<16x128xf32>
    %308 = arith.addf %290, %307 : vector<16x128xf32>
    %309 = vector.extract_strided_slice %308 {offsets = [0, 0], sizes = [8, 128], strides = [1, 1]} : vector<16x128xf32> to vector<8x128xf32>
    %cst_73 = arith.constant dense<0.000000e+00> : vector<128xf32>
    %310 = vector.multi_reduction <add>, %309, %cst_73 [0] : vector<8x128xf32> to vector<128xf32>
    %311 = vector.shape_cast %310 : vector<128xf32> to vector<1x128xf32>
    %312 = vector.extract_strided_slice %308 {offsets = [8, 0], sizes = [8, 128], strides = [1, 1]} : vector<16x128xf32> to vector<8x128xf32>
    %cst_74 = arith.constant dense<0.000000e+00> : vector<128xf32>
    %313 = vector.multi_reduction <add>, %312, %cst_74 [0] : vector<8x128xf32> to vector<128xf32>
    %314 = vector.shape_cast %313 : vector<128xf32> to vector<1x128xf32>
    %315 = vector.extract_strided_slice %10 {offsets = [32, 0], sizes = [16, 128], strides = [1, 1]} : vector<64x128xbf16> to vector<16x128xbf16>
    %cst_75 = arith.constant 0.000000e+00 : f32
    %316 = vector.broadcast %cst_75 : f32 to vector<16x128xf32>
    %317 = vector.extract_strided_slice %7 {offsets = [16, 0], sizes = [1, 128], strides = [1, 1]} : vector<32x128xi32> to vector<1x128xi32>
    %318 = vector.extract_strided_slice %9 {offsets = [16, 0], sizes = [1, 128], strides = [1, 1]} : vector<32x128xi32> to vector<1x128xi32>
    %319 = vector.extract_strided_slice %5 {offsets = [16, 0], sizes = [1, 128], strides = [1, 1]} : vector<32x128xf32> to vector<1x128xf32>
    %320 = vector.broadcast %317 : vector<1x128xi32> to vector<128x128xi32>
    %321 = arith.cmpi eq, %0, %320 : vector<128x128xi32>
    %cst_76 = arith.constant 1.000000e+00 : f32
    %cst_77 = arith.constant 0.000000e+00 : f32
    %322 = vector.broadcast %cst_76 : f32 to vector<128x128xf32>
    %323 = vector.broadcast %cst_77 : f32 to vector<128x128xf32>
    %324 = arith.select %321, %322, %323 : vector<128x128xi1>, vector<128x128xf32>
    %325 = arith.truncf %324 : vector<128x128xf32> to vector<128x128xbf16>
    %cst_78 = arith.constant dense<0.000000e+00> : vector<16x128xf32>
    %326 = tpu.matmul %315, %325, %cst_78 {dimension_numbers = #tpu.dot_dimension_numbers<[1], [0], [0], [1], [0, 0, 1, 1], [], []>} : vector<16x128xbf16>, vector<128x128xbf16>, vector<16x128xf32> -> vector<16x128xf32>
    %327 = vector.broadcast %318 : vector<1x128xi32> to vector<16x128xi32>
    %328 = arith.cmpi eq, %3, %327 : vector<16x128xi32>
    %cst_79 = arith.constant 0.000000e+00 : f32
    %329 = vector.shape_cast %319 : vector<1x128xf32> to vector<1x128xf32>
    %330 = vector.broadcast %329 : vector<1x128xf32> to vector<16x128xf32>
    %331 = vector.broadcast %cst_79 : f32 to vector<16x128xf32>
    %332 = arith.select %328, %330, %331 : vector<16x128xi1>, vector<16x128xf32>
    %333 = arith.mulf %326, %332 : vector<16x128xf32>
    %334 = arith.addf %316, %333 : vector<16x128xf32>
    %335 = vector.extract_strided_slice %7 {offsets = [17, 0], sizes = [1, 128], strides = [1, 1]} : vector<32x128xi32> to vector<1x128xi32>
    %336 = vector.extract_strided_slice %9 {offsets = [17, 0], sizes = [1, 128], strides = [1, 1]} : vector<32x128xi32> to vector<1x128xi32>
    %337 = vector.extract_strided_slice %5 {offsets = [17, 0], sizes = [1, 128], strides = [1, 1]} : vector<32x128xf32> to vector<1x128xf32>
    %338 = vector.broadcast %335 : vector<1x128xi32> to vector<128x128xi32>
    %339 = arith.cmpi eq, %0, %338 : vector<128x128xi32>
    %cst_80 = arith.constant 1.000000e+00 : f32
    %cst_81 = arith.constant 0.000000e+00 : f32
    %340 = vector.broadcast %cst_80 : f32 to vector<128x128xf32>
    %341 = vector.broadcast %cst_81 : f32 to vector<128x128xf32>
    %342 = arith.select %339, %340, %341 : vector<128x128xi1>, vector<128x128xf32>
    %343 = arith.truncf %342 : vector<128x128xf32> to vector<128x128xbf16>
    %cst_82 = arith.constant dense<0.000000e+00> : vector<16x128xf32>
    %344 = tpu.matmul %315, %343, %cst_82 {dimension_numbers = #tpu.dot_dimension_numbers<[1], [0], [0], [1], [0, 0, 1, 1], [], []>} : vector<16x128xbf16>, vector<128x128xbf16>, vector<16x128xf32> -> vector<16x128xf32>
    %345 = vector.broadcast %336 : vector<1x128xi32> to vector<16x128xi32>
    %346 = arith.cmpi eq, %3, %345 : vector<16x128xi32>
    %cst_83 = arith.constant 0.000000e+00 : f32
    %347 = vector.shape_cast %337 : vector<1x128xf32> to vector<1x128xf32>
    %348 = vector.broadcast %347 : vector<1x128xf32> to vector<16x128xf32>
    %349 = vector.broadcast %cst_83 : f32 to vector<16x128xf32>
    %350 = arith.select %346, %348, %349 : vector<16x128xi1>, vector<16x128xf32>
    %351 = arith.mulf %344, %350 : vector<16x128xf32>
    %352 = arith.addf %334, %351 : vector<16x128xf32>
    %353 = vector.extract_strided_slice %7 {offsets = [18, 0], sizes = [1, 128], strides = [1, 1]} : vector<32x128xi32> to vector<1x128xi32>
    %354 = vector.extract_strided_slice %9 {offsets = [18, 0], sizes = [1, 128], strides = [1, 1]} : vector<32x128xi32> to vector<1x128xi32>
    %355 = vector.extract_strided_slice %5 {offsets = [18, 0], sizes = [1, 128], strides = [1, 1]} : vector<32x128xf32> to vector<1x128xf32>
    %356 = vector.broadcast %353 : vector<1x128xi32> to vector<128x128xi32>
    %357 = arith.cmpi eq, %0, %356 : vector<128x128xi32>
    %cst_84 = arith.constant 1.000000e+00 : f32
    %cst_85 = arith.constant 0.000000e+00 : f32
    %358 = vector.broadcast %cst_84 : f32 to vector<128x128xf32>
    %359 = vector.broadcast %cst_85 : f32 to vector<128x128xf32>
    %360 = arith.select %357, %358, %359 : vector<128x128xi1>, vector<128x128xf32>
    %361 = arith.truncf %360 : vector<128x128xf32> to vector<128x128xbf16>
    %cst_86 = arith.constant dense<0.000000e+00> : vector<16x128xf32>
    %362 = tpu.matmul %315, %361, %cst_86 {dimension_numbers = #tpu.dot_dimension_numbers<[1], [0], [0], [1], [0, 0, 1, 1], [], []>} : vector<16x128xbf16>, vector<128x128xbf16>, vector<16x128xf32> -> vector<16x128xf32>
    %363 = vector.broadcast %354 : vector<1x128xi32> to vector<16x128xi32>
    %364 = arith.cmpi eq, %3, %363 : vector<16x128xi32>
    %cst_87 = arith.constant 0.000000e+00 : f32
    %365 = vector.shape_cast %355 : vector<1x128xf32> to vector<1x128xf32>
    %366 = vector.broadcast %365 : vector<1x128xf32> to vector<16x128xf32>
    %367 = vector.broadcast %cst_87 : f32 to vector<16x128xf32>
    %368 = arith.select %364, %366, %367 : vector<16x128xi1>, vector<16x128xf32>
    %369 = arith.mulf %362, %368 : vector<16x128xf32>
    %370 = arith.addf %352, %369 : vector<16x128xf32>
    %371 = vector.extract_strided_slice %7 {offsets = [19, 0], sizes = [1, 128], strides = [1, 1]} : vector<32x128xi32> to vector<1x128xi32>
    %372 = vector.extract_strided_slice %9 {offsets = [19, 0], sizes = [1, 128], strides = [1, 1]} : vector<32x128xi32> to vector<1x128xi32>
    %373 = vector.extract_strided_slice %5 {offsets = [19, 0], sizes = [1, 128], strides = [1, 1]} : vector<32x128xf32> to vector<1x128xf32>
    %374 = vector.broadcast %371 : vector<1x128xi32> to vector<128x128xi32>
    %375 = arith.cmpi eq, %0, %374 : vector<128x128xi32>
    %cst_88 = arith.constant 1.000000e+00 : f32
    %cst_89 = arith.constant 0.000000e+00 : f32
    %376 = vector.broadcast %cst_88 : f32 to vector<128x128xf32>
    %377 = vector.broadcast %cst_89 : f32 to vector<128x128xf32>
    %378 = arith.select %375, %376, %377 : vector<128x128xi1>, vector<128x128xf32>
    %379 = arith.truncf %378 : vector<128x128xf32> to vector<128x128xbf16>
    %cst_90 = arith.constant dense<0.000000e+00> : vector<16x128xf32>
    %380 = tpu.matmul %315, %379, %cst_90 {dimension_numbers = #tpu.dot_dimension_numbers<[1], [0], [0], [1], [0, 0, 1, 1], [], []>} : vector<16x128xbf16>, vector<128x128xbf16>, vector<16x128xf32> -> vector<16x128xf32>
    %381 = vector.broadcast %372 : vector<1x128xi32> to vector<16x128xi32>
    %382 = arith.cmpi eq, %3, %381 : vector<16x128xi32>
    %cst_91 = arith.constant 0.000000e+00 : f32
    %383 = vector.shape_cast %373 : vector<1x128xf32> to vector<1x128xf32>
    %384 = vector.broadcast %383 : vector<1x128xf32> to vector<16x128xf32>
    %385 = vector.broadcast %cst_91 : f32 to vector<16x128xf32>
    %386 = arith.select %382, %384, %385 : vector<16x128xi1>, vector<16x128xf32>
    %387 = arith.mulf %380, %386 : vector<16x128xf32>
    %388 = arith.addf %370, %387 : vector<16x128xf32>
    %389 = vector.extract_strided_slice %7 {offsets = [20, 0], sizes = [1, 128], strides = [1, 1]} : vector<32x128xi32> to vector<1x128xi32>
    %390 = vector.extract_strided_slice %9 {offsets = [20, 0], sizes = [1, 128], strides = [1, 1]} : vector<32x128xi32> to vector<1x128xi32>
    %391 = vector.extract_strided_slice %5 {offsets = [20, 0], sizes = [1, 128], strides = [1, 1]} : vector<32x128xf32> to vector<1x128xf32>
    %392 = vector.broadcast %389 : vector<1x128xi32> to vector<128x128xi32>
    %393 = arith.cmpi eq, %0, %392 : vector<128x128xi32>
    %cst_92 = arith.constant 1.000000e+00 : f32
    %cst_93 = arith.constant 0.000000e+00 : f32
    %394 = vector.broadcast %cst_92 : f32 to vector<128x128xf32>
    %395 = vector.broadcast %cst_93 : f32 to vector<128x128xf32>
    %396 = arith.select %393, %394, %395 : vector<128x128xi1>, vector<128x128xf32>
    %397 = arith.truncf %396 : vector<128x128xf32> to vector<128x128xbf16>
    %cst_94 = arith.constant dense<0.000000e+00> : vector<16x128xf32>
    %398 = tpu.matmul %315, %397, %cst_94 {dimension_numbers = #tpu.dot_dimension_numbers<[1], [0], [0], [1], [0, 0, 1, 1], [], []>} : vector<16x128xbf16>, vector<128x128xbf16>, vector<16x128xf32> -> vector<16x128xf32>
    %399 = vector.broadcast %390 : vector<1x128xi32> to vector<16x128xi32>
    %400 = arith.cmpi eq, %3, %399 : vector<16x128xi32>
    %cst_95 = arith.constant 0.000000e+00 : f32
    %401 = vector.shape_cast %391 : vector<1x128xf32> to vector<1x128xf32>
    %402 = vector.broadcast %401 : vector<1x128xf32> to vector<16x128xf32>
    %403 = vector.broadcast %cst_95 : f32 to vector<16x128xf32>
    %404 = arith.select %400, %402, %403 : vector<16x128xi1>, vector<16x128xf32>
    %405 = arith.mulf %398, %404 : vector<16x128xf32>
    %406 = arith.addf %388, %405 : vector<16x128xf32>
    %407 = vector.extract_strided_slice %7 {offsets = [21, 0], sizes = [1, 128], strides = [1, 1]} : vector<32x128xi32> to vector<1x128xi32>
    %408 = vector.extract_strided_slice %9 {offsets = [21, 0], sizes = [1, 128], strides = [1, 1]} : vector<32x128xi32> to vector<1x128xi32>
    %409 = vector.extract_strided_slice %5 {offsets = [21, 0], sizes = [1, 128], strides = [1, 1]} : vector<32x128xf32> to vector<1x128xf32>
    %410 = vector.broadcast %407 : vector<1x128xi32> to vector<128x128xi32>
    %411 = arith.cmpi eq, %0, %410 : vector<128x128xi32>
    %cst_96 = arith.constant 1.000000e+00 : f32
    %cst_97 = arith.constant 0.000000e+00 : f32
    %412 = vector.broadcast %cst_96 : f32 to vector<128x128xf32>
    %413 = vector.broadcast %cst_97 : f32 to vector<128x128xf32>
    %414 = arith.select %411, %412, %413 : vector<128x128xi1>, vector<128x128xf32>
    %415 = arith.truncf %414 : vector<128x128xf32> to vector<128x128xbf16>
    %cst_98 = arith.constant dense<0.000000e+00> : vector<16x128xf32>
    %416 = tpu.matmul %315, %415, %cst_98 {dimension_numbers = #tpu.dot_dimension_numbers<[1], [0], [0], [1], [0, 0, 1, 1], [], []>} : vector<16x128xbf16>, vector<128x128xbf16>, vector<16x128xf32> -> vector<16x128xf32>
    %417 = vector.broadcast %408 : vector<1x128xi32> to vector<16x128xi32>
    %418 = arith.cmpi eq, %3, %417 : vector<16x128xi32>
    %cst_99 = arith.constant 0.000000e+00 : f32
    %419 = vector.shape_cast %409 : vector<1x128xf32> to vector<1x128xf32>
    %420 = vector.broadcast %419 : vector<1x128xf32> to vector<16x128xf32>
    %421 = vector.broadcast %cst_99 : f32 to vector<16x128xf32>
    %422 = arith.select %418, %420, %421 : vector<16x128xi1>, vector<16x128xf32>
    %423 = arith.mulf %416, %422 : vector<16x128xf32>
    %424 = arith.addf %406, %423 : vector<16x128xf32>
    %425 = vector.extract_strided_slice %7 {offsets = [22, 0], sizes = [1, 128], strides = [1, 1]} : vector<32x128xi32> to vector<1x128xi32>
    %426 = vector.extract_strided_slice %9 {offsets = [22, 0], sizes = [1, 128], strides = [1, 1]} : vector<32x128xi32> to vector<1x128xi32>
    %427 = vector.extract_strided_slice %5 {offsets = [22, 0], sizes = [1, 128], strides = [1, 1]} : vector<32x128xf32> to vector<1x128xf32>
    %428 = vector.broadcast %425 : vector<1x128xi32> to vector<128x128xi32>
    %429 = arith.cmpi eq, %0, %428 : vector<128x128xi32>
    %cst_100 = arith.constant 1.000000e+00 : f32
    %cst_101 = arith.constant 0.000000e+00 : f32
    %430 = vector.broadcast %cst_100 : f32 to vector<128x128xf32>
    %431 = vector.broadcast %cst_101 : f32 to vector<128x128xf32>
    %432 = arith.select %429, %430, %431 : vector<128x128xi1>, vector<128x128xf32>
    %433 = arith.truncf %432 : vector<128x128xf32> to vector<128x128xbf16>
    %cst_102 = arith.constant dense<0.000000e+00> : vector<16x128xf32>
    %434 = tpu.matmul %315, %433, %cst_102 {dimension_numbers = #tpu.dot_dimension_numbers<[1], [0], [0], [1], [0, 0, 1, 1], [], []>} : vector<16x128xbf16>, vector<128x128xbf16>, vector<16x128xf32> -> vector<16x128xf32>
    %435 = vector.broadcast %426 : vector<1x128xi32> to vector<16x128xi32>
    %436 = arith.cmpi eq, %3, %435 : vector<16x128xi32>
    %cst_103 = arith.constant 0.000000e+00 : f32
    %437 = vector.shape_cast %427 : vector<1x128xf32> to vector<1x128xf32>
    %438 = vector.broadcast %437 : vector<1x128xf32> to vector<16x128xf32>
    %439 = vector.broadcast %cst_103 : f32 to vector<16x128xf32>
    %440 = arith.select %436, %438, %439 : vector<16x128xi1>, vector<16x128xf32>
    %441 = arith.mulf %434, %440 : vector<16x128xf32>
    %442 = arith.addf %424, %441 : vector<16x128xf32>
    %443 = vector.extract_strided_slice %7 {offsets = [23, 0], sizes = [1, 128], strides = [1, 1]} : vector<32x128xi32> to vector<1x128xi32>
    %444 = vector.extract_strided_slice %9 {offsets = [23, 0], sizes = [1, 128], strides = [1, 1]} : vector<32x128xi32> to vector<1x128xi32>
    %445 = vector.extract_strided_slice %5 {offsets = [23, 0], sizes = [1, 128], strides = [1, 1]} : vector<32x128xf32> to vector<1x128xf32>
    %446 = vector.broadcast %443 : vector<1x128xi32> to vector<128x128xi32>
    %447 = arith.cmpi eq, %0, %446 : vector<128x128xi32>
    %cst_104 = arith.constant 1.000000e+00 : f32
    %cst_105 = arith.constant 0.000000e+00 : f32
    %448 = vector.broadcast %cst_104 : f32 to vector<128x128xf32>
    %449 = vector.broadcast %cst_105 : f32 to vector<128x128xf32>
    %450 = arith.select %447, %448, %449 : vector<128x128xi1>, vector<128x128xf32>
    %451 = arith.truncf %450 : vector<128x128xf32> to vector<128x128xbf16>
    %cst_106 = arith.constant dense<0.000000e+00> : vector<16x128xf32>
    %452 = tpu.matmul %315, %451, %cst_106 {dimension_numbers = #tpu.dot_dimension_numbers<[1], [0], [0], [1], [0, 0, 1, 1], [], []>} : vector<16x128xbf16>, vector<128x128xbf16>, vector<16x128xf32> -> vector<16x128xf32>
    %453 = vector.broadcast %444 : vector<1x128xi32> to vector<16x128xi32>
    %454 = arith.cmpi eq, %3, %453 : vector<16x128xi32>
    %cst_107 = arith.constant 0.000000e+00 : f32
    %455 = vector.shape_cast %445 : vector<1x128xf32> to vector<1x128xf32>
    %456 = vector.broadcast %455 : vector<1x128xf32> to vector<16x128xf32>
    %457 = vector.broadcast %cst_107 : f32 to vector<16x128xf32>
    %458 = arith.select %454, %456, %457 : vector<16x128xi1>, vector<16x128xf32>
    %459 = arith.mulf %452, %458 : vector<16x128xf32>
    %460 = arith.addf %442, %459 : vector<16x128xf32>
    %461 = vector.extract_strided_slice %460 {offsets = [0, 0], sizes = [8, 128], strides = [1, 1]} : vector<16x128xf32> to vector<8x128xf32>
    %cst_108 = arith.constant dense<0.000000e+00> : vector<128xf32>
    %462 = vector.multi_reduction <add>, %461, %cst_108 [0] : vector<8x128xf32> to vector<128xf32>
    %463 = vector.shape_cast %462 : vector<128xf32> to vector<1x128xf32>
    %464 = vector.extract_strided_slice %460 {offsets = [8, 0], sizes = [8, 128], strides = [1, 1]} : vector<16x128xf32> to vector<8x128xf32>
    %cst_109 = arith.constant dense<0.000000e+00> : vector<128xf32>
    %465 = vector.multi_reduction <add>, %464, %cst_109 [0] : vector<8x128xf32> to vector<128xf32>
    %466 = vector.shape_cast %465 : vector<128xf32> to vector<1x128xf32>
    %467 = vector.extract_strided_slice %10 {offsets = [48, 0], sizes = [16, 128], strides = [1, 1]} : vector<64x128xbf16> to vector<16x128xbf16>
    %cst_110 = arith.constant 0.000000e+00 : f32
    %468 = vector.broadcast %cst_110 : f32 to vector<16x128xf32>
    %469 = vector.extract_strided_slice %7 {offsets = [24, 0], sizes = [1, 128], strides = [1, 1]} : vector<32x128xi32> to vector<1x128xi32>
    %470 = vector.extract_strided_slice %9 {offsets = [24, 0], sizes = [1, 128], strides = [1, 1]} : vector<32x128xi32> to vector<1x128xi32>
    %471 = vector.extract_strided_slice %5 {offsets = [24, 0], sizes = [1, 128], strides = [1, 1]} : vector<32x128xf32> to vector<1x128xf32>
    %472 = vector.broadcast %469 : vector<1x128xi32> to vector<128x128xi32>
    %473 = arith.cmpi eq, %0, %472 : vector<128x128xi32>
    %cst_111 = arith.constant 1.000000e+00 : f32
    %cst_112 = arith.constant 0.000000e+00 : f32
    %474 = vector.broadcast %cst_111 : f32 to vector<128x128xf32>
    %475 = vector.broadcast %cst_112 : f32 to vector<128x128xf32>
    %476 = arith.select %473, %474, %475 : vector<128x128xi1>, vector<128x128xf32>
    %477 = arith.truncf %476 : vector<128x128xf32> to vector<128x128xbf16>
    %cst_113 = arith.constant dense<0.000000e+00> : vector<16x128xf32>
    %478 = tpu.matmul %467, %477, %cst_113 {dimension_numbers = #tpu.dot_dimension_numbers<[1], [0], [0], [1], [0, 0, 1, 1], [], []>} : vector<16x128xbf16>, vector<128x128xbf16>, vector<16x128xf32> -> vector<16x128xf32>
    %479 = vector.broadcast %470 : vector<1x128xi32> to vector<16x128xi32>
    %480 = arith.cmpi eq, %3, %479 : vector<16x128xi32>
    %cst_114 = arith.constant 0.000000e+00 : f32
    %481 = vector.shape_cast %471 : vector<1x128xf32> to vector<1x128xf32>
    %482 = vector.broadcast %481 : vector<1x128xf32> to vector<16x128xf32>
    %483 = vector.broadcast %cst_114 : f32 to vector<16x128xf32>
    %484 = arith.select %480, %482, %483 : vector<16x128xi1>, vector<16x128xf32>
    %485 = arith.mulf %478, %484 : vector<16x128xf32>
    %486 = arith.addf %468, %485 : vector<16x128xf32>
    %487 = vector.extract_strided_slice %7 {offsets = [25, 0], sizes = [1, 128], strides = [1, 1]} : vector<32x128xi32> to vector<1x128xi32>
    %488 = vector.extract_strided_slice %9 {offsets = [25, 0], sizes = [1, 128], strides = [1, 1]} : vector<32x128xi32> to vector<1x128xi32>
    %489 = vector.extract_strided_slice %5 {offsets = [25, 0], sizes = [1, 128], strides = [1, 1]} : vector<32x128xf32> to vector<1x128xf32>
    %490 = vector.broadcast %487 : vector<1x128xi32> to vector<128x128xi32>
    %491 = arith.cmpi eq, %0, %490 : vector<128x128xi32>
    %cst_115 = arith.constant 1.000000e+00 : f32
    %cst_116 = arith.constant 0.000000e+00 : f32
    %492 = vector.broadcast %cst_115 : f32 to vector<128x128xf32>
    %493 = vector.broadcast %cst_116 : f32 to vector<128x128xf32>
    %494 = arith.select %491, %492, %493 : vector<128x128xi1>, vector<128x128xf32>
    %495 = arith.truncf %494 : vector<128x128xf32> to vector<128x128xbf16>
    %cst_117 = arith.constant dense<0.000000e+00> : vector<16x128xf32>
    %496 = tpu.matmul %467, %495, %cst_117 {dimension_numbers = #tpu.dot_dimension_numbers<[1], [0], [0], [1], [0, 0, 1, 1], [], []>} : vector<16x128xbf16>, vector<128x128xbf16>, vector<16x128xf32> -> vector<16x128xf32>
    %497 = vector.broadcast %488 : vector<1x128xi32> to vector<16x128xi32>
    %498 = arith.cmpi eq, %3, %497 : vector<16x128xi32>
    %cst_118 = arith.constant 0.000000e+00 : f32
    %499 = vector.shape_cast %489 : vector<1x128xf32> to vector<1x128xf32>
    %500 = vector.broadcast %499 : vector<1x128xf32> to vector<16x128xf32>
    %501 = vector.broadcast %cst_118 : f32 to vector<16x128xf32>
    %502 = arith.select %498, %500, %501 : vector<16x128xi1>, vector<16x128xf32>
    %503 = arith.mulf %496, %502 : vector<16x128xf32>
    %504 = arith.addf %486, %503 : vector<16x128xf32>
    %505 = vector.extract_strided_slice %7 {offsets = [26, 0], sizes = [1, 128], strides = [1, 1]} : vector<32x128xi32> to vector<1x128xi32>
    %506 = vector.extract_strided_slice %9 {offsets = [26, 0], sizes = [1, 128], strides = [1, 1]} : vector<32x128xi32> to vector<1x128xi32>
    %507 = vector.extract_strided_slice %5 {offsets = [26, 0], sizes = [1, 128], strides = [1, 1]} : vector<32x128xf32> to vector<1x128xf32>
    %508 = vector.broadcast %505 : vector<1x128xi32> to vector<128x128xi32>
    %509 = arith.cmpi eq, %0, %508 : vector<128x128xi32>
    %cst_119 = arith.constant 1.000000e+00 : f32
    %cst_120 = arith.constant 0.000000e+00 : f32
    %510 = vector.broadcast %cst_119 : f32 to vector<128x128xf32>
    %511 = vector.broadcast %cst_120 : f32 to vector<128x128xf32>
    %512 = arith.select %509, %510, %511 : vector<128x128xi1>, vector<128x128xf32>
    %513 = arith.truncf %512 : vector<128x128xf32> to vector<128x128xbf16>
    %cst_121 = arith.constant dense<0.000000e+00> : vector<16x128xf32>
    %514 = tpu.matmul %467, %513, %cst_121 {dimension_numbers = #tpu.dot_dimension_numbers<[1], [0], [0], [1], [0, 0, 1, 1], [], []>} : vector<16x128xbf16>, vector<128x128xbf16>, vector<16x128xf32> -> vector<16x128xf32>
    %515 = vector.broadcast %506 : vector<1x128xi32> to vector<16x128xi32>
    %516 = arith.cmpi eq, %3, %515 : vector<16x128xi32>
    %cst_122 = arith.constant 0.000000e+00 : f32
    %517 = vector.shape_cast %507 : vector<1x128xf32> to vector<1x128xf32>
    %518 = vector.broadcast %517 : vector<1x128xf32> to vector<16x128xf32>
    %519 = vector.broadcast %cst_122 : f32 to vector<16x128xf32>
    %520 = arith.select %516, %518, %519 : vector<16x128xi1>, vector<16x128xf32>
    %521 = arith.mulf %514, %520 : vector<16x128xf32>
    %522 = arith.addf %504, %521 : vector<16x128xf32>
    %523 = vector.extract_strided_slice %7 {offsets = [27, 0], sizes = [1, 128], strides = [1, 1]} : vector<32x128xi32> to vector<1x128xi32>
    %524 = vector.extract_strided_slice %9 {offsets = [27, 0], sizes = [1, 128], strides = [1, 1]} : vector<32x128xi32> to vector<1x128xi32>
    %525 = vector.extract_strided_slice %5 {offsets = [27, 0], sizes = [1, 128], strides = [1, 1]} : vector<32x128xf32> to vector<1x128xf32>
    %526 = vector.broadcast %523 : vector<1x128xi32> to vector<128x128xi32>
    %527 = arith.cmpi eq, %0, %526 : vector<128x128xi32>
    %cst_123 = arith.constant 1.000000e+00 : f32
    %cst_124 = arith.constant 0.000000e+00 : f32
    %528 = vector.broadcast %cst_123 : f32 to vector<128x128xf32>
    %529 = vector.broadcast %cst_124 : f32 to vector<128x128xf32>
    %530 = arith.select %527, %528, %529 : vector<128x128xi1>, vector<128x128xf32>
    %531 = arith.truncf %530 : vector<128x128xf32> to vector<128x128xbf16>
    %cst_125 = arith.constant dense<0.000000e+00> : vector<16x128xf32>
    %532 = tpu.matmul %467, %531, %cst_125 {dimension_numbers = #tpu.dot_dimension_numbers<[1], [0], [0], [1], [0, 0, 1, 1], [], []>} : vector<16x128xbf16>, vector<128x128xbf16>, vector<16x128xf32> -> vector<16x128xf32>
    %533 = vector.broadcast %524 : vector<1x128xi32> to vector<16x128xi32>
    %534 = arith.cmpi eq, %3, %533 : vector<16x128xi32>
    %cst_126 = arith.constant 0.000000e+00 : f32
    %535 = vector.shape_cast %525 : vector<1x128xf32> to vector<1x128xf32>
    %536 = vector.broadcast %535 : vector<1x128xf32> to vector<16x128xf32>
    %537 = vector.broadcast %cst_126 : f32 to vector<16x128xf32>
    %538 = arith.select %534, %536, %537 : vector<16x128xi1>, vector<16x128xf32>
    %539 = arith.mulf %532, %538 : vector<16x128xf32>
    %540 = arith.addf %522, %539 : vector<16x128xf32>
    %541 = vector.extract_strided_slice %7 {offsets = [28, 0], sizes = [1, 128], strides = [1, 1]} : vector<32x128xi32> to vector<1x128xi32>
    %542 = vector.extract_strided_slice %9 {offsets = [28, 0], sizes = [1, 128], strides = [1, 1]} : vector<32x128xi32> to vector<1x128xi32>
    %543 = vector.extract_strided_slice %5 {offsets = [28, 0], sizes = [1, 128], strides = [1, 1]} : vector<32x128xf32> to vector<1x128xf32>
    %544 = vector.broadcast %541 : vector<1x128xi32> to vector<128x128xi32>
    %545 = arith.cmpi eq, %0, %544 : vector<128x128xi32>
    %cst_127 = arith.constant 1.000000e+00 : f32
    %cst_128 = arith.constant 0.000000e+00 : f32
    %546 = vector.broadcast %cst_127 : f32 to vector<128x128xf32>
    %547 = vector.broadcast %cst_128 : f32 to vector<128x128xf32>
    %548 = arith.select %545, %546, %547 : vector<128x128xi1>, vector<128x128xf32>
    %549 = arith.truncf %548 : vector<128x128xf32> to vector<128x128xbf16>
    %cst_129 = arith.constant dense<0.000000e+00> : vector<16x128xf32>
    %550 = tpu.matmul %467, %549, %cst_129 {dimension_numbers = #tpu.dot_dimension_numbers<[1], [0], [0], [1], [0, 0, 1, 1], [], []>} : vector<16x128xbf16>, vector<128x128xbf16>, vector<16x128xf32> -> vector<16x128xf32>
    %551 = vector.broadcast %542 : vector<1x128xi32> to vector<16x128xi32>
    %552 = arith.cmpi eq, %3, %551 : vector<16x128xi32>
    %cst_130 = arith.constant 0.000000e+00 : f32
    %553 = vector.shape_cast %543 : vector<1x128xf32> to vector<1x128xf32>
    %554 = vector.broadcast %553 : vector<1x128xf32> to vector<16x128xf32>
    %555 = vector.broadcast %cst_130 : f32 to vector<16x128xf32>
    %556 = arith.select %552, %554, %555 : vector<16x128xi1>, vector<16x128xf32>
    %557 = arith.mulf %550, %556 : vector<16x128xf32>
    %558 = arith.addf %540, %557 : vector<16x128xf32>
    %559 = vector.extract_strided_slice %7 {offsets = [29, 0], sizes = [1, 128], strides = [1, 1]} : vector<32x128xi32> to vector<1x128xi32>
    %560 = vector.extract_strided_slice %9 {offsets = [29, 0], sizes = [1, 128], strides = [1, 1]} : vector<32x128xi32> to vector<1x128xi32>
    %561 = vector.extract_strided_slice %5 {offsets = [29, 0], sizes = [1, 128], strides = [1, 1]} : vector<32x128xf32> to vector<1x128xf32>
    %562 = vector.broadcast %559 : vector<1x128xi32> to vector<128x128xi32>
    %563 = arith.cmpi eq, %0, %562 : vector<128x128xi32>
    %cst_131 = arith.constant 1.000000e+00 : f32
    %cst_132 = arith.constant 0.000000e+00 : f32
    %564 = vector.broadcast %cst_131 : f32 to vector<128x128xf32>
    %565 = vector.broadcast %cst_132 : f32 to vector<128x128xf32>
    %566 = arith.select %563, %564, %565 : vector<128x128xi1>, vector<128x128xf32>
    %567 = arith.truncf %566 : vector<128x128xf32> to vector<128x128xbf16>
    %cst_133 = arith.constant dense<0.000000e+00> : vector<16x128xf32>
    %568 = tpu.matmul %467, %567, %cst_133 {dimension_numbers = #tpu.dot_dimension_numbers<[1], [0], [0], [1], [0, 0, 1, 1], [], []>} : vector<16x128xbf16>, vector<128x128xbf16>, vector<16x128xf32> -> vector<16x128xf32>
    %569 = vector.broadcast %560 : vector<1x128xi32> to vector<16x128xi32>
    %570 = arith.cmpi eq, %3, %569 : vector<16x128xi32>
    %cst_134 = arith.constant 0.000000e+00 : f32
    %571 = vector.shape_cast %561 : vector<1x128xf32> to vector<1x128xf32>
    %572 = vector.broadcast %571 : vector<1x128xf32> to vector<16x128xf32>
    %573 = vector.broadcast %cst_134 : f32 to vector<16x128xf32>
    %574 = arith.select %570, %572, %573 : vector<16x128xi1>, vector<16x128xf32>
    %575 = arith.mulf %568, %574 : vector<16x128xf32>
    %576 = arith.addf %558, %575 : vector<16x128xf32>
    %577 = vector.extract_strided_slice %7 {offsets = [30, 0], sizes = [1, 128], strides = [1, 1]} : vector<32x128xi32> to vector<1x128xi32>
    %578 = vector.extract_strided_slice %9 {offsets = [30, 0], sizes = [1, 128], strides = [1, 1]} : vector<32x128xi32> to vector<1x128xi32>
    %579 = vector.extract_strided_slice %5 {offsets = [30, 0], sizes = [1, 128], strides = [1, 1]} : vector<32x128xf32> to vector<1x128xf32>
    %580 = vector.broadcast %577 : vector<1x128xi32> to vector<128x128xi32>
    %581 = arith.cmpi eq, %0, %580 : vector<128x128xi32>
    %cst_135 = arith.constant 1.000000e+00 : f32
    %cst_136 = arith.constant 0.000000e+00 : f32
    %582 = vector.broadcast %cst_135 : f32 to vector<128x128xf32>
    %583 = vector.broadcast %cst_136 : f32 to vector<128x128xf32>
    %584 = arith.select %581, %582, %583 : vector<128x128xi1>, vector<128x128xf32>
    %585 = arith.truncf %584 : vector<128x128xf32> to vector<128x128xbf16>
    %cst_137 = arith.constant dense<0.000000e+00> : vector<16x128xf32>
    %586 = tpu.matmul %467, %585, %cst_137 {dimension_numbers = #tpu.dot_dimension_numbers<[1], [0], [0], [1], [0, 0, 1, 1], [], []>} : vector<16x128xbf16>, vector<128x128xbf16>, vector<16x128xf32> -> vector<16x128xf32>
    %587 = vector.broadcast %578 : vector<1x128xi32> to vector<16x128xi32>
    %588 = arith.cmpi eq, %3, %587 : vector<16x128xi32>
    %cst_138 = arith.constant 0.000000e+00 : f32
    %589 = vector.shape_cast %579 : vector<1x128xf32> to vector<1x128xf32>
    %590 = vector.broadcast %589 : vector<1x128xf32> to vector<16x128xf32>
    %591 = vector.broadcast %cst_138 : f32 to vector<16x128xf32>
    %592 = arith.select %588, %590, %591 : vector<16x128xi1>, vector<16x128xf32>
    %593 = arith.mulf %586, %592 : vector<16x128xf32>
    %594 = arith.addf %576, %593 : vector<16x128xf32>
    %595 = vector.extract_strided_slice %7 {offsets = [31, 0], sizes = [1, 128], strides = [1, 1]} : vector<32x128xi32> to vector<1x128xi32>
    %596 = vector.extract_strided_slice %9 {offsets = [31, 0], sizes = [1, 128], strides = [1, 1]} : vector<32x128xi32> to vector<1x128xi32>
    %597 = vector.extract_strided_slice %5 {offsets = [31, 0], sizes = [1, 128], strides = [1, 1]} : vector<32x128xf32> to vector<1x128xf32>
    %598 = vector.broadcast %595 : vector<1x128xi32> to vector<128x128xi32>
    %599 = arith.cmpi eq, %0, %598 : vector<128x128xi32>
    %cst_139 = arith.constant 1.000000e+00 : f32
    %cst_140 = arith.constant 0.000000e+00 : f32
    %600 = vector.broadcast %cst_139 : f32 to vector<128x128xf32>
    %601 = vector.broadcast %cst_140 : f32 to vector<128x128xf32>
    %602 = arith.select %599, %600, %601 : vector<128x128xi1>, vector<128x128xf32>
    %603 = arith.truncf %602 : vector<128x128xf32> to vector<128x128xbf16>
    %cst_141 = arith.constant dense<0.000000e+00> : vector<16x128xf32>
    %604 = tpu.matmul %467, %603, %cst_141 {dimension_numbers = #tpu.dot_dimension_numbers<[1], [0], [0], [1], [0, 0, 1, 1], [], []>} : vector<16x128xbf16>, vector<128x128xbf16>, vector<16x128xf32> -> vector<16x128xf32>
    %605 = vector.broadcast %596 : vector<1x128xi32> to vector<16x128xi32>
    %606 = arith.cmpi eq, %3, %605 : vector<16x128xi32>
    %cst_142 = arith.constant 0.000000e+00 : f32
    %607 = vector.shape_cast %597 : vector<1x128xf32> to vector<1x128xf32>
    %608 = vector.broadcast %607 : vector<1x128xf32> to vector<16x128xf32>
    %609 = vector.broadcast %cst_142 : f32 to vector<16x128xf32>
    %610 = arith.select %606, %608, %609 : vector<16x128xi1>, vector<16x128xf32>
    %611 = arith.mulf %604, %610 : vector<16x128xf32>
    %612 = arith.addf %594, %611 : vector<16x128xf32>
    %613 = vector.extract_strided_slice %612 {offsets = [0, 0], sizes = [8, 128], strides = [1, 1]} : vector<16x128xf32> to vector<8x128xf32>
    %cst_143 = arith.constant dense<0.000000e+00> : vector<128xf32>
    %614 = vector.multi_reduction <add>, %613, %cst_143 [0] : vector<8x128xf32> to vector<128xf32>
    %615 = vector.shape_cast %614 : vector<128xf32> to vector<1x128xf32>
    %616 = vector.extract_strided_slice %612 {offsets = [8, 0], sizes = [8, 128], strides = [1, 1]} : vector<16x128xf32> to vector<8x128xf32>
    %cst_144 = arith.constant dense<0.000000e+00> : vector<128xf32>
    %617 = vector.multi_reduction <add>, %616, %cst_144 [0] : vector<8x128xf32> to vector<128xf32>
    %618 = vector.shape_cast %617 : vector<128xf32> to vector<1x128xf32>
    %619 = tpu.concatenate %159, %162, %311, %314, %463, %466, %615, %618 in 0 : vector<1x128xf32>, vector<1x128xf32>, vector<1x128xf32>, vector<1x128xf32>, vector<1x128xf32>, vector<1x128xf32>, vector<1x128xf32>, vector<1x128xf32> -> vector<8x128xf32>
    %c0_145 = arith.constant 0 : index
    %c0_146 = arith.constant 0 : index
    %620 = vector.load %arg3[%c0_145, %c0_146] : memref<8x128xf32, #tpu.memory_space<vmem>>, vector<8x128xf32>
    %621 = arith.addf %619, %620 : vector<8x128xf32>
    %c0_147 = arith.constant 0 : index
    %c0_148 = arith.constant 0 : index
    %622 = vector.load %arg6[%c0_147, %c0_148] : memref<64x8xbf16, #tpu.memory_space<vmem>>, vector<64x8xbf16>
    %623 = arith.truncf %621 : vector<8x128xf32> to vector<8x128xbf16>
    %cst_149 = arith.constant dense<0.000000e+00> : vector<64x128xf32>
    %624 = tpu.matmul %622, %623, %cst_149 {dimension_numbers = #tpu.dot_dimension_numbers<[1], [0], [0], [1], [0, 0, 1, 1], [], []>} : vector<64x8xbf16>, vector<8x128xbf16>, vector<64x128xf32> -> vector<64x128xf32>
    %cst_150 = arith.constant 0.000000e+00 : f32
    %625 = vector.broadcast %cst_150 : f32 to vector<64x128xf32>
    %626 = arith.maximumf %624, %625 : vector<64x128xf32>
    %c0_151 = arith.constant 0 : index
    %c0_152 = arith.constant 0 : index
    %627 = vector.load %arg7[%c0_151, %c0_152] : memref<16x64xbf16, #tpu.memory_space<vmem>>, vector<16x64xbf16>
    %628 = arith.truncf %626 : vector<64x128xf32> to vector<64x128xbf16>
    %cst_153 = arith.constant dense<0.000000e+00> : vector<16x128xf32>
    %629 = tpu.matmul %627, %628, %cst_153 {dimension_numbers = #tpu.dot_dimension_numbers<[1], [0], [0], [1], [0, 0, 1, 1], [], []>} : vector<16x64xbf16>, vector<64x128xbf16>, vector<16x128xf32> -> vector<16x128xf32>
    %630 = vector.extract_strided_slice %629 {offsets = [0, 0], sizes = [1, 128], strides = [1, 1]} : vector<16x128xf32> to vector<1x128xf32>
    %631 = math.exp %630 : vector<1x128xf32>
    %c0_154 = arith.constant 0 : index
    %c0_155 = arith.constant 0 : index
    %632 = vector.load %arg4[%c0_154, %c0_155] : memref<3x128xf32, #tpu.memory_space<vmem>>, vector<1x128xf32>
    %c1 = arith.constant 1 : index
    %c0_156 = arith.constant 0 : index
    %633 = vector.load %arg4[%c1, %c0_156] : memref<3x128xf32, #tpu.memory_space<vmem>>, vector<1x128xf32>
    %c2 = arith.constant 2 : index
    %c0_157 = arith.constant 0 : index
    %634 = vector.load %arg4[%c2, %c0_157] : memref<3x128xf32, #tpu.memory_space<vmem>>, vector<1x128xf32>
    %635 = arith.mulf %632, %632 : vector<1x128xf32>
    %636 = arith.mulf %633, %633 : vector<1x128xf32>
    %637 = arith.addf %635, %636 : vector<1x128xf32>
    %638 = arith.mulf %634, %634 : vector<1x128xf32>
    %639 = arith.addf %637, %638 : vector<1x128xf32>
    %640 = math.rsqrt %639 : vector<1x128xf32>
    %641 = arith.mulf %632, %640 : vector<1x128xf32>
    %642 = arith.mulf %633, %640 : vector<1x128xf32>
    %643 = arith.mulf %634, %640 : vector<1x128xf32>
    %644 = arith.mulf %641, %642 : vector<1x128xf32>
    %645 = arith.mulf %641, %643 : vector<1x128xf32>
    %646 = arith.mulf %642, %643 : vector<1x128xf32>
    %647 = arith.mulf %641, %641 : vector<1x128xf32>
    %648 = arith.mulf %642, %642 : vector<1x128xf32>
    %649 = arith.mulf %643, %643 : vector<1x128xf32>
    %cst_158 = arith.constant 0.282094806 : f32
    %650 = vector.broadcast %cst_158 : f32 to vector<1x128xf32>
    %cst_159 = arith.constant -0.488602519 : f32
    %651 = vector.broadcast %cst_159 : f32 to vector<1x128xf32>
    %652 = arith.mulf %651, %642 : vector<1x128xf32>
    %cst_160 = arith.constant 0.488602519 : f32
    %653 = vector.broadcast %cst_160 : f32 to vector<1x128xf32>
    %654 = arith.mulf %653, %643 : vector<1x128xf32>
    %cst_161 = arith.constant -0.488602519 : f32
    %655 = vector.broadcast %cst_161 : f32 to vector<1x128xf32>
    %656 = arith.mulf %655, %641 : vector<1x128xf32>
    %cst_162 = arith.constant 1.09254849 : f32
    %657 = vector.broadcast %cst_162 : f32 to vector<1x128xf32>
    %658 = arith.mulf %657, %644 : vector<1x128xf32>
    %cst_163 = arith.constant -1.09254849 : f32
    %659 = vector.broadcast %cst_163 : f32 to vector<1x128xf32>
    %660 = arith.mulf %659, %646 : vector<1x128xf32>
    %cst_164 = arith.constant 0.946174681 : f32
    %661 = vector.broadcast %cst_164 : f32 to vector<1x128xf32>
    %662 = arith.mulf %661, %649 : vector<1x128xf32>
    %cst_165 = arith.constant 0.31539157 : f32
    %663 = vector.broadcast %cst_165 : f32 to vector<1x128xf32>
    %664 = arith.subf %662, %663 : vector<1x128xf32>
    %cst_166 = arith.constant -1.09254849 : f32
    %665 = vector.broadcast %cst_166 : f32 to vector<1x128xf32>
    %666 = arith.mulf %665, %645 : vector<1x128xf32>
    %667 = arith.subf %647, %648 : vector<1x128xf32>
    %cst_167 = arith.constant 0.546274245 : f32
    %668 = vector.broadcast %cst_167 : f32 to vector<1x128xf32>
    %669 = arith.mulf %668, %667 : vector<1x128xf32>
    %cst_168 = arith.constant 0.590043604 : f32
    %670 = vector.broadcast %cst_168 : f32 to vector<1x128xf32>
    %671 = arith.mulf %670, %642 : vector<1x128xf32>
    %cst_169 = arith.constant -3.000000e+00 : f32
    %672 = vector.broadcast %cst_169 : f32 to vector<1x128xf32>
    %673 = arith.mulf %672, %647 : vector<1x128xf32>
    %674 = arith.addf %673, %648 : vector<1x128xf32>
    %675 = arith.mulf %671, %674 : vector<1x128xf32>
    %cst_170 = arith.constant 2.89061141 : f32
    %676 = vector.broadcast %cst_170 : f32 to vector<1x128xf32>
    %677 = arith.mulf %676, %644 : vector<1x128xf32>
    %678 = arith.mulf %677, %643 : vector<1x128xf32>
    %cst_171 = arith.constant 0.457045794 : f32
    %679 = vector.broadcast %cst_171 : f32 to vector<1x128xf32>
    %680 = arith.mulf %679, %642 : vector<1x128xf32>
    %cst_172 = arith.constant 5.000000e+00 : f32
    %681 = vector.broadcast %cst_172 : f32 to vector<1x128xf32>
    %682 = arith.mulf %681, %649 : vector<1x128xf32>
    %cst_173 = arith.constant 1.000000e+00 : f32
    %683 = vector.broadcast %cst_173 : f32 to vector<1x128xf32>
    %684 = arith.subf %683, %682 : vector<1x128xf32>
    %685 = arith.mulf %680, %684 : vector<1x128xf32>
    %cst_174 = arith.constant 0.373176336 : f32
    %686 = vector.broadcast %cst_174 : f32 to vector<1x128xf32>
    %687 = arith.mulf %686, %643 : vector<1x128xf32>
    %cst_175 = arith.constant 5.000000e+00 : f32
    %688 = vector.broadcast %cst_175 : f32 to vector<1x128xf32>
    %689 = arith.mulf %688, %649 : vector<1x128xf32>
    %cst_176 = arith.constant 3.000000e+00 : f32
    %690 = vector.broadcast %cst_176 : f32 to vector<1x128xf32>
    %691 = arith.subf %689, %690 : vector<1x128xf32>
    %692 = arith.mulf %687, %691 : vector<1x128xf32>
    %cst_177 = arith.constant 0.457045794 : f32
    %693 = vector.broadcast %cst_177 : f32 to vector<1x128xf32>
    %694 = arith.mulf %693, %641 : vector<1x128xf32>
    %cst_178 = arith.constant 5.000000e+00 : f32
    %695 = vector.broadcast %cst_178 : f32 to vector<1x128xf32>
    %696 = arith.mulf %695, %649 : vector<1x128xf32>
    %cst_179 = arith.constant 1.000000e+00 : f32
    %697 = vector.broadcast %cst_179 : f32 to vector<1x128xf32>
    %698 = arith.subf %697, %696 : vector<1x128xf32>
    %699 = arith.mulf %694, %698 : vector<1x128xf32>
    %cst_180 = arith.constant 1.44530571 : f32
    %700 = vector.broadcast %cst_180 : f32 to vector<1x128xf32>
    %701 = arith.mulf %700, %643 : vector<1x128xf32>
    %702 = arith.subf %647, %648 : vector<1x128xf32>
    %703 = arith.mulf %701, %702 : vector<1x128xf32>
    %cst_181 = arith.constant 0.590043604 : f32
    %704 = vector.broadcast %cst_181 : f32 to vector<1x128xf32>
    %705 = arith.mulf %704, %641 : vector<1x128xf32>
    %cst_182 = arith.constant 3.000000e+00 : f32
    %706 = vector.broadcast %cst_182 : f32 to vector<1x128xf32>
    %707 = arith.mulf %706, %648 : vector<1x128xf32>
    %708 = arith.subf %647, %707 : vector<1x128xf32>
    %709 = arith.mulf %705, %708 : vector<1x128xf32>
    %710 = tpu.concatenate %650, %652, %654, %656, %658, %660, %664, %666, %669, %675, %678, %685, %692, %699, %703, %709 in 0 : vector<1x128xf32>, vector<1x128xf32>, vector<1x128xf32>, vector<1x128xf32>, vector<1x128xf32>, vector<1x128xf32>, vector<1x128xf32>, vector<1x128xf32>, vector<1x128xf32>, vector<1x128xf32>, vector<1x128xf32>, vector<1x128xf32>, vector<1x128xf32>, vector<1x128xf32>, vector<1x128xf32>, vector<1x128xf32> -> vector<16x128xf32>
    %c0_183 = arith.constant 0 : index
    %c0_184 = arith.constant 0 : index
    %711 = vector.load %arg8[%c0_183, %c0_184] : memref<64x16xbf16, #tpu.memory_space<vmem>>, vector<64x16xbf16>
    %712 = arith.truncf %710 : vector<16x128xf32> to vector<16x128xbf16>
    %cst_185 = arith.constant dense<0.000000e+00> : vector<64x128xf32>
    %713 = tpu.matmul %711, %712, %cst_185 {dimension_numbers = #tpu.dot_dimension_numbers<[1], [0], [0], [1], [0, 0, 1, 1], [], []>} : vector<64x16xbf16>, vector<16x128xbf16>, vector<64x128xf32> -> vector<64x128xf32>
    %c0_186 = arith.constant 0 : index
    %c0_187 = arith.constant 0 : index
    %714 = vector.load %arg9[%c0_186, %c0_187] : memref<64x16xbf16, #tpu.memory_space<vmem>>, vector<64x16xbf16>
    %715 = arith.truncf %629 : vector<16x128xf32> to vector<16x128xbf16>
    %cst_188 = arith.constant dense<0.000000e+00> : vector<64x128xf32>
    %716 = tpu.matmul %714, %715, %cst_188 {dimension_numbers = #tpu.dot_dimension_numbers<[1], [0], [0], [1], [0, 0, 1, 1], [], []>} : vector<64x16xbf16>, vector<16x128xbf16>, vector<64x128xf32> -> vector<64x128xf32>
    %717 = arith.addf %713, %716 : vector<64x128xf32>
    %cst_189 = arith.constant 0.000000e+00 : f32
    %718 = vector.broadcast %cst_189 : f32 to vector<64x128xf32>
    %719 = arith.maximumf %717, %718 : vector<64x128xf32>
    %c0_190 = arith.constant 0 : index
    %c0_191 = arith.constant 0 : index
    %720 = vector.load %arg10[%c0_190, %c0_191] : memref<64x64xbf16, #tpu.memory_space<vmem>>, vector<64x64xbf16>
    %721 = arith.truncf %719 : vector<64x128xf32> to vector<64x128xbf16>
    %cst_192 = arith.constant dense<0.000000e+00> : vector<64x128xf32>
    %722 = tpu.matmul %720, %721, %cst_192 {dimension_numbers = #tpu.dot_dimension_numbers<[1], [0], [0], [1], [0, 0, 1, 1], [], []>} : vector<64x64xbf16>, vector<64x128xbf16>, vector<64x128xf32> -> vector<64x128xf32>
    %cst_193 = arith.constant 0.000000e+00 : f32
    %723 = vector.broadcast %cst_193 : f32 to vector<64x128xf32>
    %724 = arith.maximumf %722, %723 : vector<64x128xf32>
    %c0_194 = arith.constant 0 : index
    %c0_195 = arith.constant 0 : index
    %725 = vector.load %arg11[%c0_194, %c0_195] : memref<3x64xbf16, #tpu.memory_space<vmem>>, vector<3x64xbf16>
    %726 = arith.truncf %724 : vector<64x128xf32> to vector<64x128xbf16>
    %cst_196 = arith.constant dense<0.000000e+00> : vector<3x128xf32>
    %727 = tpu.matmul %725, %726, %cst_196 {dimension_numbers = #tpu.dot_dimension_numbers<[1], [0], [0], [1], [0, 0, 1, 1], [], []>} : vector<3x64xbf16>, vector<64x128xbf16>, vector<3x128xf32> -> vector<3x128xf32>
    %728 = arith.negf %727 : vector<3x128xf32>
    %729 = math.exp %728 : vector<3x128xf32>
    %cst_197 = arith.constant 1.000000e+00 : f32
    %730 = vector.broadcast %cst_197 : f32 to vector<3x128xf32>
    %731 = arith.addf %730, %729 : vector<3x128xf32>
    %732 = arith.divf %730, %731 : vector<3x128xf32>
    %733 = tpu.concatenate %631, %732 in 0 : vector<1x128xf32>, vector<3x128xf32> -> vector<4x128xf32>
    %c0_198 = arith.constant 0 : index
    %c0_199 = arith.constant 0 : index
    %734 = vector.load %arg12[%c0_198, %c0_199] : memref<4x128xf32, #tpu.memory_space<vmem>>, vector<4x128xf32>
    tpu.vector_store %arg12[%c0_198, %c0_199], %733 {strides = array<i32>} : memref<4x128xf32, #tpu.memory_space<vmem>>, vector<4x128xf32>,
    return
  }
  func.func @transform_0(%arg0: i32) -> (i32, i32) {
    %c0_i32 = arith.constant 0 : i32
    %c0_i32_0 = arith.constant 0 : i32
    return %c0_i32, %arg0 : i32, i32
  }
  func.func @transform_1(%arg0: i32) -> (i32, i32) {
    %c0_i32 = arith.constant 0 : i32
    %c0_i32_0 = arith.constant 0 : i32
    return %c0_i32, %arg0 : i32, i32
  }
  func.func @transform_2(%arg0: i32) -> (i32, i32) {
    %c0_i32 = arith.constant 0 : i32
    %c0_i32_0 = arith.constant 0 : i32
    return %c0_i32, %arg0 : i32, i32
  }
  func.func @transform_3(%arg0: i32) -> (i32, i32) {
    %c0_i32 = arith.constant 0 : i32
    %c0_i32_0 = arith.constant 0 : i32
    return %c0_i32, %arg0 : i32, i32
  }
  func.func @transform_4(%arg0: i32) -> (i32, i32) {
    %c0_i32 = arith.constant 0 : i32
    %c0_i32_0 = arith.constant 0 : i32
    %c0_i32_1 = arith.constant 0 : i32
    return %c0_i32, %c0_i32_0 : i32, i32
  }
  func.func @transform_5(%arg0: i32) -> (i32, i32) {
    %c0_i32 = arith.constant 0 : i32
    %c0_i32_0 = arith.constant 0 : i32
    %c0_i32_1 = arith.constant 0 : i32
    return %c0_i32, %c0_i32_0 : i32, i32
  }
  func.func @transform_6(%arg0: i32) -> (i32, i32) {
    %c0_i32 = arith.constant 0 : i32
    %c0_i32_0 = arith.constant 0 : i32
    %c0_i32_1 = arith.constant 0 : i32
    return %c0_i32, %c0_i32_0 : i32, i32
  }
  func.func @transform_7(%arg0: i32) -> (i32, i32) {
    %c0_i32 = arith.constant 0 : i32
    %c0_i32_0 = arith.constant 0 : i32
    %c0_i32_1 = arith.constant 0 : i32
    return %c0_i32, %c0_i32_0 : i32, i32
  }
  func.func @transform_8(%arg0: i32) -> (i32, i32) {
    %c0_i32 = arith.constant 0 : i32
    %c0_i32_0 = arith.constant 0 : i32
    %c0_i32_1 = arith.constant 0 : i32
    return %c0_i32, %c0_i32_0 : i32, i32
  }
  func.func @transform_9(%arg0: i32) -> (i32, i32) {
    %c0_i32 = arith.constant 0 : i32
    %c0_i32_0 = arith.constant 0 : i32
    %c0_i32_1 = arith.constant 0 : i32
    return %c0_i32, %c0_i32_0 : i32, i32
  }
  func.func @transform_10(%arg0: i32) -> (i32, i32) {
    %c0_i32 = arith.constant 0 : i32
    %c0_i32_0 = arith.constant 0 : i32
    %c0_i32_1 = arith.constant 0 : i32
    return %c0_i32, %c0_i32_0 : i32, i32
  }
  func.func @transform_11(%arg0: i32) -> (i32, i32) {
    %c0_i32 = arith.constant 0 : i32
    %c0_i32_0 = arith.constant 0 : i32
    return %c0_i32, %arg0 : i32, i32
  }
}

</mosaic_0001>

<llo_original>
// kernel: ngp_forward.1
$region0: #{ngp_forward.1}
  #allocation0 [shape = 'u32[]', space=smem, size = 0x4, offset = 0x4, fixed_abs, tag = 'smem constant byte address 0x4 - core index']
  #allocation1 [shape = 'u32[144,128]{1,0:T(1,128)}', space=vmem, size = 0x12000, scoped, tag = 'internal scratch']
  %s0 = inlined_call_operand.vmem [shape: s32[32,512], index: 0, kind: input, shape index: {}]
  %s1 = inlined_call_operand.vmem [shape: f32[32,512], index: 1, kind: input, shape index: {}]
  %s2 = inlined_call_operand.vmem [shape: f32[8,512], index: 2, kind: input, shape index: {}]
  %s3 = inlined_call_operand.vmem [shape: f32[3,512], index: 3, kind: input, shape index: {}]
  %s4 = inlined_call_operand.vmem [shape: bf16[64,128], index: 4, kind: input, shape index: {}]
  %s5 = inlined_call_operand.vmem [shape: bf16[64,8], index: 5, kind: input, shape index: {}]
  %s6 = inlined_call_operand.vmem [shape: bf16[16,64], index: 6, kind: input, shape index: {}]
  %s7 = inlined_call_operand.vmem [shape: bf16[64,16], index: 7, kind: input, shape index: {}]
  %s8 = inlined_call_operand.vmem [shape: bf16[64,16], index: 8, kind: input, shape index: {}]
  %s9 = inlined_call_operand.vmem [shape: bf16[64,64], index: 9, kind: input, shape index: {}]
  %s10 = inlined_call_operand.vmem [shape: bf16[3,64], index: 10, kind: input, shape index: {}]
  %s11 = inlined_call_operand.vmem [shape: f32[4,512], index: 11, kind: output, shape index: {}]
  %s12 = sld [smem:[#allocation0]]
  $region153: #{ngp_forward.1} parent=0
    _
  %s14 = ssub.s32 1, %s12
  %s15 = scalar_select 0, %s14, %s12
  $region1: #{ngp_forward.1} parent=0
    #allocation2 [shape = 'u8[32768]{0}', space=vmem, size = 0x8000, scoped, tag = 'input window, operand 0']
    #allocation3 [shape = 'u8[32768]{0}', space=vmem, size = 0x8000, scoped, tag = 'input window, operand 1']
    loop: start=0, step=1, limit=6
    $region2: #{ngp_forward.1} parent=1 // loop_pre_header
      _
    $region3: #{ngp_forward.1} parent=1 // loop_header
      %s17 = sphi 0, %s21
      %p18 = scmp.ge.s32.totalorder %s17, 6
      %s27 = sphi 0, %s29
      %s30 = sphi 0, %s27
      %s31 = sphi 0, %s30
      %s47 = sphi 0, %s31
      %s53 = sphi 0, %s55
      %s56 = sphi 0, %s53
      %s57 = sphi 0, %s56
      %s73 = sphi 0, %s57
      %s79 = sphi 0, %s81
      %s82 = sphi 0, %s79
      %s83 = sphi 0, %s82
      %s99 = sphi 0, %s83
      %s105 = sphi 0, %s107
      %s108 = sphi 0, %s105
      %s109 = sphi 0, %s108
      %s125 = sphi 0, %s109
      %s129 = sphi 0, %s129
      %s131 = sphi 0, %s129
      %s132 = sphi 0, %s131
      %s146 = sphi 0, %s132
      %s150 = sphi 0, %s150
      %s152 = sphi 0, %s150
      %s153 = sphi 0, %s152
      %s167 = sphi 0, %s153
      %s171 = sphi 0, %s171
      %s173 = sphi 0, %s171
      %s174 = sphi 0, %s173
      %s188 = sphi 0, %s174
      %s192 = sphi 0, %s192
      %s194 = sphi 0, %s192
      %s195 = sphi 0, %s194
      %s209 = sphi 0, %s195
      %s213 = sphi 0, %s213
      %s215 = sphi 0, %s213
      %s216 = sphi 0, %s215
      %s230 = sphi 0, %s216
      %s234 = sphi 0, %s234
      %s236 = sphi 0, %s234
      %s237 = sphi 0, %s236
      %s251 = sphi 0, %s237
      %s255 = sphi 0, %s255
      %s257 = sphi 0, %s255
      %s258 = sphi 0, %s257
      %s272 = sphi 0, %s258
      %s278 = sphi 0, %s280
      %s281 = sphi 0, %s278
      %s282 = sphi 0, %s281
      %s298 = sphi 0, %s282
    $region4: #{ngp_forward.1} parent=1 // loop_header_branch
      %20 = sbr.rel (%p18) target = $region8
    $region5: #{ngp_forward.1} parent=1 // loop_body
      %s22 = ssub.s32 %s17, 1
      %s23 = ssub.s32 %s17, 2
      %s24 = sadd.s32 %s17, 1
      %s25 = ssub.s32 %s17, %s24
      %p26 = scmp.eq.s32.totalorder %s25, 0
      %s28 = sadd.s32 %s27, 1
      %s29 = scalar_select %p26, %s27, %s28
      %p32 = pneg %p26
      %p33 = scmp.eq.s32.totalorder %s17, 3
      %p34 = por %p32, %p33
      %p35 = scmp.ne.s32.totalorder %s27, %s30
      %p36 = scmp.eq.s32.totalorder %s17, 0
      %p37 = por %p35, %p36
      %p38 = scmp.ne.s32.totalorder %s27, %s30
      %p39 = scmp.eq.s32.totalorder %s22, 3
      %p40 = por %p38, %p39
      %p41 = scmp.ne.s32.totalorder %s30, %s31
      %p42 = scmp.eq.s32.totalorder %s22, 0
      %p43 = por %p41, %p42
      %p44 = scmp.ne.s32.totalorder %s30, %s31
      %p45 = scmp.eq.s32.totalorder %s23, 3
      %p46 = por %p44, %p45
      %p48 = scmp.ne.s32.totalorder %s31, %s47
      %p49 = scmp.eq.s32.totalorder %s23, 0
      %p50 = por %p48, %p49
      %s51 = ssub.s32 %s17, %s24
      %p52 = scmp.eq.s32.totalorder %s51, 0
      %s54 = sadd.s32 %s53, 1
      %s55 = scalar_select %p52, %s53, %s54
      %p58 = pneg %p52
      %p59 = scmp.eq.s32.totalorder %s17, 3
      %p60 = por %p58, %p59
      %p61 = scmp.ne.s32.totalorder %s53, %s56
      %p62 = scmp.eq.s32.totalorder %s17, 0
      %p63 = por %p61, %p62
      %p64 = scmp.ne.s32.totalorder %s53, %s56
      %p65 = scmp.eq.s32.totalorder %s22, 3
      %p66 = por %p64, %p65
      %p67 = scmp.ne.s32.totalorder %s56, %s57
      %p68 = scmp.eq.s32.totalorder %s22, 0
      %p69 = por %p67, %p68
      %p70 = scmp.ne.s32.totalorder %s56, %s57
      %p71 = scmp.eq.s32.totalorder %s23, 3
      %p72 = por %p70, %p71
      %p74 = scmp.ne.s32.totalorder %s57, %s73
      %p75 = scmp.eq.s32.totalorder %s23, 0
      %p76 = por %p74, %p75
      %s77 = ssub.s32 %s17, %s24
      %p78 = scmp.eq.s32.totalorder %s77, 0
      %s80 = sadd.s32 %s79, 1
      %s81 = scalar_select %p78, %s79, %s80
      %p84 = pneg %p78
      %p85 = scmp.eq.s32.totalorder %s17, 3
      %p86 = por %p84, %p85
      %p87 = scmp.ne.s32.totalorder %s79, %s82
      %p88 = scmp.eq.s32.totalorder %s17, 0
      %p89 = por %p87, %p88
      %p90 = scmp.ne.s32.totalorder %s79, %s82
      %p91 = scmp.eq.s32.totalorder %s22, 3
      %p92 = por %p90, %p91
      %p93 = scmp.ne.s32.totalorder %s82, %s83
      %p94 = scmp.eq.s32.totalorder %s22, 0
      %p95 = por %p93, %p94
      %p96 = scmp.ne.s32.totalorder %s82, %s83
      %p97 = scmp.eq.s32.totalorder %s23, 3
      %p98 = por %p96, %p97
      %p100 = scmp.ne.s32.totalorder %s83, %s99
      %p101 = scmp.eq.s32.totalorder %s23, 0
      %p102 = por %p100, %p101
      %s103 = ssub.s32 %s17, %s24
      %p104 = scmp.eq.s32.totalorder %s103, 0
      %s106 = sadd.s32 %s105, 1
      %s107 = scalar_select %p104, %s105, %s106
      %p110 = pneg %p104
      %p111 = scmp.eq.s32.totalorder %s17, 3
      %p112 = por %p110, %p111
      %p113 = scmp.ne.s32.totalorder %s105, %s108
      %p114 = scmp.eq.s32.totalorder %s17, 0
      %p115 = por %p113, %p114
      %p116 = scmp.ne.s32.totalorder %s105, %s108
      %p117 = scmp.eq.s32.totalorder %s22, 3
      %p118 = por %p116, %p117
      %p119 = scmp.ne.s32.totalorder %s108, %s109
      %p120 = scmp.eq.s32.totalorder %s22, 0
      %p121 = por %p119, %p120
      %p122 = scmp.ne.s32.totalorder %s108, %s109
      %p123 = scmp.eq.s32.totalorder %s23, 3
      %p124 = por %p122, %p123
      %p126 = scmp.ne.s32.totalorder %s109, %s125
      %p127 = scmp.eq.s32.totalorder %s23, 0
      %p128 = por %p126, %p127
      %s130 = sadd.s32 %s129, 1
      %p133 = scmp.eq.s32.totalorder %s17, 3
      %p134 = scmp.ne.s32.totalorder %s129, %s131
      %p135 = scmp.eq.s32.totalorder %s17, 0
      %p136 = por %p134, %p135
      %p137 = scmp.ne.s32.totalorder %s129, %s131
      %p138 = scmp.eq.s32.totalorder %s22, 3
      %p139 = por %p137, %p138
      %p140 = scmp.ne.s32.totalorder %s131, %s132
      %p141 = scmp.eq.s32.totalorder %s22, 0
      %p142 = por %p140, %p141
      %p143 = scmp.ne.s32.totalorder %s131, %s132
      %p144 = scmp.eq.s32.totalorder %s23, 3
      %p145 = por %p143, %p144
      %p147 = scmp.ne.s32.totalorder %s132, %s146
      %p148 = scmp.eq.s32.totalorder %s23, 0
      %p149 = por %p147, %p148
      %s151 = sadd.s32 %s150, 1
      %p154 = scmp.eq.s32.totalorder %s17, 3
      %p155 = scmp.ne.s32.totalorder %s150, %s152
      %p156 = scmp.eq.s32.totalorder %s17, 0
      %p157 = por %p155, %p156
      %p158 = scmp.ne.s32.totalorder %s150, %s152
      %p159 = scmp.eq.s32.totalorder %s22, 3
      %p160 = por %p158, %p159
      %p161 = scmp.ne.s32.totalorder %s152, %s153
      %p162 = scmp.eq.s32.totalorder %s22, 0
      %p163 = por %p161, %p162
      %p164 = scmp.ne.s32.totalorder %s152, %s153
      %p165 = scmp.eq.s32.totalorder %s23, 3
      %p166 = por %p164, %p165
      %p168 = scmp.ne.s32.totalorder %s153, %s167
      %p169 = scmp.eq.s32.totalorder %s23, 0
      %p170 = por %p168, %p169
      %s172 = sadd.s32 %s171, 1
      %p175 = scmp.eq.s32.totalorder %s17, 3
      %p176 = scmp.ne.s32.totalorder %s171, %s173
      %p177 = scmp.eq.s32.totalorder %s17, 0
      %p178 = por %p176, %p177
      %p179 = scmp.ne.s32.totalorder %s171, %s173
      %p180 = scmp.eq.s32.totalorder %s22, 3
      %p181 = por %p179, %p180
      %p182 = scmp.ne.s32.totalorder %s173, %s174
      %p183 = scmp.eq.s32.totalorder %s22, 0
      %p184 = por %p182, %p183
      %p185 = scmp.ne.s32.totalorder %s173, %s174
      %p186 = scmp.eq.s32.totalorder %s23, 3
      %p187 = por %p185, %p186
      %p189 = scmp.ne.s32.totalorder %s174, %s188
      %p190 = scmp.eq.s32.totalorder %s23, 0
      %p191 = por %p189, %p190
      %s193 = sadd.s32 %s192, 1
      %p196 = scmp.eq.s32.totalorder %s17, 3
      %p197 = scmp.ne.s32.totalorder %s192, %s194
      %p198 = scmp.eq.s32.totalorder %s17, 0
      %p199 = por %p197, %p198
      %p200 = scmp.ne.s32.totalorder %s192, %s194
      %p201 = scmp.eq.s32.totalorder %s22, 3
      %p202 = por %p200, %p201
      %p203 = scmp.ne.s32.totalorder %s194, %s195
      %p204 = scmp.eq.s32.totalorder %s22, 0
      %p205 = por %p203, %p204
      %p206 = scmp.ne.s32.totalorder %s194, %s195
      %p207 = scmp.eq.s32.totalorder %s23, 3
      %p208 = por %p206, %p207
      %p210 = scmp.ne.s32.totalorder %s195, %s209
      %p211 = scmp.eq.s32.totalorder %s23, 0
      %p212 = por %p210, %p211
      %s214 = sadd.s32 %s213, 1
      %p217 = scmp.eq.s32.totalorder %s17, 3
      %p218 = scmp.ne.s32.totalorder %s213, %s215
      %p219 = scmp.eq.s32.totalorder %s17, 0
      %p220 = por %p218, %p219
      %p221 = scmp.ne.s32.totalorder %s213, %s215
      %p222 = scmp.eq.s32.totalorder %s22, 3
      %p223 = por %p221, %p222
      %p224 = scmp.ne.s32.totalorder %s215, %s216
      %p225 = scmp.eq.s32.totalorder %s22, 0
      %p226 = por %p224, %p225
      %p227 = scmp.ne.s32.totalorder %s215, %s216
      %p228 = scmp.eq.s32.totalorder %s23, 3
      %p229 = por %p227, %p228
      %p231 = scmp.ne.s32.totalorder %s216, %s230
      %p232 = scmp.eq.s32.totalorder %s23, 0
      %p233 = por %p231, %p232
      %s235 = sadd.s32 %s234, 1
      %p238 = scmp.eq.s32.totalorder %s17, 3
      %p239 = scmp.ne.s32.totalorder %s234, %s236
      %p240 = scmp.eq.s32.totalorder %s17, 0
      %p241 = por %p239, %p240
      %p242 = scmp.ne.s32.totalorder %s234, %s236
      %p243 = scmp.eq.s32.totalorder %s22, 3
      %p244 = por %p242, %p243
      %p245 = scmp.ne.s32.totalorder %s236, %s237
      %p246 = scmp.eq.s32.totalorder %s22, 0
      %p247 = por %p245, %p246
      %p248 = scmp.ne.s32.totalorder %s236, %s237
      %p249 = scmp.eq.s32.totalorder %s23, 3
      %p250 = por %p248, %p249
      %p252 = scmp.ne.s32.totalorder %s237, %s251
      %p253 = scmp.eq.s32.totalorder %s23, 0
      %p254 = por %p252, %p253
      %s256 = sadd.s32 %s255, 1
      %p259 = scmp.eq.s32.totalorder %s17, 3
      %p260 = scmp.ne.s32.totalorder %s255, %s257
      %p261 = scmp.eq.s32.totalorder %s17, 0
      %p262 = por %p260, %p261
      %p263 = scmp.ne.s32.totalorder %s255, %s257
      %p264 = scmp.eq.s32.totalorder %s22, 3
      %p265 = por %p263, %p264
      %p266 = scmp.ne.s32.totalorder %s257, %s258
      %p267 = scmp.eq.s32.totalorder %s22, 0
      %p268 = por %p266, %p267
      %p269 = scmp.ne.s32.totalorder %s257, %s258
      %p270 = scmp.eq.s32.totalorder %s23, 3
      %p271 = por %p269, %p270
      %p273 = scmp.ne.s32.totalorder %s258, %s272
      %p274 = scmp.eq.s32.totalorder %s23, 0
      %p275 = por %p273, %p274
      %s276 = ssub.s32 %s17, %s24
      %p277 = scmp.eq.s32.totalorder %s276, 0
      %s279 = sadd.s32 %s278, 1
      %s280 = scalar_select %p277, %s278, %s279
      %p283 = pneg %p277
      %p284 = scmp.eq.s32.totalorder %s17, 3
      %p285 = por %p283, %p284
      %p286 = scmp.ne.s32.totalorder %s278, %s281
      %p287 = scmp.eq.s32.totalorder %s17, 0
      %p288 = por %p286, %p287
      %p289 = scmp.ne.s32.totalorder %s278, %s281
      %p290 = scmp.eq.s32.totalorder %s22, 3
      %p291 = por %p289, %p290
      %p292 = scmp.ne.s32.totalorder %s281, %s282
      %p293 = scmp.eq.s32.totalorder %s22, 0
      %p294 = por %p292, %p293
      %p295 = scmp.ne.s32.totalorder %s281, %s282
      %p296 = scmp.eq.s32.totalorder %s23, 3
      %p297 = por %p295, %p296
      %p299 = scmp.ne.s32.totalorder %s282, %s298
      %p300 = scmp.eq.s32.totalorder %s23, 0
      %p301 = por %p299, %p300
      %p302 = scmp.le.s32.totalorder 1, %s17
      %p303 = scmp.lt.s32.totalorder %s17, 5
      %p304 = pnand %p302, %p303
      %p305 = pneg %p304
      // Predicated region
      $region9: #{ngp_forward.1} parent=5 // pred_check
        _
      $region10: #{ngp_forward.1} parent=5 // pred_check_branch
        %307 = sbr.rel (%p304) target = $region12
      $region11: #{ngp_forward.1} parent=5 // pred_region
        %s308 = ssub.s32 %s17, 1
        // Predicated region
        $region13: #{ngp_forward.1} parent=11 // pred_check
          %p309 = pneg %p142
        $region14: #{ngp_forward.1} parent=11 // pred_check_branch
          %311 = sbr.rel (%p309) target = $region16
        $region15: #{ngp_forward.1} parent=11 // pred_region
          _
        $region16: #{ngp_forward.1} parent=11 // pred_fallthru
          _
        // Predicated region
        $region17: #{ngp_forward.1} parent=11 // pred_check
          %p312 = pneg %p163
        $region18: #{ngp_forward.1} parent=11 // pred_check_branch
          %314 = sbr.rel (%p312) target = $region20
        $region19: #{ngp_forward.1} parent=11 // pred_region
          _
        $region20: #{ngp_forward.1} parent=11 // pred_fallthru
          _
        // Predicated region
        $region21: #{ngp_forward.1} parent=11 // pred_check
          %p315 = pneg %p184
        $region22: #{ngp_forward.1} parent=11 // pred_check_branch
          %317 = sbr.rel (%p315) target = $region24
        $region23: #{ngp_forward.1} parent=11 // pred_region
          _
        $region24: #{ngp_forward.1} parent=11 // pred_fallthru
          _
        // Predicated region
        $region25: #{ngp_forward.1} parent=11 // pred_check
          %p318 = pneg %p205
        $region26: #{ngp_forward.1} parent=11 // pred_check_branch
          %320 = sbr.rel (%p318) target = $region28
        $region27: #{ngp_forward.1} parent=11 // pred_region
          _
        $region28: #{ngp_forward.1} parent=11 // pred_fallthru
          _
        // Predicated region
        $region29: #{ngp_forward.1} parent=11 // pred_check
          %p321 = pneg %p226
        $region30: #{ngp_forward.1} parent=11 // pred_check_branch
          %323 = sbr.rel (%p321) target = $region32
        $region31: #{ngp_forward.1} parent=11 // pred_region
          _
        $region32: #{ngp_forward.1} parent=11 // pred_fallthru
          _
        // Predicated region
        $region33: #{ngp_forward.1} parent=11 // pred_check
          %p324 = pneg %p247
        $region34: #{ngp_forward.1} parent=11 // pred_check_branch
          %326 = sbr.rel (%p324) target = $region36
        $region35: #{ngp_forward.1} parent=11 // pred_region
          _
        $region36: #{ngp_forward.1} parent=11 // pred_fallthru
          _
        // Predicated region
        $region37: #{ngp_forward.1} parent=11 // pred_check
          %p327 = pneg %p268
        $region38: #{ngp_forward.1} parent=11 // pred_check_branch
          %329 = sbr.rel (%p327) target = $region40
        $region39: #{ngp_forward.1} parent=11 // pred_region
          _
        $region40: #{ngp_forward.1} parent=11 // pred_fallthru
          _
      $region12: #{ngp_forward.1} parent=5 // pred_fallthru
        _
      %p330 = scmp.lt.s32.totalorder %s17, 4
      // Predicated region
      $region41: #{ngp_forward.1} parent=5 // pred_check
        %p331 = pneg %p330
      $region42: #{ngp_forward.1} parent=5 // pred_check_branch
        %333 = sbr.rel (%p331) target = $region44
      $region43: #{ngp_forward.1} parent=5 // pred_region
        // Predicated region
        $region45: #{ngp_forward.1} parent=43 // pred_check
          %p334 = pneg %p37
        $region46: #{ngp_forward.1} parent=43 // pred_check_branch
          %336 = sbr.rel (%p334) target = $region48
        $region47: #{ngp_forward.1} parent=43 // pred_region
          %s337 = sand.u32 %s27, 1
          %s338 = sand.u32 %s27, 1
          %s339 = smul.addr %s338, 32
          %s340 = scalar_lea.vmem [#allocation2], %s339
          %s341 = smul.addr %s17, 8
          %s342 = scalar_lea.vmem %s0, %s341
          // Predicated region
          $region49: #{ngp_forward.1} parent=47 // pred_check
            _
          $region50: #{ngp_forward.1} parent=47 // pred_check_branch
            %344 = sbr.rel (0) target = $region52
          $region51: #{ngp_forward.1} parent=47 // pred_region
            // Predicated region
            $region53: #{ngp_forward.1} parent=51 // pred_check
              _
            $region54: #{ngp_forward.1} parent=51 // pred_check_branch
              %346 = sbr.rel (0) target = $region56
            $region55: #{ngp_forward.1} parent=51 // pred_region
              // Predicated region
              $region68: #{ngp_forward.1} parent=55 // pred_check
                _
              $region69: #{ngp_forward.1} parent=55 // pred_check_branch
                %368 = sbr.rel (0) target = $region71
              $region70: #{ngp_forward.1} parent=55 // pred_region
                loop: start=0, step=1, limit=1
                $region72: #{ngp_forward.1} parent=70 // loop_pre_header
                  _
                $region73: #{ngp_forward.1} parent=70 // loop_header
                  %s370 = sphi 0, %s374
                  %p371 = scmp.ge.s32.totalorder %s370, 1
                  %s375 = sphi %s342, %s342
                  %s376 = sphi %s340, %s340
                $region74: #{ngp_forward.1} parent=70 // loop_header_branch
                  %373 = sbr.rel (%p371) target = $region78
                $region75: #{ngp_forward.1} parent=70 // loop_body
                  %v377 = vld [vmem:[%s375] sm:$0xff]
                  %378 = vst [vmem:[%s376] sm:$0xff] %v377
                  %v379 = vld [vmem:[%s375 + $0x20] sm:$0xff]
                  %380 = vst [vmem:[%s376 + $0x8] sm:$0xff] %v379
                  %v381 = vld [vmem:[%s375 + $0x40] sm:$0xff]
                  %382 = vst [vmem:[%s376 + $0x10] sm:$0xff] %v381
                  %v383 = vld [vmem:[%s375 + $0x60] sm:$0xff]
                  %384 = vst [vmem:[%s376 + $0x18] sm:$0xff] %v383
                $region76: #{ngp_forward.1} parent=70 // loop_footer
                  %s374 = sadd.s32 1, %s370
                $region77: #{ngp_forward.1} parent=70 // loop_footer_branch
                  %369 = sbr.rel target = $region73
                $region78: #{ngp_forward.1} parent=70 // loop_exit
                  _
              $region71: #{ngp_forward.1} parent=55 // pred_fallthru
                _
              // Predicated region
              $region79: #{ngp_forward.1} parent=55 // pred_check
                _
              $region80: #{ngp_forward.1} parent=55 // pred_check_branch
                %386 = sbr.rel target = $region82
              $region81: #{ngp_forward.1} parent=55 // pred_region
                _
              $region82: #{ngp_forward.1} parent=55 // pred_fallthru
                _
            $region56: #{ngp_forward.1} parent=51 // pred_fallthru
              _
            // Predicated region
            $region57: #{ngp_forward.1} parent=51 // pred_check
              _
            $region58: #{ngp_forward.1} parent=51 // pred_check_branch
              %348 = sbr.rel target = $region60
            $region59: #{ngp_forward.1} parent=51 // pred_region
              %s350 = ssub.s32 256, 1
              loop: start=0, step=1, limit=1
              $region61: #{ngp_forward.1} parent=59 // loop_pre_header
                _
              $region62: #{ngp_forward.1} parent=59 // loop_header
                %s352 = sphi 0, %s356
                %p353 = scmp.ge.s32.totalorder %s352, 1
                %s357 = sphi %s342, %s342
                %s358 = sphi %s340, %s340
              $region63: #{ngp_forward.1} parent=59 // loop_header_branch
                %355 = sbr.rel (%p353) target = $region67
              $region64: #{ngp_forward.1} parent=59 // loop_body
                %v359 = vld [vmem:[%s357] sm:%s350]
                %360 = vst [vmem:[%s358] sm:%s350] %v359
                %v361 = vld [vmem:[%s357 + $0x20] sm:%s350]
                %362 = vst [vmem:[%s358 + $0x8] sm:%s350] %v361
                %v363 = vld [vmem:[%s357 + $0x40] sm:%s350]
                %364 = vst [vmem:[%s358 + $0x10] sm:%s350] %v363
                %v365 = vld [vmem:[%s357 + $0x60] sm:%s350]
                %366 = vst [vmem:[%s358 + $0x18] sm:%s350] %v365
              $region65: #{ngp_forward.1} parent=59 // loop_footer
                %s356 = sadd.s32 1, %s352
              $region66: #{ngp_forward.1} parent=59 // loop_footer_branch
                %351 = sbr.rel target = $region62
              $region67: #{ngp_forward.1} parent=59 // loop_exit
                _
            $region60: #{ngp_forward.1} parent=51 // pred_fallthru
              _
          $region52: #{ngp_forward.1} parent=47 // pred_fallthru
            _
          %387 = vnop
        $region48: #{ngp_forward.1} parent=43 // pred_fallthru
          _
        // Predicated region
        $region83: #{ngp_forward.1} parent=43 // pred_check
          %p388 = pneg %p63
        $region84: #{ngp_forward.1} parent=43 // pred_check_branch
          %390 = sbr.rel (%p388) target = $region86
        $region85: #{ngp_forward.1} parent=43 // pred_region
          %s391 = sand.u32 %s53, 1
          %s392 = sand.u32 %s53, 1
          %s393 = smul.addr %s392, 32
          %s394 = scalar_lea.vmem [#allocation3], %s393
          %s395 = smul.addr %s17, 8
          %s396 = scalar_lea.vmem %s1, %s395
          // Predicated region
          $region87: #{ngp_forward.1} parent=85 // pred_check
            _
          $region88: #{ngp_forward.1} parent=85 // pred_check_branch
            %398 = sbr.rel (0) target = $region90
          $region89: #{ngp_forward.1} parent=85 // pred_region
            // Predicated region
            $region91: #{ngp_forward.1} parent=89 // pred_check
              _
            $region92: #{ngp_forward.1} parent=89 // pred_check_branch
              %400 = sbr.rel (0) target = $region94
            $region93: #{ngp_forward.1} parent=89 // pred_region
              // Predicated region
              $region106: #{ngp_forward.1} parent=93 // pred_check
                _
              $region107: #{ngp_forward.1} parent=93 // pred_check_branch
                %422 = sbr.rel (0) target = $region109
              $region108: #{ngp_forward.1} parent=93 // pred_region
                loop: start=0, step=1, limit=1
                $region110: #{ngp_forward.1} parent=108 // loop_pre_header
                  _
                $region111: #{ngp_forward.1} parent=108 // loop_header
                  %s424 = sphi 0, %s428
                  %p425 = scmp.ge.s32.totalorder %s424, 1
                  %s429 = sphi %s396, %s396
                  %s430 = sphi %s394, %s394
                $region112: #{ngp_forward.1} parent=108 // loop_header_branch
                  %427 = sbr.rel (%p425) target = $region116
                $region113: #{ngp_forward.1} parent=108 // loop_body
                  %v431 = vld [vmem:[%s429] sm:$0xff]
                  %432 = vst [vmem:[%s430] sm:$0xff] %v431
                  %v433 = vld [vmem:[%s429 + $0x20] sm:$0xff]
                  %434 = vst [vmem:[%s430 + $0x8] sm:$0xff] %v433
                  %v435 = vld [vmem:[%s429 + $0x40] sm:$0xff]
                  %436 = vst [vmem:[%s430 + $0x10] sm:$0xff] %v435
                  %v437 = vld [vmem:[%s429 + $0x60] sm:$0xff]
                  %438 = vst [vmem:[%s430 + $0x18] sm:$0xff] %v437
                $region114: #{ngp_forward.1} parent=108 // loop_footer
                  %s428 = sadd.s32 1, %s424
                $region115: #{ngp_forward.1} parent=108 // loop_footer_branch
                  %423 = sbr.rel target = $region111
                $region116: #{ngp_forward.1} parent=108 // loop_exit
                  _
              $region109: #{ngp_forward.1} parent=93 // pred_fallthru
                _
              // Predicated region
              $region117: #{ngp_forward.1} parent=93 // pred_check
                _
              $region118: #{ngp_forward.1} parent=93 // pred_check_branch
                %440 = sbr.rel target = $region120
              $region119: #{ngp_forward.1} parent=93 // pred_region
                _
              $region120: #{ngp_forward.1} parent=93 // pred_fallthru
                _
            $region94: #{ngp_forward.1} parent=89 // pred_fallthru
              _
            // Predicated region
            $region95: #{ngp_forward.1} parent=89 // pred_check
              _
            $region96: #{ngp_forward.1} parent=89 // pred_check_branch
              %402 = sbr.rel target = $region98
            $region97: #{ngp_forward.1} parent=89 // pred_region
              %s404 = ssub.s32 256, 1
              loop: start=0, step=1, limit=1
              $region99: #{ngp_forward.1} parent=97 // loop_pre_header
                _
              $region100: #{ngp_forward.1} parent=97 // loop_header
                %s406 = sphi 0, %s410
                %p407 = scmp.ge.s32.totalorder %s406, 1
                %s411 = sphi %s396, %s396
                %s412 = sphi %s394, %s394
              $region101: #{ngp_forward.1} parent=97 // loop_header_branch
                %409 = sbr.rel (%p407) target = $region105
              $region102: #{ngp_forward.1} parent=97 // loop_body
                %v413 = vld [vmem:[%s411] sm:%s404]
                %414 = vst [vmem:[%s412] sm:%s404] %v413
                %v415 = vld [vmem:[%s411 + $0x20] sm:%s404]
                %416 = vst [vmem:[%s412 + $0x8] sm:%s404] %v415
                %v417 = vld [vmem:[%s411 + $0x40] sm:%s404]
                %418 = vst [vmem:[%s412 + $0x10] sm:%s404] %v417
                %v419 = vld [vmem:[%s411 + $0x60] sm:%s404]
                %420 = vst [vmem:[%s412 + $0x18] sm:%s404] %v419
              $region103: #{ngp_forward.1} parent=97 // loop_footer
                %s410 = sadd.s32 1, %s406
              $region104: #{ngp_forward.1} parent=97 // loop_footer_branch
                %405 = sbr.rel target = $region100
              $region105: #{ngp_forward.1} parent=97 // loop_exit
                _
            $region98: #{ngp_forward.1} parent=89 // pred_fallthru
              _
          $region90: #{ngp_forward.1} parent=85 // pred_fallthru
            _
          %441 = vnop
        $region86: #{ngp_forward.1} parent=43 // pred_fallthru
          _
        // Predicated region
        $region121: #{ngp_forward.1} parent=43 // pred_check
          %p442 = pneg %p89
        $region122: #{ngp_forward.1} parent=43 // pred_check_branch
          %444 = sbr.rel (%p442) target = $region124
        $region123: #{ngp_forward.1} parent=43 // pred_region
          %p445 = scmp.lt.s32.totalorder %s17, 3
          %s446 = scalar_select %p445, %s17, 3
          %s447 = smul.addr %s446, 8
          %s448 = scalar_lea.vmem %s2, %s447
        $region124: #{ngp_forward.1} parent=43 // pred_fallthru
          _
        // Predicated region
        $region125: #{ngp_forward.1} parent=43 // pred_check
          %p449 = pneg %p115
        $region126: #{ngp_forward.1} parent=43 // pred_check_branch
          %451 = sbr.rel (%p449) target = $region128
        $region127: #{ngp_forward.1} parent=43 // pred_region
          %p452 = scmp.lt.s32.totalorder %s17, 3
          %s453 = scalar_select %p452, %s17, 3
          %s454 = smul.addr %s453, 4
          %s455 = scalar_lea.vmem %s3, %s454
        $region128: #{ngp_forward.1} parent=43 // pred_fallthru
          _
      $region44: #{ngp_forward.1} parent=5 // pred_fallthru
        _
      %p456 = scmp.le.s32.totalorder 1, %s17
      %p457 = scmp.lt.s32.totalorder %s17, 5
      %p458 = pnand %p456, %p457
      %p459 = pneg %p458
      // Predicated region
      $region129: #{ngp_forward.1} parent=5 // pred_check
        _
      $region130: #{ngp_forward.1} parent=5 // pred_check_branch
        %461 = sbr.rel (%p458) target = $region132
      $region131: #{ngp_forward.1} parent=5 // pred_region
        %s462 = ssub.s32 %s17, 1
        %s463 = sand.u32 %s30, 1
        %s464 = sand.u32 %s30, 1
        %s465 = smul.addr %s464, 32
        %s466 = scalar_lea.vmem [#allocation2], %s465
        // Predicated region
        $region133: #{ngp_forward.1} parent=131 // pred_check
          %p467 = pneg %p43
        $region134: #{ngp_forward.1} parent=131 // pred_check_branch
          %469 = sbr.rel (%p467) target = $region136
        $region135: #{ngp_forward.1} parent=131 // pred_region
          _
        $region136: #{ngp_forward.1} parent=131 // pred_fallthru
          _
        %s470 = sand.u32 %s56, 1
        %s471 = sand.u32 %s56, 1
        %s472 = smul.addr %s471, 32
        %s473 = scalar_lea.vmem [#allocation3], %s472
        // Predicated region
        $region137: #{ngp_forward.1} parent=131 // pred_check
          %p474 = pneg %p69
        $region138: #{ngp_forward.1} parent=131 // pred_check_branch
          %476 = sbr.rel (%p474) target = $region140
        $region139: #{ngp_forward.1} parent=131 // pred_region
          _
        $region140: #{ngp_forward.1} parent=131 // pred_fallthru
          _
        %s477 = sand.u32 %s30, 1
        %s478 = sand.u32 %s30, 1
        %s479 = smul.addr %s478, 32
        %s480 = scalar_lea.vmem [#allocation2], %s479
        %p481 = pneg %p43
        %p482 = pneg %p40
        %s483 = sand.u32 %s56, 1
        %s484 = sand.u32 %s56, 1
        %s485 = smul.addr %s484, 32
        %s486 = scalar_lea.vmem [#allocation3], %s485
        %p487 = pneg %p69
        %p488 = pneg %p66
        %p489 = scmp.lt.s32.totalorder %s22, 3
        %s490 = scalar_select %p489, %s22, 3
        %s491 = smul.addr %s490, 8
        %s492 = scalar_lea.vmem %s2, %s491
        %p493 = pneg %p95
        %p494 = pneg %p92
        %p495 = scmp.lt.s32.totalorder %s22, 3
        %s496 = scalar_select %p495, %s22, 3
        %s497 = smul.addr %s496, 4
        %s498 = scalar_lea.vmem %s3, %s497
        %p499 = pneg %p121
        %p500 = pneg %p118
        %p501 = pneg %p142
        %p502 = pneg %p139
        %p503 = pneg %p163
        %p504 = pneg %p160
        %p505 = pneg %p184
        %p506 = pneg %p181
        %p507 = pneg %p205
        %p508 = pneg %p202
        %p509 = pneg %p226
        %p510 = pneg %p223
        %p511 = pneg %p247
        %p512 = pneg %p244
        %p513 = pneg %p268
        %p514 = pneg %p265
        %p515 = pneg %p294
        %p516 = pneg %p291
        %p517 = scmp.lt.s32.totalorder %s22, 3
        %s518 = scalar_select %p517, %s22, 3
        %s519 = smul.addr %s518, 4
        %s520 = scalar_lea.vmem %s11, %s519
        %p521 = scmp.lt.s32.totalorder %s22, 3
        %s522 = scalar_select %p521, %s22, 3
        %s523 = smul.addr %s522, 8
        %s524 = scalar_lea.vmem %s2, %s523
        %p525 = scmp.lt.s32.totalorder %s22, 3
        %s526 = scalar_select %p525, %s22, 3
        %s527 = smul.addr %s526, 4
        %s528 = scalar_lea.vmem %s3, %s527
        %p529 = scmp.lt.s32.totalorder %s22, 3
        %s530 = scalar_select %p529, %s22, 3
        %s531 = smul.addr %s530, 4
        %s532 = scalar_lea.vmem %s11, %s531
        %v534 = vlaneseq
        %v535 = vshrl.u32 %v534, 7
        %v536 = vadd.s32 %v535, 8
        %v537 = vadd.s32 %v535, 16
        %v538 = vadd.s32 %v535, 24
        %v539 = vadd.s32 %v535, 32
        %v540 = vadd.s32 %v535, 40
        %v541 = vadd.s32 %v535, 48
        %v542 = vadd.s32 %v535, 56
        %v543 = vadd.s32 %v535, 64
        %v544 = vadd.s32 %v535, 72
        %v545 = vadd.s32 %v535, 80
        %v546 = vadd.s32 %v535, 88
        %v547 = vadd.s32 %v535, 96
        %v548 = vadd.s32 %v535, 104
        %v549 = vadd.s32 %v535, 112
        %v550 = vadd.s32 %v535, 120
        %v551 = vand.u32 %v535, 7
        %v552 = vand.u32 %v536, 7
        %v553 = vld [vmem:[%s466] sm:$0xff]
        %v554 = vld [vmem:[%s466 + $0x8] sm:$0xff]
        %v555 = vld [vmem:[%s466 + $0x10] sm:$0xff]
        %v556 = vld [vmem:[%s466 + $0x18] sm:$0xff]
        %v557 = vld [vmem:[%s473] sm:$0xff]
        %v558 = vld [vmem:[%s473 + $0x8] sm:$0xff]
        %v559 = vld [vmem:[%s473 + $0x10] sm:$0xff]
        %v560 = vld [vmem:[%s473 + $0x18] sm:$0xff]
        %v561 = vand.u32 %v553, 127
        %v562 = vand.u32 %v554, 127
        %v563 = vand.u32 %v555, 127
        %v564 = vand.u32 %v556, 127
        %v565 = vshra.s32 %v553, 7
        %v566 = vshra.s32 %v554, 7
        %v567 = vshra.s32 %v555, 7
        %v568 = vshra.s32 %v556, 7
        %v569 = vld [vmem:[%s4] sm:$0xf]
        %v570 = vld [vmem:[%s4 + $0x4] sm:$0xf]
        %v571 = vld [vmem:[%s4 + $0x8] sm:$0xf]
        %v572 = vld [vmem:[%s4 + $0xc] sm:$0xf]
        %v573 = vld [vmem:[%s4 + $0x10] sm:$0xf]
        %v574 = vld [vmem:[%s4 + $0x14] sm:$0xf]
        %v575 = vld [vmem:[%s4 + $0x18] sm:$0xf]
        %v576 = vld [vmem:[%s4 + $0x1c] sm:$0xf]
        %v577 = vlaneseq
        %v578 = vshrl.u32 %v577, 7
        %v579 = vsub.s32 0, %v578
        %v580 = vrot.slane %v561, %v579
        %vm581 = vcmp.eq.s32.totalorder %v535, %v580
        %vm582 = vcmp.eq.s32.totalorder %v536, %v580
        %vm583 = vcmp.eq.s32.totalorder %v537, %v580
        %vm584 = vcmp.eq.s32.totalorder %v538, %v580
        %vm585 = vcmp.eq.s32.totalorder %v539, %v580
        %vm586 = vcmp.eq.s32.totalorder %v540, %v580
        %vm587 = vcmp.eq.s32.totalorder %v541, %v580
        %vm588 = vcmp.eq.s32.totalorder %v542, %v580
        %vm589 = vcmp.eq.s32.totalorder %v543, %v580
        %vm590 = vcmp.eq.s32.totalorder %v544, %v580
        %vm591 = vcmp.eq.s32.totalorder %v545, %v580
        %vm592 = vcmp.eq.s32.totalorder %v546, %v580
        %vm593 = vcmp.eq.s32.totalorder %v547, %v580
        %vm594 = vcmp.eq.s32.totalorder %v548, %v580
        %vm595 = vcmp.eq.s32.totalorder %v549, %v580
        %vm596 = vcmp.eq.s32.totalorder %v550, %v580
        %v597 = vsel %vm581, 1.0, 0.0
        %v598 = vsel %vm582, 1.0, 0.0
        %v599 = vsel %vm583, 1.0, 0.0
        %v600 = vsel %vm584, 1.0, 0.0
        %v601 = vsel %vm585, 1.0, 0.0
        %v602 = vsel %vm586, 1.0, 0.0
        %v603 = vsel %vm587, 1.0, 0.0
        %v604 = vsel %vm588, 1.0, 0.0
        %v605 = vsel %vm589, 1.0, 0.0
        %v606 = vsel %vm590, 1.0, 0.0
        %v607 = vsel %vm591, 1.0, 0.0
        %v608 = vsel %vm592, 1.0, 0.0
        %v609 = vsel %vm593, 1.0, 0.0
        %v610 = vsel %vm594, 1.0, 0.0
        %v611 = vsel %vm595, 1.0, 0.0
        %v612 = vsel %vm596, 1.0, 0.0
        %v613 = vpack.c.bf16 %v598, %v597
        %v614 = vpack.c.bf16 %v600, %v599
        %v615 = vpack.c.bf16 %v602, %v601
        %v616 = vpack.c.bf16 %v604, %v603
        %v617 = vpack.c.bf16 %v606, %v605
        %v618 = vpack.c.bf16 %v608, %v607
        %v619 = vpack.c.bf16 %v610, %v609
        %v620 = vpack.c.bf16 %v612, %v611
        %v623 = vunpack.c.l.b16 %v569
        %v624 = vunpack.c.l.b16 %v570
        %v625 = vpack.c.b16 %v624, %v623
        %627 = vmatprep.subr.bf16.mxu0 0
        %628 = vmatpush1.bf16.msra.mxu0 %v620
        %629 = vmatprep.subr.bf16.mxu0 0
        %630 = vmatpush1.bf16.msra.mxu0 %v619
        %631 = vmatprep.subr.bf16.mxu0 0
        %632 = vmatpush1.bf16.msra.mxu0 %v618
        %633 = vmatprep.subr.bf16.mxu0 0
        %634 = vmatpush1.bf16.msra.mxu0 %v617
        %635 = vmatprep.subr.bf16.mxu0 0
        %636 = vmatpush1.bf16.msra.mxu0 %v616
        %637 = vmatprep.subr.bf16.mxu0 0
        %638 = vmatpush1.bf16.msra.mxu0 %v615
        %639 = vmatprep.subr.bf16.mxu0 0
        %640 = vmatpush1.bf16.msra.mxu0 %v614
        %641 = vmatprep.subr.bf16.mxu0 0
        %642 = vmatpush1.bf16.msra.mxu0 %v613
        %643 = vmatprep.subr.bf16.mxu0 0
        %644 = vmatpush2.bf16.msra.mxu0 0
        %645 = vmatprep.subr.bf16.mxu0 0
        %646 = vmatpush2.bf16.msra.mxu0 0
        %647 = vmatprep.subr.bf16.mxu0 0
        %648 = vmatpush2.bf16.msra.mxu0 0
        %649 = vmatprep.subr.bf16.mxu0 0
        %650 = vmatpush2.bf16.msra.mxu0 0
        %651 = vmatprep.subr.bf16.mxu0 0
        %652 = vmatpush2.bf16.msra.mxu0 0
        %653 = vmatprep.subr.bf16.mxu0 0
        %654 = vmatpush2.bf16.msra.mxu0 0
        %655 = vmatprep.subr.bf16.mxu0 0
        %656 = vmatpush2.bf16.msra.mxu0 0
        %657 = vmatprep.subr.bf16.mxu0 0
        %658 = vmatpush2.bf16.msra.mxu0 0
        %659 = vmatprep.mubr.bf16.mxu0 0
        %660 = vmatmul.mubr.bf16.gmra.mxu0 %v625
        %v661 = vpop.f32.mrf.mxu0
        %v662 = vadd.f32 0.0, %v661
        %v663 = vpop.f32.mrf.mxu0
        %v664 = vpop.f32.mrf.mxu0
        %v665 = vadd.f32 0.0, %v664
        %v666 = vpop.f32.mrf.mxu0
        %667 = vdwg.mxu0
        %v668 = vlaneseq
        %v669 = vshrl.u32 %v668, 7
        %v670 = vsub.s32 0, %v669
        %v671 = vrot.slane %v565, %v670
        %vm672 = vcmp.eq.s32.totalorder %v551, %v671
        %vm673 = vcmp.eq.s32.totalorder %v552, %v671
        %v674 = vlaneseq
        %v675 = vshrl.u32 %v674, 7
        %v676 = vsub.s32 0, %v675
        %v677 = vrot.slane %v557, %v676
        %v678 = vsel %vm672, %v677, 0.0
        %v679 = vsel %vm673, %v677, 0.0
        %v680 = vmul.f32 %v662, %v678
        %v681 = vmul.f32 %v665, %v679
        %v682 = vadd.f32 %v680, 0.0
        %v683 = vadd.f32 %v681, 0.0
        %v684 = vlaneseq
        %v685 = vshrl.u32 %v684, 7
        %v686 = vsub.s32 1, %v685
        %v687 = vrot.slane %v561, %v686
        %vm688 = vcmp.eq.s32.totalorder %v535, %v687
        %vm689 = vcmp.eq.s32.totalorder %v536, %v687
        %vm690 = vcmp.eq.s32.totalorder %v537, %v687
        %vm691 = vcmp.eq.s32.totalorder %v538, %v687
        %vm692 = vcmp.eq.s32.totalorder %v539, %v687
        %vm693 = vcmp.eq.s32.totalorder %v540, %v687
        %vm694 = vcmp.eq.s32.totalorder %v541, %v687
        %vm695 = vcmp.eq.s32.totalorder %v542, %v687
        %vm696 = vcmp.eq.s32.totalorder %v543, %v687
        %vm697 = vcmp.eq.s32.totalorder %v544, %v687
        %vm698 = vcmp.eq.s32.totalorder %v545, %v687
        %vm699 = vcmp.eq.s32.totalorder %v546, %v687
        %vm700 = vcmp.eq.s32.totalorder %v547, %v687
        %vm701 = vcmp.eq.s32.totalorder %v548, %v687
        %vm702 = vcmp.eq.s32.totalorder %v549, %v687
        %vm703 = vcmp.eq.s32.totalorder %v550, %v687
        %v704 = vsel %vm688, 1.0, 0.0
        %v705 = vsel %vm689, 1.0, 0.0
        %v706 = vsel %vm690, 1.0, 0.0
        %v707 = vsel %vm691, 1.0, 0.0
        %v708 = vsel %vm692, 1.0, 0.0
        %v709 = vsel %vm693, 1.0, 0.0
        %v710 = vsel %vm694, 1.0, 0.0
        %v711 = vsel %vm695, 1.0, 0.0
        %v712 = vsel %vm696, 1.0, 0.0
        %v713 = vsel %vm697, 1.0, 0.0
        %v714 = vsel %vm698, 1.0, 0.0
        %v715 = vsel %vm699, 1.0, 0.0
        %v716 = vsel %vm700, 1.0, 0.0
        %v717 = vsel %vm701, 1.0, 0.0
        %v718 = vsel %vm702, 1.0, 0.0
        %v719 = vsel %vm703, 1.0, 0.0
        %v720 = vpack.c.bf16 %v705, %v704
        %v721 = vpack.c.bf16 %v707, %v706
        %v722 = vpack.c.bf16 %v709, %v708
        %v723 = vpack.c.bf16 %v711, %v710
        %v724 = vpack.c.bf16 %v713, %v712
        %v725 = vpack.c.bf16 %v715, %v714
        %v726 = vpack.c.bf16 %v717, %v716
        %v727 = vpack.c.bf16 %v719, %v718
        %728 = vmatprep.subr.bf16.mxu0 0
        %729 = vmatpush1.bf16.msra.mxu0 %v727
        %730 = vmatprep.subr.bf16.mxu0 0
        %731 = vmatpush1.bf16.msra.mxu0 %v726
        %732 = vmatprep.subr.bf16.mxu0 0
        %733 = vmatpush1.bf16.msra.mxu0 %v725
        %734 = vmatprep.subr.bf16.mxu0 0
        %735 = vmatpush1.bf16.msra.mxu0 %v724
        %736 = vmatprep.subr.bf16.mxu0 0
        %737 = vmatpush1.bf16.msra.mxu0 %v723
        %738 = vmatprep.subr.bf16.mxu0 0
        %739 = vmatpush1.bf16.msra.mxu0 %v722
        %740 = vmatprep.subr.bf16.mxu0 0
        %741 = vmatpush1.bf16.msra.mxu0 %v721
        %742 = vmatprep.subr.bf16.mxu0 0
        %743 = vmatpush1.bf16.msra.mxu0 %v720
        %744 = vmatprep.subr.bf16.mxu0 0
        %745 = vmatpush2.bf16.msra.mxu0 0
        %746 = vmatprep.subr.bf16.mxu0 0
        %747 = vmatpush2.bf16.msra.mxu0 0
        %748 = vmatprep.subr.bf16.mxu0 0
        %749 = vmatpush2.bf16.msra.mxu0 0
        %750 = vmatprep.subr.bf16.mxu0 0
        %751 = vmatpush2.bf16.msra.mxu0 0
        %752 = vmatprep.subr.bf16.mxu0 0
        %753 = vmatpush2.bf16.msra.mxu0 0
        %754 = vmatprep.subr.bf16.mxu0 0
        %755 = vmatpush2.bf16.msra.mxu0 0
        %756 = vmatprep.subr.bf16.mxu0 0
        %757 = vmatpush2.bf16.msra.mxu0 0
        %758 = vmatprep.subr.bf16.mxu0 0
        %759 = vmatpush2.bf16.msra.mxu0 0
        %760 = vmatprep.mubr.bf16.mxu0 0
        %761 = vmatmul.mubr.bf16.gmra.mxu0 %v625
        %v762 = vpop.f32.mrf.mxu0
        %v763 = vadd.f32 0.0, %v762
        %v764 = vpop.f32.mrf.mxu0
        %v765 = vpop.f32.mrf.mxu0
        %v766 = vadd.f32 0.0, %v765
        %v767 = vpop.f32.mrf.mxu0
        %768 = vdwg.mxu0
        %v769 = vlaneseq
        %v770 = vshrl.u32 %v769, 7
        %v771 = vsub.s32 1, %v770
        %v772 = vrot.slane %v565, %v771
        %vm773 = vcmp.eq.s32.totalorder %v551, %v772
        %vm774 = vcmp.eq.s32.totalorder %v552, %v772
        %v775 = vlaneseq
        %v776 = vshrl.u32 %v775, 7
        %v777 = vsub.s32 1, %v776
        %v778 = vrot.slane %v557, %v777
        %v779 = vsel %vm773, %v778, 0.0
        %v780 = vsel %vm774, %v778, 0.0
        %v781 = vmul.f32 %v763, %v779
        %v782 = vmul.f32 %v766, %v780
        %v783 = vadd.f32 %v682, %v781
        %v784 = vadd.f32 %v683, %v782
        %v785 = vlaneseq
        %v786 = vshrl.u32 %v785, 7
        %v787 = vsub.s32 2, %v786
        %v788 = vrot.slane %v561, %v787
        %vm789 = vcmp.eq.s32.totalorder %v535, %v788
        %vm790 = vcmp.eq.s32.totalorder %v536, %v788
        %vm791 = vcmp.eq.s32.totalorder %v537, %v788
        %vm792 = vcmp.eq.s32.totalorder %v538, %v788
        %vm793 = vcmp.eq.s32.totalorder %v539, %v788
        %vm794 = vcmp.eq.s32.totalorder %v540, %v788
        %vm795 = vcmp.eq.s32.totalorder %v541, %v788
        %vm796 = vcmp.eq.s32.totalorder %v542, %v788
        %vm797 = vcmp.eq.s32.totalorder %v543, %v788
        %vm798 = vcmp.eq.s32.totalorder %v544, %v788
        %vm799 = vcmp.eq.s32.totalorder %v545, %v788
        %vm800 = vcmp.eq.s32.totalorder %v546, %v788
        %vm801 = vcmp.eq.s32.totalorder %v547, %v788
        %vm802 = vcmp.eq.s32.totalorder %v548, %v788
        %vm803 = vcmp.eq.s32.totalorder %v549, %v788
        %vm804 = vcmp.eq.s32.totalorder %v550, %v788
        %v805 = vsel %vm789, 1.0, 0.0
        %v806 = vsel %vm790, 1.0, 0.0
        %v807 = vsel %vm791, 1.0, 0.0
        %v808 = vsel %vm792, 1.0, 0.0
        %v809 = vsel %vm793, 1.0, 0.0
        %v810 = vsel %vm794, 1.0, 0.0
        %v811 = vsel %vm795, 1.0, 0.0
        %v812 = vsel %vm796, 1.0, 0.0
        %v813 = vsel %vm797, 1.0, 0.0
        %v814 = vsel %vm798, 1.0, 0.0
        %v815 = vsel %vm799, 1.0, 0.0
        %v816 = vsel %vm800, 1.0, 0.0
        %v817 = vsel %vm801, 1.0, 0.0
        %v818 = vsel %vm802, 1.0, 0.0
        %v819 = vsel %vm803, 1.0, 0.0
        %v820 = vsel %vm804, 1.0, 0.0
        %v821 = vpack.c.bf16 %v806, %v805
        %v822 = vpack.c.bf16 %v808, %v807
        %v823 = vpack.c.bf16 %v810, %v809
        %v824 = vpack.c.bf16 %v812, %v811
        %v825 = vpack.c.bf16 %v814, %v813
        %v826 = vpack.c.bf16 %v816, %v815
        %v827 = vpack.c.bf16 %v818, %v817
        %v828 = vpack.c.bf16 %v820, %v819
        %829 = vmatprep.subr.bf16.mxu0 0
        %830 = vmatpush1.bf16.msra.mxu0 %v828
        %831 = vmatprep.subr.bf16.mxu0 0
        %832 = vmatpush1.bf16.msra.mxu0 %v827
        %833 = vmatprep.subr.bf16.mxu0 0
        %834 = vmatpush1.bf16.msra.mxu0 %v826
        %835 = vmatprep.subr.bf16.mxu0 0
        %836 = vmatpush1.bf16.msra.mxu0 %v825
        %837 = vmatprep.subr.bf16.mxu0 0
        %838 = vmatpush1.bf16.msra.mxu0 %v824
        %839 = vmatprep.subr.bf16.mxu0 0
        %840 = vmatpush1.bf16.msra.mxu0 %v823
        %841 = vmatprep.subr.bf16.mxu0 0
        %842 = vmatpush1.bf16.msra.mxu0 %v822
        %843 = vmatprep.subr.bf16.mxu0 0
        %844 = vmatpush1.bf16.msra.mxu0 %v821
        %845 = vmatprep.subr.bf16.mxu0 0
        %846 = vmatpush2.bf16.msra.mxu0 0
        %847 = vmatprep.subr.bf16.mxu0 0
        %848 = vmatpush2.bf16.msra.mxu0 0
        %849 = vmatprep.subr.bf16.mxu0 0
        %850 = vmatpush2.bf16.msra.mxu0 0
        %851 = vmatprep.subr.bf16.mxu0 0
        %852 = vmatpush2.bf16.msra.mxu0 0
        %853 = vmatprep.subr.bf16.mxu0 0
        %854 = vmatpush2.bf16.msra.mxu0 0
        %855 = vmatprep.subr.bf16.mxu0 0
        %856 = vmatpush2.bf16.msra.mxu0 0
        %857 = vmatprep.subr.bf16.mxu0 0
        %858 = vmatpush2.bf16.msra.mxu0 0
        %859 = vmatprep.subr.bf16.mxu0 0
        %860 = vmatpush2.bf16.msra.mxu0 0
        %861 = vmatprep.mubr.bf16.mxu0 0
        %862 = vmatmul.mubr.bf16.gmra.mxu0 %v625
        %v863 = vpop.f32.mrf.mxu0
        %v864 = vadd.f32 0.0, %v863
        %v865 = vpop.f32.mrf.mxu0
        %v866 = vpop.f32.mrf.mxu0
        %v867 = vadd.f32 0.0, %v866
        %v868 = vpop.f32.mrf.mxu0
        %869 = vdwg.mxu0
        %v870 = vlaneseq
        %v871 = vshrl.u32 %v870, 7
        %v872 = vsub.s32 2, %v871
        %v873 = vrot.slane %v565, %v872
        %vm874 = vcmp.eq.s32.totalorder %v551, %v873
        %vm875 = vcmp.eq.s32.totalorder %v552, %v873
        %v876 = vlaneseq
        %v877 = vshrl.u32 %v876, 7
        %v878 = vsub.s32 2, %v877
        %v879 = vrot.slane %v557, %v878
        %v880 = vsel %vm874, %v879, 0.0
        %v881 = vsel %vm875, %v879, 0.0
        %v882 = vmul.f32 %v864, %v880
        %v883 = vmul.f32 %v867, %v881
        %v884 = vadd.f32 %v783, %v882
        %v885 = vadd.f32 %v784, %v883
        %v886 = vlaneseq
        %v887 = vshrl.u32 %v886, 7
        %v888 = vsub.s32 3, %v887
        %v889 = vrot.slane %v561, %v888
        %vm890 = vcmp.eq.s32.totalorder %v535, %v889
        %vm891 = vcmp.eq.s32.totalorder %v536, %v889
        %vm892 = vcmp.eq.s32.totalorder %v537, %v889
        %vm893 = vcmp.eq.s32.totalorder %v538, %v889
        %vm894 = vcmp.eq.s32.totalorder %v539, %v889
        %vm895 = vcmp.eq.s32.totalorder %v540, %v889
        %vm896 = vcmp.eq.s32.totalorder %v541, %v889
        %vm897 = vcmp.eq.s32.totalorder %v542, %v889
        %vm898 = vcmp.eq.s32.totalorder %v543, %v889
        %vm899 = vcmp.eq.s32.totalorder %v544, %v889
        %vm900 = vcmp.eq.s32.totalorder %v545, %v889
        %vm901 = vcmp.eq.s32.totalorder %v546, %v889
        %vm902 = vcmp.eq.s32.totalorder %v547, %v889
        %vm903 = vcmp.eq.s32.totalorder %v548, %v889
        %vm904 = vcmp.eq.s32.totalorder %v549, %v889
        %vm905 = vcmp.eq.s32.totalorder %v550, %v889
        %v906 = vsel %vm890, 1.0, 0.0
        %v907 = vsel %vm891, 1.0, 0.0
        %v908 = vsel %vm892, 1.0, 0.0
        %v909 = vsel %vm893, 1.0, 0.0
        %v910 = vsel %vm894, 1.0, 0.0
        %v911 = vsel %vm895, 1.0, 0.0
        %v912 = vsel %vm896, 1.0, 0.0
        %v913 = vsel %vm897, 1.0, 0.0
        %v914 = vsel %vm898, 1.0, 0.0
        %v915 = vsel %vm899, 1.0, 0.0
        %v916 = vsel %vm900, 1.0, 0.0
        %v917 = vsel %vm901, 1.0, 0.0
        %v918 = vsel %vm902, 1.0, 0.0
        %v919 = vsel %vm903, 1.0, 0.0
        %v920 = vsel %vm904, 1.0, 0.0
        %v921 = vsel %vm905, 1.0, 0.0
        %v922 = vpack.c.bf16 %v907, %v906
        %v923 = vpack.c.bf16 %v909, %v908
        %v924 = vpack.c.bf16 %v911, %v910
        %v925 = vpack.c.bf16 %v913, %v912
        %v926 = vpack.c.bf16 %v915, %v914
        %v927 = vpack.c.bf16 %v917, %v916
        %v928 = vpack.c.bf16 %v919, %v918
        %v929 = vpack.c.bf16 %v921, %v920
        %930 = vmatprep.subr.bf16.mxu0 0
        %931 = vmatpush1.bf16.msra.mxu0 %v929
        %932 = vmatprep.subr.bf16.mxu0 0
        %933 = vmatpush1.bf16.msra.mxu0 %v928
        %934 = vmatprep.subr.bf16.mxu0 0
        %935 = vmatpush1.bf16.msra.mxu0 %v927
        %936 = vmatprep.subr.bf16.mxu0 0
        %937 = vmatpush1.bf16.msra.mxu0 %v926
        %938 = vmatprep.subr.bf16.mxu0 0
        %939 = vmatpush1.bf16.msra.mxu0 %v925
        %940 = vmatprep.subr.bf16.mxu0 0
        %941 = vmatpush1.bf16.msra.mxu0 %v924
        %942 = vmatprep.subr.bf16.mxu0 0
        %943 = vmatpush1.bf16.msra.mxu0 %v923
        %944 = vmatprep.subr.bf16.mxu0 0
        %945 = vmatpush1.bf16.msra.mxu0 %v922
        %946 = vmatprep.subr.bf16.mxu0 0
        %947 = vmatpush2.bf16.msra.mxu0 0
        %948 = vmatprep.subr.bf16.mxu0 0
        %949 = vmatpush2.bf16.msra.mxu0 0
        %950 = vmatprep.subr.bf16.mxu0 0
        %951 = vmatpush2.bf16.msra.mxu0 0
        %952 = vmatprep.subr.bf16.mxu0 0
        %953 = vmatpush2.bf16.msra.mxu0 0
        %954 = vmatprep.subr.bf16.mxu0 0
        %955 = vmatpush2.bf16.msra.mxu0 0
        %956 = vmatprep.subr.bf16.mxu0 0
        %957 = vmatpush2.bf16.msra.mxu0 0
        %958 = vmatprep.subr.bf16.mxu0 0
        %959 = vmatpush2.bf16.msra.mxu0 0
        %960 = vmatprep.subr.bf16.mxu0 0
        %961 = vmatpush2.bf16.msra.mxu0 0
        %962 = vmatprep.mubr.bf16.mxu0 0
        %963 = vmatmul.mubr.bf16.gmra.mxu0 %v625
        %v964 = vpop.f32.mrf.mxu0
        %v965 = vadd.f32 0.0, %v964
        %v966 = vpop.f32.mrf.mxu0
        %v967 = vpop.f32.mrf.mxu0
        %v968 = vadd.f32 0.0, %v967
        %v969 = vpop.f32.mrf.mxu0
        %970 = vdwg.mxu0
        %v971 = vlaneseq
        %v972 = vshrl.u32 %v971, 7
        %v973 = vsub.s32 3, %v972
        %v974 = vrot.slane %v565, %v973
        %vm975 = vcmp.eq.s32.totalorder %v551, %v974
        %vm976 = vcmp.eq.s32.totalorder %v552, %v974
        %v977 = vlaneseq
        %v978 = vshrl.u32 %v977, 7
        %v979 = vsub.s32 3, %v978
        %v980 = vrot.slane %v557, %v979
        %v981 = vsel %vm975, %v980, 0.0
        %v982 = vsel %vm976, %v980, 0.0
        %v983 = vmul.f32 %v965, %v981
        %v984 = vmul.f32 %v968, %v982
        %v985 = vadd.f32 %v884, %v983
        %v986 = vadd.f32 %v885, %v984
        %v987 = vlaneseq
        %v988 = vshrl.u32 %v987, 7
        %v989 = vsub.s32 4, %v988
        %v990 = vrot.slane %v561, %v989
        %vm991 = vcmp.eq.s32.totalorder %v535, %v990
        %vm992 = vcmp.eq.s32.totalorder %v536, %v990
        %vm993 = vcmp.eq.s32.totalorder %v537, %v990
        %vm994 = vcmp.eq.s32.totalorder %v538, %v990
        %vm995 = vcmp.eq.s32.totalorder %v539, %v990
        %vm996 = vcmp.eq.s32.totalorder %v540, %v990
        %vm997 = vcmp.eq.s32.totalorder %v541, %v990
        %vm998 = vcmp.eq.s32.totalorder %v542, %v990
        %vm999 = vcmp.eq.s32.totalorder %v543, %v990
        %vm1000 = vcmp.eq.s32.totalorder %v544, %v990
        %vm1001 = vcmp.eq.s32.totalorder %v545, %v990
        %vm1002 = vcmp.eq.s32.totalorder %v546, %v990
        %vm1003 = vcmp.eq.s32.totalorder %v547, %v990
        %vm1004 = vcmp.eq.s32.totalorder %v548, %v990
        %vm1005 = vcmp.eq.s32.totalorder %v549, %v990
        %vm1006 = vcmp.eq.s32.totalorder %v550, %v990
        %v1007 = vsel %vm991, 1.0, 0.0
        %v1008 = vsel %vm992, 1.0, 0.0
        %v1009 = vsel %vm993, 1.0, 0.0
        %v1010 = vsel %vm994, 1.0, 0.0
        %v1011 = vsel %vm995, 1.0, 0.0
        %v1012 = vsel %vm996, 1.0, 0.0
        %v1013 = vsel %vm997, 1.0, 0.0
        %v1014 = vsel %vm998, 1.0, 0.0
        %v1015 = vsel %vm999, 1.0, 0.0
        %v1016 = vsel %vm1000, 1.0, 0.0
        %v1017 = vsel %vm1001, 1.0, 0.0
        %v1018 = vsel %vm1002, 1.0, 0.0
        %v1019 = vsel %vm1003, 1.0, 0.0
        %v1020 = vsel %vm1004, 1.0, 0.0
        %v1021 = vsel %vm1005, 1.0, 0.0
        %v1022 = vsel %vm1006, 1.0, 0.0
        %v1023 = vpack.c.bf16 %v1008, %v1007
        %v1024 = vpack.c.bf16 %v1010, %v1009
        %v1025 = vpack.c.bf16 %v1012, %v1011
        %v1026 = vpack.c.bf16 %v1014, %v1013
        %v1027 = vpack.c.bf16 %v1016, %v1015
        %v1028 = vpack.c.bf16 %v1018, %v1017
        %v1029 = vpack.c.bf16 %v1020, %v1019
        %v1030 = vpack.c.bf16 %v1022, %v1021
        %1031 = vmatprep.subr.bf16.mxu0 0
        %1032 = vmatpush1.bf16.msra.mxu0 %v1030
        %1033 = vmatprep.subr.bf16.mxu0 0
        %1034 = vmatpush1.bf16.msra.mxu0 %v1029
        %1035 = vmatprep.subr.bf16.mxu0 0
        %1036 = vmatpush1.bf16.msra.mxu0 %v1028
        %1037 = vmatprep.subr.bf16.mxu0 0
        %1038 = vmatpush1.bf16.msra.mxu0 %v1027
        %1039 = vmatprep.subr.bf16.mxu0 0
        %1040 = vmatpush1.bf16.msra.mxu0 %v1026
        %1041 = vmatprep.subr.bf16.mxu0 0
        %1042 = vmatpush1.bf16.msra.mxu0 %v1025
        %1043 = vmatprep.subr.bf16.mxu0 0
        %1044 = vmatpush1.bf16.msra.mxu0 %v1024
        %1045 = vmatprep.subr.bf16.mxu0 0
        %1046 = vmatpush1.bf16.msra.mxu0 %v1023
        %1047 = vmatprep.subr.bf16.mxu0 0
        %1048 = vmatpush2.bf16.msra.mxu0 0
        %1049 = vmatprep.subr.bf16.mxu0 0
        %1050 = vmatpush2.bf16.msra.mxu0 0
        %1051 = vmatprep.subr.bf16.mxu0 0
        %1052 = vmatpush2.bf16.msra.mxu0 0
        %1053 = vmatprep.subr.bf16.mxu0 0
        %1054 = vmatpush2.bf16.msra.mxu0 0
        %1055 = vmatprep.subr.bf16.mxu0 0
        %1056 = vmatpush2.bf16.msra.mxu0 0
        %1057 = vmatprep.subr.bf16.mxu0 0
        %1058 = vmatpush2.bf16.msra.mxu0 0
        %1059 = vmatprep.subr.bf16.mxu0 0
        %1060 = vmatpush2.bf16.msra.mxu0 0
        %1061 = vmatprep.subr.bf16.mxu0 0
        %1062 = vmatpush2.bf16.msra.mxu0 0
        %1063 = vmatprep.mubr.bf16.mxu0 0
        %1064 = vmatmul.mubr.bf16.gmra.mxu0 %v625
        %v1065 = vpop.f32.mrf.mxu0
        %v1066 = vadd.f32 0.0, %v1065
        %v1067 = vpop.f32.mrf.mxu0
        %v1068 = vpop.f32.mrf.mxu0
        %v1069 = vadd.f32 0.0, %v1068
        %v1070 = vpop.f32.mrf.mxu0
        %1071 = vdwg.mxu0
        %v1072 = vlaneseq
        %v1073 = vshrl.u32 %v1072, 7
        %v1074 = vsub.s32 4, %v1073
        %v1075 = vrot.slane %v565, %v1074
        %vm1076 = vcmp.eq.s32.totalorder %v551, %v1075
        %vm1077 = vcmp.eq.s32.totalorder %v552, %v1075
        %v1078 = vlaneseq
        %v1079 = vshrl.u32 %v1078, 7
        %v1080 = vsub.s32 4, %v1079
        %v1081 = vrot.slane %v557, %v1080
        %v1082 = vsel %vm1076, %v1081, 0.0
        %v1083 = vsel %vm1077, %v1081, 0.0
        %v1084 = vmul.f32 %v1066, %v1082
        %v1085 = vmul.f32 %v1069, %v1083
        %v1086 = vadd.f32 %v985, %v1084
        %v1087 = vadd.f32 %v986, %v1085
        %v1088 = vlaneseq
        %v1089 = vshrl.u32 %v1088, 7
        %v1090 = vsub.s32 5, %v1089
        %v1091 = vrot.slane %v561, %v1090
        %vm1092 = vcmp.eq.s32.totalorder %v535, %v1091
        %vm1093 = vcmp.eq.s32.totalorder %v536, %v1091
        %vm1094 = vcmp.eq.s32.totalorder %v537, %v1091
        %vm1095 = vcmp.eq.s32.totalorder %v538, %v1091
        %vm1096 = vcmp.eq.s32.totalorder %v539, %v1091
        %vm1097 = vcmp.eq.s32.totalorder %v540, %v1091
        %vm1098 = vcmp.eq.s32.totalorder %v541, %v1091
        %vm1099 = vcmp.eq.s32.totalorder %v542, %v1091
        %vm1100 = vcmp.eq.s32.totalorder %v543, %v1091
        %vm1101 = vcmp.eq.s32.totalorder %v544, %v1091
        %vm1102 = vcmp.eq.s32.totalorder %v545, %v1091
        %vm1103 = vcmp.eq.s32.totalorder %v546, %v1091
        %vm1104 = vcmp.eq.s32.totalorder %v547, %v1091
        %vm1105 = vcmp.eq.s32.totalorder %v548, %v1091
        %vm1106 = vcmp.eq.s32.totalorder %v549, %v1091
        %vm1107 = vcmp.eq.s32.totalorder %v550, %v1091
        %v1108 = vsel %vm1092, 1.0, 0.0
        %v1109 = vsel %vm1093, 1.0, 0.0
        %v1110 = vsel %vm1094, 1.0, 0.0
        %v1111 = vsel %vm1095, 1.0, 0.0
        %v1112 = vsel %vm1096, 1.0, 0.0
        %v1113 = vsel %vm1097, 1.0, 0.0
        %v1114 = vsel %vm1098, 1.0, 0.0
        %v1115 = vsel %vm1099, 1.0, 0.0
        %v1116 = vsel %vm1100, 1.0, 0.0
        %v1117 = vsel %vm1101, 1.0, 0.0
        %v1118 = vsel %vm1102, 1.0, 0.0
        %v1119 = vsel %vm1103, 1.0, 0.0
        %v1120 = vsel %vm1104, 1.0, 0.0
        %v1121 = vsel %vm1105, 1.0, 0.0
        %v1122 = vsel %vm1106, 1.0, 0.0
        %v1123 = vsel %vm1107, 1.0, 0.0
        %v1124 = vpack.c.bf16 %v1109, %v1108
        %v1125 = vpack.c.bf16 %v1111, %v1110
        %v1126 = vpack.c.bf16 %v1113, %v1112
        %v1127 = vpack.c.bf16 %v1115, %v1114
        %v1128 = vpack.c.bf16 %v1117, %v1116
        %v1129 = vpack.c.bf16 %v1119, %v1118
        %v1130 = vpack.c.bf16 %v1121, %v1120
        %v1131 = vpack.c.bf16 %v1123, %v1122
        %1132 = vmatprep.subr.bf16.mxu0 0
        %1133 = vmatpush1.bf16.msra.mxu0 %v1131
        %1134 = vmatprep.subr.bf16.mxu0 0
        %1135 = vmatpush1.bf16.msra.mxu0 %v1130
        %1136 = vmatprep.subr.bf16.mxu0 0
        %1137 = vmatpush1.bf16.msra.mxu0 %v1129
        %1138 = vmatprep.subr.bf16.mxu0 0
        %1139 = vmatpush1.bf16.msra.mxu0 %v1128
        %1140 = vmatprep.subr.bf16.mxu0 0
        %1141 = vmatpush1.bf16.msra.mxu0 %v1127
        %1142 = vmatprep.subr.bf16.mxu0 0
        %1143 = vmatpush1.bf16.msra.mxu0 %v1126
        %1144 = vmatprep.subr.bf16.mxu0 0
        %1145 = vmatpush1.bf16.msra.mxu0 %v1125
        %1146 = vmatprep.subr.bf16.mxu0 0
        %1147 = vmatpush1.bf16.msra.mxu0 %v1124
        %1148 = vmatprep.subr.bf16.mxu0 0
        %1149 = vmatpush2.bf16.msra.mxu0 0
        %1150 = vmatprep.subr.bf16.mxu0 0
        %1151 = vmatpush2.bf16.msra.mxu0 0
        %1152 = vmatprep.subr.bf16.mxu0 0
        %1153 = vmatpush2.bf16.msra.mxu0 0
        %1154 = vmatprep.subr.bf16.mxu0 0
        %1155 = vmatpush2.bf16.msra.mxu0 0
        %1156 = vmatprep.subr.bf16.mxu0 0
        %1157 = vmatpush2.bf16.msra.mxu0 0
        %1158 = vmatprep.subr.bf16.mxu0 0
        %1159 = vmatpush2.bf16.msra.mxu0 0
        %1160 = vmatprep.subr.bf16.mxu0 0
        %1161 = vmatpush2.bf16.msra.mxu0 0
        %1162 = vmatprep.subr.bf16.mxu0 0
        %1163 = vmatpush2.bf16.msra.mxu0 0
        %1164 = vmatprep.mubr.bf16.mxu0 0
        %1165 = vmatmul.mubr.bf16.gmra.mxu0 %v625
        %v1166 = vpop.f32.mrf.mxu0
        %v1167 = vadd.f32 0.0, %v1166
        %v1168 = vpop.f32.mrf.mxu0
        %v1169 = vpop.f32.mrf.mxu0
        %v1170 = vadd.f32 0.0, %v1169
        %v1171 = vpop.f32.mrf.mxu0
        %1172 = vdwg.mxu0
        %v1173 = vlaneseq
        %v1174 = vshrl.u32 %v1173, 7
        %v1175 = vsub.s32 5, %v1174
        %v1176 = vrot.slane %v565, %v1175
        %vm1177 = vcmp.eq.s32.totalorder %v551, %v1176
        %vm1178 = vcmp.eq.s32.totalorder %v552, %v1176
        %v1179 = vlaneseq
        %v1180 = vshrl.u32 %v1179, 7
        %v1181 = vsub.s32 5, %v1180
        %v1182 = vrot.slane %v557, %v1181
        %v1183 = vsel %vm1177, %v1182, 0.0
        %v1184 = vsel %vm1178, %v1182, 0.0
        %v1185 = vmul.f32 %v1167, %v1183
        %v1186 = vmul.f32 %v1170, %v1184
        %v1187 = vadd.f32 %v1086, %v1185
        %v1188 = vadd.f32 %v1087, %v1186
        %v1189 = vlaneseq
        %v1190 = vshrl.u32 %v1189, 7
        %v1191 = vsub.s32 6, %v1190
        %v1192 = vrot.slane %v561, %v1191
        %vm1193 = vcmp.eq.s32.totalorder %v535, %v1192
        %vm1194 = vcmp.eq.s32.totalorder %v536, %v1192
        %vm1195 = vcmp.eq.s32.totalorder %v537, %v1192
        %vm1196 = vcmp.eq.s32.totalorder %v538, %v1192
        %vm1197 = vcmp.eq.s32.totalorder %v539, %v1192
        %vm1198 = vcmp.eq.s32.totalorder %v540, %v1192
        %vm1199 = vcmp.eq.s32.totalorder %v541, %v1192
        %vm1200 = vcmp.eq.s32.totalorder %v542, %v1192
        %vm1201 = vcmp.eq.s32.totalorder %v543, %v1192
        %vm1202 = vcmp.eq.s32.totalorder %v544, %v1192
        %vm1203 = vcmp.eq.s32.totalorder %v545, %v1192
        %vm1204 = vcmp.eq.s32.totalorder %v546, %v1192
        %vm1205 = vcmp.eq.s32.totalorder %v547, %v1192
        %vm1206 = vcmp.eq.s32.totalorder %v548, %v1192
        %vm1207 = vcmp.eq.s32.totalorder %v549, %v1192
        %vm1208 = vcmp.eq.s32.totalorder %v550, %v1192
        %v1209 = vsel %vm1193, 1.0, 0.0
        %v1210 = vsel %vm1194, 1.0, 0.0
        %v1211 = vsel %vm1195, 1.0, 0.0
        %v1212 = vsel %vm1196, 1.0, 0.0
        %v1213 = vsel %vm1197, 1.0, 0.0
        %v1214 = vsel %vm1198, 1.0, 0.0
        %v1215 = vsel %vm1199, 1.0, 0.0
        %v1216 = vsel %vm1200, 1.0, 0.0
        %v1217 = vsel %vm1201, 1.0, 0.0
        %v1218 = vsel %vm1202, 1.0, 0.0
        %v1219 = vsel %vm1203, 1.0, 0.0
        %v1220 = vsel %vm1204, 1.0, 0.0
        %v1221 = vsel %vm1205, 1.0, 0.0
        %v1222 = vsel %vm1206, 1.0, 0.0
        %v1223 = vsel %vm1207, 1.0, 0.0
        %v1224 = vsel %vm1208, 1.0, 0.0
        %v1225 = vpack.c.bf16 %v1210, %v1209
        %v1226 = vpack.c.bf16 %v1212, %v1211
        %v1227 = vpack.c.bf16 %v1214, %v1213
        %v1228 = vpack.c.bf16 %v1216, %v1215
        %v1229 = vpack.c.bf16 %v1218, %v1217
        %v1230 = vpack.c.bf16 %v1220, %v1219
        %v1231 = vpack.c.bf16 %v1222, %v1221
        %v1232 = vpack.c.bf16 %v1224, %v1223
        %1233 = vmatprep.subr.bf16.mxu0 0
        %1234 = vmatpush1.bf16.msra.mxu0 %v1232
        %1235 = vmatprep.subr.bf16.mxu0 0
        %1236 = vmatpush1.bf16.msra.mxu0 %v1231
        %1237 = vmatprep.subr.bf16.mxu0 0
        %1238 = vmatpush1.bf16.msra.mxu0 %v1230
        %1239 = vmatprep.subr.bf16.mxu0 0
        %1240 = vmatpush1.bf16.msra.mxu0 %v1229
        %1241 = vmatprep.subr.bf16.mxu0 0
        %1242 = vmatpush1.bf16.msra.mxu0 %v1228
        %1243 = vmatprep.subr.bf16.mxu0 0
        %1244 = vmatpush1.bf16.msra.mxu0 %v1227
        %1245 = vmatprep.subr.bf16.mxu0 0
        %1246 = vmatpush1.bf16.msra.mxu0 %v1226
        %1247 = vmatprep.subr.bf16.mxu0 0
        %1248 = vmatpush1.bf16.msra.mxu0 %v1225
        %1249 = vmatprep.subr.bf16.mxu0 0
        %1250 = vmatpush2.bf16.msra.mxu0 0
        %1251 = vmatprep.subr.bf16.mxu0 0
        %1252 = vmatpush2.bf16.msra.mxu0 0
        %1253 = vmatprep.subr.bf16.mxu0 0
        %1254 = vmatpush2.bf16.msra.mxu0 0
        %1255 = vmatprep.subr.bf16.mxu0 0
        %1256 = vmatpush2.bf16.msra.mxu0 0
        %1257 = vmatprep.subr.bf16.mxu0 0
        %1258 = vmatpush2.bf16.msra.mxu0 0
        %1259 = vmatprep.subr.bf16.mxu0 0
        %1260 = vmatpush2.bf16.msra.mxu0 0
        %1261 = vmatprep.subr.bf16.mxu0 0
        %1262 = vmatpush2.bf16.msra.mxu0 0
        %1263 = vmatprep.subr.bf16.mxu0 0
        %1264 = vmatpush2.bf16.msra.mxu0 0
        %1265 = vmatprep.mubr.bf16.mxu0 0
        %1266 = vmatmul.mubr.bf16.gmra.mxu0 %v625
        %v1267 = vpop.f32.mrf.mxu0
        %v1268 = vadd.f32 0.0, %v1267
        %v1269 = vpop.f32.mrf.mxu0
        %v1270 = vpop.f32.mrf.mxu0
        %v1271 = vadd.f32 0.0, %v1270
        %v1272 = vpop.f32.mrf.mxu0
        %1273 = vdwg.mxu0
        %v1274 = vlaneseq
        %v1275 = vshrl.u32 %v1274, 7
        %v1276 = vsub.s32 6, %v1275
        %v1277 = vrot.slane %v565, %v1276
        %vm1278 = vcmp.eq.s32.totalorder %v551, %v1277
        %vm1279 = vcmp.eq.s32.totalorder %v552, %v1277
        %v1280 = vlaneseq
        %v1281 = vshrl.u32 %v1280, 7
        %v1282 = vsub.s32 6, %v1281
        %v1283 = vrot.slane %v557, %v1282
        %v1284 = vsel %vm1278, %v1283, 0.0
        %v1285 = vsel %vm1279, %v1283, 0.0
        %v1286 = vmul.f32 %v1268, %v1284
        %v1287 = vmul.f32 %v1271, %v1285
        %v1288 = vadd.f32 %v1187, %v1286
        %v1289 = vadd.f32 %v1188, %v1287
        %v1290 = vlaneseq
        %v1291 = vshrl.u32 %v1290, 7
        %v1292 = vsub.s32 7, %v1291
        %v1293 = vrot.slane %v561, %v1292
        %vm1294 = vcmp.eq.s32.totalorder %v535, %v1293
        %vm1295 = vcmp.eq.s32.totalorder %v536, %v1293
        %vm1296 = vcmp.eq.s32.totalorder %v537, %v1293
        %vm1297 = vcmp.eq.s32.totalorder %v538, %v1293
        %vm1298 = vcmp.eq.s32.totalorder %v539, %v1293
        %vm1299 = vcmp.eq.s32.totalorder %v540, %v1293
        %vm1300 = vcmp.eq.s32.totalorder %v541, %v1293
        %vm1301 = vcmp.eq.s32.totalorder %v542, %v1293
        %vm1302 = vcmp.eq.s32.totalorder %v543, %v1293
        %vm1303 = vcmp.eq.s32.totalorder %v544, %v1293
        %vm1304 = vcmp.eq.s32.totalorder %v545, %v1293
        %vm1305 = vcmp.eq.s32.totalorder %v546, %v1293
        %vm1306 = vcmp.eq.s32.totalorder %v547, %v1293
        %vm1307 = vcmp.eq.s32.totalorder %v548, %v1293
        %vm1308 = vcmp.eq.s32.totalorder %v549, %v1293
        %vm1309 = vcmp.eq.s32.totalorder %v550, %v1293
        %v1310 = vsel %vm1294, 1.0, 0.0
        %v1311 = vsel %vm1295, 1.0, 0.0
        %v1312 = vsel %vm1296, 1.0, 0.0
        %v1313 = vsel %vm1297, 1.0, 0.0
        %v1314 = vsel %vm1298, 1.0, 0.0
        %v1315 = vsel %vm1299, 1.0, 0.0
        %v1316 = vsel %vm1300, 1.0, 0.0
        %v1317 = vsel %vm1301, 1.0, 0.0
        %v1318 = vsel %vm1302, 1.0, 0.0
        %v1319 = vsel %vm1303, 1.0, 0.0
        %v1320 = vsel %vm1304, 1.0, 0.0
        %v1321 = vsel %vm1305, 1.0, 0.0
        %v1322 = vsel %vm1306, 1.0, 0.0
        %v1323 = vsel %vm1307, 1.0, 0.0
        %v1324 = vsel %vm1308, 1.0, 0.0
        %v1325 = vsel %vm1309, 1.0, 0.0
        %v1326 = vpack.c.bf16 %v1311, %v1310
        %v1327 = vpack.c.bf16 %v1313, %v1312
        %v1328 = vpack.c.bf16 %v1315, %v1314
        %v1329 = vpack.c.bf16 %v1317, %v1316
        %v1330 = vpack.c.bf16 %v1319, %v1318
        %v1331 = vpack.c.bf16 %v1321, %v1320
        %v1332 = vpack.c.bf16 %v1323, %v1322
        %v1333 = vpack.c.bf16 %v1325, %v1324
        %1334 = vmatprep.subr.bf16.mxu0 0
        %1335 = vmatpush1.bf16.msra.mxu0 %v1333
        %1336 = vmatprep.subr.bf16.mxu0 0
        %1337 = vmatpush1.bf16.msra.mxu0 %v1332
        %1338 = vmatprep.subr.bf16.mxu0 0
        %1339 = vmatpush1.bf16.msra.mxu0 %v1331
        %1340 = vmatprep.subr.bf16.mxu0 0
        %1341 = vmatpush1.bf16.msra.mxu0 %v1330
        %1342 = vmatprep.subr.bf16.mxu0 0
        %1343 = vmatpush1.bf16.msra.mxu0 %v1329
        %1344 = vmatprep.subr.bf16.mxu0 0
        %1345 = vmatpush1.bf16.msra.mxu0 %v1328
        %1346 = vmatprep.subr.bf16.mxu0 0
        %1347 = vmatpush1.bf16.msra.mxu0 %v1327
        %1348 = vmatprep.subr.bf16.mxu0 0
        %1349 = vmatpush1.bf16.msra.mxu0 %v1326
        %1350 = vmatprep.subr.bf16.mxu0 0
        %1351 = vmatpush2.bf16.msra.mxu0 0
        %1352 = vmatprep.subr.bf16.mxu0 0
        %1353 = vmatpush2.bf16.msra.mxu0 0
        %1354 = vmatprep.subr.bf16.mxu0 0
        %1355 = vmatpush2.bf16.msra.mxu0 0
        %1356 = vmatprep.subr.bf16.mxu0 0
        %1357 = vmatpush2.bf16.msra.mxu0 0
        %1358 = vmatprep.subr.bf16.mxu0 0
        %1359 = vmatpush2.bf16.msra.mxu0 0
        %1360 = vmatprep.subr.bf16.mxu0 0
        %1361 = vmatpush2.bf16.msra.mxu0 0
        %1362 = vmatprep.subr.bf16.mxu0 0
        %1363 = vmatpush2.bf16.msra.mxu0 0
        %1364 = vmatprep.subr.bf16.mxu0 0
        %1365 = vmatpush2.bf16.msra.mxu0 0
        %1366 = vmatprep.mubr.bf16.mxu0 0
        %1367 = vmatmul.mubr.bf16.gmra.mxu0 %v625
        %v1368 = vpop.f32.mrf.mxu0
        %v1369 = vadd.f32 0.0, %v1368
        %v1370 = vpop.f32.mrf.mxu0
        %v1371 = vpop.f32.mrf.mxu0
        %v1372 = vadd.f32 0.0, %v1371
        %v1373 = vpop.f32.mrf.mxu0
        %1374 = vdwg.mxu0
        %v1375 = vlaneseq
        %v1376 = vshrl.u32 %v1375, 7
        %v1377 = vsub.s32 7, %v1376
        %v1378 = vrot.slane %v565, %v1377
        %vm1379 = vcmp.eq.s32.totalorder %v551, %v1378
        %vm1380 = vcmp.eq.s32.totalorder %v552, %v1378
        %v1381 = vlaneseq
        %v1382 = vshrl.u32 %v1381, 7
        %v1383 = vsub.s32 7, %v1382
        %v1384 = vrot.slane %v557, %v1383
        %v1385 = vsel %vm1379, %v1384, 0.0
        %v1386 = vsel %vm1380, %v1384, 0.0
        %v1387 = vmul.f32 %v1369, %v1385
        %v1388 = vmul.f32 %v1372, %v1386
        %v1389 = vadd.f32 %v1288, %v1387
        %v1390 = vadd.f32 %v1289, %v1388
        %v1391 = vrot.slane %v1389, 4
        %v1392 = vadd.f32 %v1389, %v1391
        %v1393 = vrot.slane %v1392, 2
        %v1394 = vadd.f32 %v1392, %v1393
        %v1395 = vrot.slane %v1394, 1
        %v1396 = vadd.f32 %v1394, %v1395
        %v1397 = vrot.slane %v1390, 4
        %v1398 = vadd.f32 %v1390, %v1397
        %v1399 = vrot.slane %v1398, 2
        %v1400 = vadd.f32 %v1398, %v1399
        %v1401 = vrot.slane %v1400, 1
        %v1402 = vadd.f32 %v1400, %v1401
        %v1403 = vlaneseq
        %v1404 = vshrl.u32 %v1403, 7
        %v1405 = vsub.s32 0, %v1404
        %v1406 = vrot.slane %v562, %v1405
        %vm1407 = vcmp.eq.s32.totalorder %v535, %v1406
        %vm1408 = vcmp.eq.s32.totalorder %v536, %v1406
        %vm1409 = vcmp.eq.s32.totalorder %v537, %v1406
        %vm1410 = vcmp.eq.s32.totalorder %v538, %v1406
        %vm1411 = vcmp.eq.s32.totalorder %v539, %v1406
        %vm1412 = vcmp.eq.s32.totalorder %v540, %v1406
        %vm1413 = vcmp.eq.s32.totalorder %v541, %v1406
        %vm1414 = vcmp.eq.s32.totalorder %v542, %v1406
        %vm1415 = vcmp.eq.s32.totalorder %v543, %v1406
        %vm1416 = vcmp.eq.s32.totalorder %v544, %v1406
        %vm1417 = vcmp.eq.s32.totalorder %v545, %v1406
        %vm1418 = vcmp.eq.s32.totalorder %v546, %v1406
        %vm1419 = vcmp.eq.s32.totalorder %v547, %v1406
        %vm1420 = vcmp.eq.s32.totalorder %v548, %v1406
        %vm1421 = vcmp.eq.s32.totalorder %v549, %v1406
        %vm1422 = vcmp.eq.s32.totalorder %v550, %v1406
        %v1423 = vsel %vm1407, 1.0, 0.0
        %v1424 = vsel %vm1408, 1.0, 0.0
        %v1425 = vsel %vm1409, 1.0, 0.0
        %v1426 = vsel %vm1410, 1.0, 0.0
        %v1427 = vsel %vm1411, 1.0, 0.0
        %v1428 = vsel %vm1412, 1.0, 0.0
        %v1429 = vsel %vm1413, 1.0, 0.0
        %v1430 = vsel %vm1414, 1.0, 0.0
        %v1431 = vsel %vm1415, 1.0, 0.0
        %v1432 = vsel %vm1416, 1.0, 0.0
        %v1433 = vsel %vm1417, 1.0, 0.0
        %v1434 = vsel %vm1418, 1.0, 0.0
        %v1435 = vsel %vm1419, 1.0, 0.0
        %v1436 = vsel %vm1420, 1.0, 0.0
        %v1437 = vsel %vm1421, 1.0, 0.0
        %v1438 = vsel %vm1422, 1.0, 0.0
        %v1439 = vpack.c.bf16 %v1424, %v1423
        %v1440 = vpack.c.bf16 %v1426, %v1425
        %v1441 = vpack.c.bf16 %v1428, %v1427
        %v1442 = vpack.c.bf16 %v1430, %v1429
        %v1443 = vpack.c.bf16 %v1432, %v1431
        %v1444 = vpack.c.bf16 %v1434, %v1433
        %v1445 = vpack.c.bf16 %v1436, %v1435
        %v1446 = vpack.c.bf16 %v1438, %v1437
        %v1449 = vunpack.c.l.b16 %v571
        %v1450 = vunpack.c.l.b16 %v572
        %v1451 = vpack.c.b16 %v1450, %v1449
        %1453 = vmatprep.subr.bf16.mxu0 0
        %1454 = vmatpush1.bf16.msra.mxu0 %v1446
        %1455 = vmatprep.subr.bf16.mxu0 0
        %1456 = vmatpush1.bf16.msra.mxu0 %v1445
        %1457 = vmatprep.subr.bf16.mxu0 0
        %1458 = vmatpush1.bf16.msra.mxu0 %v1444
        %1459 = vmatprep.subr.bf16.mxu0 0
        %1460 = vmatpush1.bf16.msra.mxu0 %v1443
        %1461 = vmatprep.subr.bf16.mxu0 0
        %1462 = vmatpush1.bf16.msra.mxu0 %v1442
        %1463 = vmatprep.subr.bf16.mxu0 0
        %1464 = vmatpush1.bf16.msra.mxu0 %v1441
        %1465 = vmatprep.subr.bf16.mxu0 0
        %1466 = vmatpush1.bf16.msra.mxu0 %v1440
        %1467 = vmatprep.subr.bf16.mxu0 0
        %1468 = vmatpush1.bf16.msra.mxu0 %v1439
        %1469 = vmatprep.subr.bf16.mxu0 0
        %1470 = vmatpush2.bf16.msra.mxu0 0
        %1471 = vmatprep.subr.bf16.mxu0 0
        %1472 = vmatpush2.bf16.msra.mxu0 0
        %1473 = vmatprep.subr.bf16.mxu0 0
        %1474 = vmatpush2.bf16.msra.mxu0 0
        %1475 = vmatprep.subr.bf16.mxu0 0
        %1476 = vmatpush2.bf16.msra.mxu0 0
        %1477 = vmatprep.subr.bf16.mxu0 0
        %1478 = vmatpush2.bf16.msra.mxu0 0
        %1479 = vmatprep.subr.bf16.mxu0 0
        %1480 = vmatpush2.bf16.msra.mxu0 0
        %1481 = vmatprep.subr.bf16.mxu0 0
        %1482 = vmatpush2.bf16.msra.mxu0 0
        %1483 = vmatprep.subr.bf16.mxu0 0
        %1484 = vmatpush2.bf16.msra.mxu0 0
        %1485 = vmatprep.mubr.bf16.mxu0 0
        %1486 = vmatmul.mubr.bf16.gmra.mxu0 %v1451
        %v1487 = vpop.f32.mrf.mxu0
        %v1488 = vadd.f32 0.0, %v1487
        %v1489 = vpop.f32.mrf.mxu0
        %v1490 = vpop.f32.mrf.mxu0
        %v1491 = vadd.f32 0.0, %v1490
        %v1492 = vpop.f32.mrf.mxu0
        %1493 = vdwg.mxu0
        %v1494 = vlaneseq
        %v1495 = vshrl.u32 %v1494, 7
        %v1496 = vsub.s32 0, %v1495
        %v1497 = vrot.slane %v566, %v1496
        %vm1498 = vcmp.eq.s32.totalorder %v551, %v1497
        %vm1499 = vcmp.eq.s32.totalorder %v552, %v1497
        %v1500 = vlaneseq
        %v1501 = vshrl.u32 %v1500, 7
        %v1502 = vsub.s32 0, %v1501
        %v1503 = vrot.slane %v558, %v1502
        %v1504 = vsel %vm1498, %v1503, 0.0
        %v1505 = vsel %vm1499, %v1503, 0.0
        %v1506 = vmul.f32 %v1488, %v1504
        %v1507 = vmul.f32 %v1491, %v1505
        %v1508 = vadd.f32 %v1506, 0.0
        %v1509 = vadd.f32 %v1507, 0.0
        %v1510 = vlaneseq
        %v1511 = vshrl.u32 %v1510, 7
        %v1512 = vsub.s32 1, %v1511
        %v1513 = vrot.slane %v562, %v1512
        %vm1514 = vcmp.eq.s32.totalorder %v535, %v1513
        %vm1515 = vcmp.eq.s32.totalorder %v536, %v1513
        %vm1516 = vcmp.eq.s32.totalorder %v537, %v1513
        %vm1517 = vcmp.eq.s32.totalorder %v538, %v1513
        %vm1518 = vcmp.eq.s32.totalorder %v539, %v1513
        %vm1519 = vcmp.eq.s32.totalorder %v540, %v1513
        %vm1520 = vcmp.eq.s32.totalorder %v541, %v1513
        %vm1521 = vcmp.eq.s32.totalorder %v542, %v1513
        %vm1522 = vcmp.eq.s32.totalorder %v543, %v1513
        %vm1523 = vcmp.eq.s32.totalorder %v544, %v1513
        %vm1524 = vcmp.eq.s32.totalorder %v545, %v1513
        %vm1525 = vcmp.eq.s32.totalorder %v546, %v1513
        %vm1526 = vcmp.eq.s32.totalorder %v547, %v1513
        %vm1527 = vcmp.eq.s32.totalorder %v548, %v1513
        %vm1528 = vcmp.eq.s32.totalorder %v549, %v1513
        %vm1529 = vcmp.eq.s32.totalorder %v550, %v1513
        %v1530 = vsel %vm1514, 1.0, 0.0
        %v1531 = vsel %vm1515, 1.0, 0.0
        %v1532 = vsel %vm1516, 1.0, 0.0
        %v1533 = vsel %vm1517, 1.0, 0.0
        %v1534 = vsel %vm1518, 1.0, 0.0
        %v1535 = vsel %vm1519, 1.0, 0.0
        %v1536 = vsel %vm1520, 1.0, 0.0
        %v1537 = vsel %vm1521, 1.0, 0.0
        %v1538 = vsel %vm1522, 1.0, 0.0
        %v1539 = vsel %vm1523, 1.0, 0.0
        %v1540 = vsel %vm1524, 1.0, 0.0
        %v1541 = vsel %vm1525, 1.0, 0.0
        %v1542 = vsel %vm1526, 1.0, 0.0
        %v1543 = vsel %vm1527, 1.0, 0.0
        %v1544 = vsel %vm1528, 1.0, 0.0
        %v1545 = vsel %vm1529, 1.0, 0.0
        %v1546 = vpack.c.bf16 %v1531, %v1530
        %v1547 = vpack.c.bf16 %v1533, %v1532
        %v1548 = vpack.c.bf16 %v1535, %v1534
        %v1549 = vpack.c.bf16 %v1537, %v1536
        %v1550 = vpack.c.bf16 %v1539, %v1538
        %v1551 = vpack.c.bf16 %v1541, %v1540
        %v1552 = vpack.c.bf16 %v1543, %v1542
        %v1553 = vpack.c.bf16 %v1545, %v1544
        %1554 = vmatprep.subr.bf16.mxu0 0
        %1555 = vmatpush1.bf16.msra.mxu0 %v1553
        %1556 = vmatprep.subr.bf16.mxu0 0
        %1557 = vmatpush1.bf16.msra.mxu0 %v1552
        %1558 = vmatprep.subr.bf16.mxu0 0
        %1559 = vmatpush1.bf16.msra.mxu0 %v1551
        %1560 = vmatprep.subr.bf16.mxu0 0
        %1561 = vmatpush1.bf16.msra.mxu0 %v1550
        %1562 = vmatprep.subr.bf16.mxu0 0
        %1563 = vmatpush1.bf16.msra.mxu0 %v1549
        %1564 = vmatprep.subr.bf16.mxu0 0
        %1565 = vmatpush1.bf16.msra.mxu0 %v1548
        %1566 = vmatprep.subr.bf16.mxu0 0
        %1567 = vmatpush1.bf16.msra.mxu0 %v1547
        %1568 = vmatprep.subr.bf16.mxu0 0
        %1569 = vmatpush1.bf16.msra.mxu0 %v1546
        %1570 = vmatprep.subr.bf16.mxu0 0
        %1571 = vmatpush2.bf16.msra.mxu0 0
        %1572 = vmatprep.subr.bf16.mxu0 0
        %1573 = vmatpush2.bf16.msra.mxu0 0
        %1574 = vmatprep.subr.bf16.mxu0 0
        %1575 = vmatpush2.bf16.msra.mxu0 0
        %1576 = vmatprep.subr.bf16.mxu0 0
        %1577 = vmatpush2.bf16.msra.mxu0 0
        %1578 = vmatprep.subr.bf16.mxu0 0
        %1579 = vmatpush2.bf16.msra.mxu0 0
        %1580 = vmatprep.subr.bf16.mxu0 0
        %1581 = vmatpush2.bf16.msra.mxu0 0
        %1582 = vmatprep.subr.bf16.mxu0 0
        %1583 = vmatpush2.bf16.msra.mxu0 0
        %1584 = vmatprep.subr.bf16.mxu0 0
        %1585 = vmatpush2.bf16.msra.mxu0 0
        %1586 = vmatprep.mubr.bf16.mxu0 0
        %1587 = vmatmul.mubr.bf16.gmra.mxu0 %v1451
        %v1588 = vpop.f32.mrf.mxu0
        %v1589 = vadd.f32 0.0, %v1588
        %v1590 = vpop.f32.mrf.mxu0
        %v1591 = vpop.f32.mrf.mxu0
        %v1592 = vadd.f32 0.0, %v1591
        %v1593 = vpop.f32.mrf.mxu0
        %1594 = vdwg.mxu0
        %v1595 = vlaneseq
        %v1596 = vshrl.u32 %v1595, 7
        %v1597 = vsub.s32 1, %v1596
        %v1598 = vrot.slane %v566, %v1597
        %vm1599 = vcmp.eq.s32.totalorder %v551, %v1598
        %vm1600 = vcmp.eq.s32.totalorder %v552, %v1598
        %v1601 = vlaneseq
        %v1602 = vshrl.u32 %v1601, 7
        %v1603 = vsub.s32 1, %v1602
        %v1604 = vrot.slane %v558, %v1603
        %v1605 = vsel %vm1599, %v1604, 0.0
        %v1606 = vsel %vm1600, %v1604, 0.0
        %v1607 = vmul.f32 %v1589, %v1605
        %v1608 = vmul.f32 %v1592, %v1606
        %v1609 = vadd.f32 %v1508, %v1607
        %v1610 = vadd.f32 %v1509, %v1608
        %v1611 = vlaneseq
        %v1612 = vshrl.u32 %v1611, 7
        %v1613 = vsub.s32 2, %v1612
        %v1614 = vrot.slane %v562, %v1613
        %vm1615 = vcmp.eq.s32.totalorder %v535, %v1614
        %vm1616 = vcmp.eq.s32.totalorder %v536, %v1614
        %vm1617 = vcmp.eq.s32.totalorder %v537, %v1614
        %vm1618 = vcmp.eq.s32.totalorder %v538, %v1614
        %vm1619 = vcmp.eq.s32.totalorder %v539, %v1614
        %vm1620 = vcmp.eq.s32.totalorder %v540, %v1614
        %vm1621 = vcmp.eq.s32.totalorder %v541, %v1614
        %vm1622 = vcmp.eq.s32.totalorder %v542, %v1614
        %vm1623 = vcmp.eq.s32.totalorder %v543, %v1614
        %vm1624 = vcmp.eq.s32.totalorder %v544, %v1614
        %vm1625 = vcmp.eq.s32.totalorder %v545, %v1614
        %vm1626 = vcmp.eq.s32.totalorder %v546, %v1614
        %vm1627 = vcmp.eq.s32.totalorder %v547, %v1614
        %vm1628 = vcmp.eq.s32.totalorder %v548, %v1614
        %vm1629 = vcmp.eq.s32.totalorder %v549, %v1614
        %vm1630 = vcmp.eq.s32.totalorder %v550, %v1614
        %v1631 = vsel %vm1615, 1.0, 0.0
        %v1632 = vsel %vm1616, 1.0, 0.0
        %v1633 = vsel %vm1617, 1.0, 0.0
        %v1634 = vsel %vm1618, 1.0, 0.0
        %v1635 = vsel %vm1619, 1.0, 0.0
        %v1636 = vsel %vm1620, 1.0, 0.0
        %v1637 = vsel %vm1621, 1.0, 0.0
        %v1638 = vsel %vm1622, 1.0, 0.0
        %v1639 = vsel %vm1623, 1.0, 0.0
        %v1640 = vsel %vm1624, 1.0, 0.0
        %v1641 = vsel %vm1625, 1.0, 0.0
        %v1642 = vsel %vm1626, 1.0, 0.0
        %v1643 = vsel %vm1627, 1.0, 0.0
        %v1644 = vsel %vm1628, 1.0, 0.0
        %v1645 = vsel %vm1629, 1.0, 0.0
        %v1646 = vsel %vm1630, 1.0, 0.0
        %v1647 = vpack.c.bf16 %v1632, %v1631
        %v1648 = vpack.c.bf16 %v1634, %v1633
        %v1649 = vpack.c.bf16 %v1636, %v1635
        %v1650 = vpack.c.bf16 %v1638, %v1637
        %v1651 = vpack.c.bf16 %v1640, %v1639
        %v1652 = vpack.c.bf16 %v1642, %v1641
        %v1653 = vpack.c.bf16 %v1644, %v1643
        %v1654 = vpack.c.bf16 %v1646, %v1645
        %1655 = vmatprep.subr.bf16.mxu0 0
        %1656 = vmatpush1.bf16.msra.mxu0 %v1654
        %1657 = vmatprep.subr.bf16.mxu0 0
        %1658 = vmatpush1.bf16.msra.mxu0 %v1653
        %1659 = vmatprep.subr.bf16.mxu0 0
        %1660 = vmatpush1.bf16.msra.mxu0 %v1652
        %1661 = vmatprep.subr.bf16.mxu0 0
        %1662 = vmatpush1.bf16.msra.mxu0 %v1651
        %1663 = vmatprep.subr.bf16.mxu0 0
        %1664 = vmatpush1.bf16.msra.mxu0 %v1650
        %1665 = vmatprep.subr.bf16.mxu0 0
        %1666 = vmatpush1.bf16.msra.mxu0 %v1649
        %1667 = vmatprep.subr.bf16.mxu0 0
        %1668 = vmatpush1.bf16.msra.mxu0 %v1648
        %1669 = vmatprep.subr.bf16.mxu0 0
        %1670 = vmatpush1.bf16.msra.mxu0 %v1647
        %1671 = vmatprep.subr.bf16.mxu0 0
        %1672 = vmatpush2.bf16.msra.mxu0 0
        %1673 = vmatprep.subr.bf16.mxu0 0
        %1674 = vmatpush2.bf16.msra.mxu0 0
        %1675 = vmatprep.subr.bf16.mxu0 0
        %1676 = vmatpush2.bf16.msra.mxu0 0
        %1677 = vmatprep.subr.bf16.mxu0 0
        %1678 = vmatpush2.bf16.msra.mxu0 0
        %1679 = vmatprep.subr.bf16.mxu0 0
        %1680 = vmatpush2.bf16.msra.mxu0 0
        %1681 = vmatprep.subr.bf16.mxu0 0
        %1682 = vmatpush2.bf16.msra.mxu0 0
        %1683 = vmatprep.subr.bf16.mxu0 0
        %1684 = vmatpush2.bf16.msra.mxu0 0
        %1685 = vmatprep.subr.bf16.mxu0 0
        %1686 = vmatpush2.bf16.msra.mxu0 0
        %1687 = vmatprep.mubr.bf16.mxu0 0
        %1688 = vmatmul.mubr.bf16.gmra.mxu0 %v1451
        %v1689 = vpop.f32.mrf.mxu0
        %v1690 = vadd.f32 0.0, %v1689
        %v1691 = vpop.f32.mrf.mxu0
        %v1692 = vpop.f32.mrf.mxu0
        %v1693 = vadd.f32 0.0, %v1692
        %v1694 = vpop.f32.mrf.mxu0
        %1695 = vdwg.mxu0
        %v1696 = vlaneseq
        %v1697 = vshrl.u32 %v1696, 7
        %v1698 = vsub.s32 2, %v1697
        %v1699 = vrot.slane %v566, %v1698
        %vm1700 = vcmp.eq.s32.totalorder %v551, %v1699
        %vm1701 = vcmp.eq.s32.totalorder %v552, %v1699
        %v1702 = vlaneseq
        %v1703 = vshrl.u32 %v1702, 7
        %v1704 = vsub.s32 2, %v1703
        %v1705 = vrot.slane %v558, %v1704
        %v1706 = vsel %vm1700, %v1705, 0.0
        %v1707 = vsel %vm1701, %v1705, 0.0
        %v1708 = vmul.f32 %v1690, %v1706
        %v1709 = vmul.f32 %v1693, %v1707
        %v1710 = vadd.f32 %v1609, %v1708
        %v1711 = vadd.f32 %v1610, %v1709
        %v1712 = vlaneseq
        %v1713 = vshrl.u32 %v1712, 7
        %v1714 = vsub.s32 3, %v1713
        %v1715 = vrot.slane %v562, %v1714
        %vm1716 = vcmp.eq.s32.totalorder %v535, %v1715
        %vm1717 = vcmp.eq.s32.totalorder %v536, %v1715
        %vm1718 = vcmp.eq.s32.totalorder %v537, %v1715
        %vm1719 = vcmp.eq.s32.totalorder %v538, %v1715
        %vm1720 = vcmp.eq.s32.totalorder %v539, %v1715
        %vm1721 = vcmp.eq.s32.totalorder %v540, %v1715
        %vm1722 = vcmp.eq.s32.totalorder %v541, %v1715
        %vm1723 = vcmp.eq.s32.totalorder %v542, %v1715
        %vm1724 = vcmp.eq.s32.totalorder %v543, %v1715
        %vm1725 = vcmp.eq.s32.totalorder %v544, %v1715
        %vm1726 = vcmp.eq.s32.totalorder %v545, %v1715
        %vm1727 = vcmp.eq.s32.totalorder %v546, %v1715
        %vm1728 = vcmp.eq.s32.totalorder %v547, %v1715
        %vm1729 = vcmp.eq.s32.totalorder %v548, %v1715
        %vm1730 = vcmp.eq.s32.totalorder %v549, %v1715
        %vm1731 = vcmp.eq.s32.totalorder %v550, %v1715
        %v1732 = vsel %vm1716, 1.0, 0.0
        %v1733 = vsel %vm1717, 1.0, 0.0
        %v1734 = vsel %vm1718, 1.0, 0.0
        %v1735 = vsel %vm1719, 1.0, 0.0
        %v1736 = vsel %vm1720, 1.0, 0.0
        %v1737 = vsel %vm1721, 1.0, 0.0
        %v1738 = vsel %vm1722, 1.0, 0.0
        %v1739 = vsel %vm1723, 1.0, 0.0
        %v1740 = vsel %vm1724, 1.0, 0.0
        %v1741 = vsel %vm1725, 1.0, 0.0
        %v1742 = vsel %vm1726, 1.0, 0.0
        %v1743 = vsel %vm1727, 1.0, 0.0
        %v1744 = vsel %vm1728, 1.0, 0.0
        %v1745 = vsel %vm1729, 1.0, 0.0
        %v1746 = vsel %vm1730, 1.0, 0.0
        %v1747 = vsel %vm1731, 1.0, 0.0
        %v1748 = vpack.c.bf16 %v1733, %v1732
        %v1749 = vpack.c.bf16 %v1735, %v1734
        %v1750 = vpack.c.bf16 %v1737, %v1736
        %v1751 = vpack.c.bf16 %v1739, %v1738
        %v1752 = vpack.c.bf16 %v1741, %v1740
        %v1753 = vpack.c.bf16 %v1743, %v1742
        %v1754 = vpack.c.bf16 %v1745, %v1744
        %v1755 = vpack.c.bf16 %v1747, %v1746
        %1756 = vmatprep.subr.bf16.mxu0 0
        %1757 = vmatpush1.bf16.msra.mxu0 %v1755
        %1758 = vmatprep.subr.bf16.mxu0 0
        %1759 = vmatpush1.bf16.msra.mxu0 %v1754
        %1760 = vmatprep.subr.bf16.mxu0 0
        %1761 = vmatpush1.bf16.msra.mxu0 %v1753
        %1762 = vmatprep.subr.bf16.mxu0 0
        %1763 = vmatpush1.bf16.msra.mxu0 %v1752
        %1764 = vmatprep.subr.bf16.mxu0 0
        %1765 = vmatpush1.bf16.msra.mxu0 %v1751
        %1766 = vmatprep.subr.bf16.mxu0 0
        %1767 = vmatpush1.bf16.msra.mxu0 %v1750
        %1768 = vmatprep.subr.bf16.mxu0 0
        %1769 = vmatpush1.bf16.msra.mxu0 %v1749
        %1770 = vmatprep.subr.bf16.mxu0 0
        %1771 = vmatpush1.bf16.msra.mxu0 %v1748
        %1772 = vmatprep.subr.bf16.mxu0 0
        %1773 = vmatpush2.bf16.msra.mxu0 0
        %1774 = vmatprep.subr.bf16.mxu0 0
        %1775 = vmatpush2.bf16.msra.mxu0 0
        %1776 = vmatprep.subr.bf16.mxu0 0
        %1777 = vmatpush2.bf16.msra.mxu0 0
        %1778 = vmatprep.subr.bf16.mxu0 0
        %1779 = vmatpush2.bf16.msra.mxu0 0
        %1780 = vmatprep.subr.bf16.mxu0 0
        %1781 = vmatpush2.bf16.msra.mxu0 0
        %1782 = vmatprep.subr.bf16.mxu0 0
        %1783 = vmatpush2.bf16.msra.mxu0 0
        %1784 = vmatprep.subr.bf16.mxu0 0
        %1785 = vmatpush2.bf16.msra.mxu0 0
        %1786 = vmatprep.subr.bf16.mxu0 0
        %1787 = vmatpush2.bf16.msra.mxu0 0
        %1788 = vmatprep.mubr.bf16.mxu0 0
        %1789 = vmatmul.mubr.bf16.gmra.mxu0 %v1451
        %v1790 = vpop.f32.mrf.mxu0
        %v1791 = vadd.f32 0.0, %v1790
        %v1792 = vpop.f32.mrf.mxu0
        %v1793 = vpop.f32.mrf.mxu0
        %v1794 = vadd.f32 0.0, %v1793
        %v1795 = vpop.f32.mrf.mxu0
        %1796 = vdwg.mxu0
        %v1797 = vlaneseq
        %v1798 = vshrl.u32 %v1797, 7
        %v1799 = vsub.s32 3, %v1798
        %v1800 = vrot.slane %v566, %v1799
        %vm1801 = vcmp.eq.s32.totalorder %v551, %v1800
        %vm1802 = vcmp.eq.s32.totalorder %v552, %v1800
        %v1803 = vlaneseq
        %v1804 = vshrl.u32 %v1803, 7
        %v1805 = vsub.s32 3, %v1804
        %v1806 = vrot.slane %v558, %v1805
        %v1807 = vsel %vm1801, %v1806, 0.0
        %v1808 = vsel %vm1802, %v1806, 0.0
        %v1809 = vmul.f32 %v1791, %v1807
        %v1810 = vmul.f32 %v1794, %v1808
        %v1811 = vadd.f32 %v1710, %v1809
        %v1812 = vadd.f32 %v1711, %v1810
        %v1813 = vlaneseq
        %v1814 = vshrl.u32 %v1813, 7
        %v1815 = vsub.s32 4, %v1814
        %v1816 = vrot.slane %v562, %v1815
        %vm1817 = vcmp.eq.s32.totalorder %v535, %v1816
        %vm1818 = vcmp.eq.s32.totalorder %v536, %v1816
        %vm1819 = vcmp.eq.s32.totalorder %v537, %v1816
        %vm1820 = vcmp.eq.s32.totalorder %v538, %v1816
        %vm1821 = vcmp.eq.s32.totalorder %v539, %v1816
        %vm1822 = vcmp.eq.s32.totalorder %v540, %v1816
        %vm1823 = vcmp.eq.s32.totalorder %v541, %v1816
        %vm1824 = vcmp.eq.s32.totalorder %v542, %v1816
        %vm1825 = vcmp.eq.s32.totalorder %v543, %v1816
        %vm1826 = vcmp.eq.s32.totalorder %v544, %v1816
        %vm1827 = vcmp.eq.s32.totalorder %v545, %v1816
        %vm1828 = vcmp.eq.s32.totalorder %v546, %v1816
        %vm1829 = vcmp.eq.s32.totalorder %v547, %v1816
        %vm1830 = vcmp.eq.s32.totalorder %v548, %v1816
        %vm1831 = vcmp.eq.s32.totalorder %v549, %v1816
        %vm1832 = vcmp.eq.s32.totalorder %v550, %v1816
        %v1833 = vsel %vm1817, 1.0, 0.0
        %v1834 = vsel %vm1818, 1.0, 0.0
        %v1835 = vsel %vm1819, 1.0, 0.0
        %v1836 = vsel %vm1820, 1.0, 0.0
        %v1837 = vsel %vm1821, 1.0, 0.0
        %v1838 = vsel %vm1822, 1.0, 0.0
        %v1839 = vsel %vm1823, 1.0, 0.0
        %v1840 = vsel %vm1824, 1.0, 0.0
        %v1841 = vsel %vm1825, 1.0, 0.0
        %v1842 = vsel %vm1826, 1.0, 0.0
        %v1843 = vsel %vm1827, 1.0, 0.0
        %v1844 = vsel %vm1828, 1.0, 0.0
        %v1845 = vsel %vm1829, 1.0, 0.0
        %v1846 = vsel %vm1830, 1.0, 0.0
        %v1847 = vsel %vm1831, 1.0, 0.0
        %v1848 = vsel %vm1832, 1.0, 0.0
        %v1849 = vpack.c.bf16 %v1834, %v1833
        %v1850 = vpack.c.bf16 %v1836, %v1835
        %v1851 = vpack.c.bf16 %v1838, %v1837
        %v1852 = vpack.c.bf16 %v1840, %v1839
        %v1853 = vpack.c.bf16 %v1842, %v1841
        %v1854 = vpack.c.bf16 %v1844, %v1843
        %v1855 = vpack.c.bf16 %v1846, %v1845
        %v1856 = vpack.c.bf16 %v1848, %v1847
        %1857 = vmatprep.subr.bf16.mxu0 0
        %1858 = vmatpush1.bf16.msra.mxu0 %v1856
        %1859 = vmatprep.subr.bf16.mxu0 0
        %1860 = vmatpush1.bf16.msra.mxu0 %v1855
        %1861 = vmatprep.subr.bf16.mxu0 0
        %1862 = vmatpush1.bf16.msra.mxu0 %v1854
        %1863 = vmatprep.subr.bf16.mxu0 0
        %1864 = vmatpush1.bf16.msra.mxu0 %v1853
        %1865 = vmatprep.subr.bf16.mxu0 0
        %1866 = vmatpush1.bf16.msra.mxu0 %v1852
        %1867 = vmatprep.subr.bf16.mxu0 0
        %1868 = vmatpush1.bf16.msra.mxu0 %v1851
        %1869 = vmatprep.subr.bf16.mxu0 0
        %1870 = vmatpush1.bf16.msra.mxu0 %v1850
        %1871 = vmatprep.subr.bf16.mxu0 0
        %1872 = vmatpush1.bf16.msra.mxu0 %v1849
        %1873 = vmatprep.subr.bf16.mxu0 0
        %1874 = vmatpush2.bf16.msra.mxu0 0
        %1875 = vmatprep.subr.bf16.mxu0 0
        %1876 = vmatpush2.bf16.msra.mxu0 0
        %1877 = vmatprep.subr.bf16.mxu0 0
        %1878 = vmatpush2.bf16.msra.mxu0 0
        %1879 = vmatprep.subr.bf16.mxu0 0
        %1880 = vmatpush2.bf16.msra.mxu0 0
        %1881 = vmatprep.subr.bf16.mxu0 0
        %1882 = vmatpush2.bf16.msra.mxu0 0
        %1883 = vmatprep.subr.bf16.mxu0 0
        %1884 = vmatpush2.bf16.msra.mxu0 0
        %1885 = vmatprep.subr.bf16.mxu0 0
        %1886 = vmatpush2.bf16.msra.mxu0 0
        %1887 = vmatprep.subr.bf16.mxu0 0
        %1888 = vmatpush2.bf16.msra.mxu0 0
        %1889 = vmatprep.mubr.bf16.mxu0 0
        %1890 = vmatmul.mubr.bf16.gmra.mxu0 %v1451
        %v1891 = vpop.f32.mrf.mxu0
        %v1892 = vadd.f32 0.0, %v1891
        %v1893 = vpop.f32.mrf.mxu0
        %v1894 = vpop.f32.mrf.mxu0
        %v1895 = vadd.f32 0.0, %v1894
        %v1896 = vpop.f32.mrf.mxu0
        %1897 = vdwg.mxu0
        %v1898 = vlaneseq
        %v1899 = vshrl.u32 %v1898, 7
        %v1900 = vsub.s32 4, %v1899
        %v1901 = vrot.slane %v566, %v1900
        %vm1902 = vcmp.eq.s32.totalorder %v551, %v1901
        %vm1903 = vcmp.eq.s32.totalorder %v552, %v1901
        %v1904 = vlaneseq
        %v1905 = vshrl.u32 %v1904, 7
        %v1906 = vsub.s32 4, %v1905
        %v1907 = vrot.slane %v558, %v1906
        %v1908 = vsel %vm1902, %v1907, 0.0
        %v1909 = vsel %vm1903, %v1907, 0.0
        %v1910 = vmul.f32 %v1892, %v1908
        %v1911 = vmul.f32 %v1895, %v1909
        %v1912 = vadd.f32 %v1811, %v1910
        %v1913 = vadd.f32 %v1812, %v1911
        %v1914 = vlaneseq
        %v1915 = vshrl.u32 %v1914, 7
        %v1916 = vsub.s32 5, %v1915
        %v1917 = vrot.slane %v562, %v1916
        %vm1918 = vcmp.eq.s32.totalorder %v535, %v1917
        %vm1919 = vcmp.eq.s32.totalorder %v536, %v1917
        %vm1920 = vcmp.eq.s32.totalorder %v537, %v1917
        %vm1921 = vcmp.eq.s32.totalorder %v538, %v1917
        %vm1922 = vcmp.eq.s32.totalorder %v539, %v1917
        %vm1923 = vcmp.eq.s32.totalorder %v540, %v1917
        %vm1924 = vcmp.eq.s32.totalorder %v541, %v1917
        %vm1925 = vcmp.eq.s32.totalorder %v542, %v1917
        %vm1926 = vcmp.eq.s32.totalorder %v543, %v1917
        %vm1927 = vcmp.eq.s32.totalorder %v544, %v1917
        %vm1928 = vcmp.eq.s32.totalorder %v545, %v1917
        %vm1929 = vcmp.eq.s32.totalorder %v546, %v1917
        %vm1930 = vcmp.eq.s32.totalorder %v547, %v1917
        %vm1931 = vcmp.eq.s32.totalorder %v548, %v1917
        %vm1932 = vcmp.eq.s32.totalorder %v549, %v1917
        %vm1933 = vcmp.eq.s32.totalorder %v550, %v1917
        %v1934 = vsel %vm1918, 1.0, 0.0
        %v1935 = vsel %vm1919, 1.0, 0.0
        %v1936 = vsel %vm1920, 1.0, 0.0
        %v1937 = vsel %vm1921, 1.0, 0.0
        %v1938 = vsel %vm1922, 1.0, 0.0
        %v1939 = vsel %vm1923, 1.0, 0.0
        %v1940 = vsel %vm1924, 1.0, 0.0
        %v1941 = vsel %vm1925, 1.0, 0.0
        %v1942 = vsel %vm1926, 1.0, 0.0
        %v1943 = vsel %vm1927, 1.0, 0.0
        %v1944 = vsel %vm1928, 1.0, 0.0
        %v1945 = vsel %vm1929, 1.0, 0.0
        %v1946 = vsel %vm1930, 1.0, 0.0
        %v1947 = vsel %vm1931, 1.0, 0.0
        %v1948 = vsel %vm1932, 1.0, 0.0
        %v1949 = vsel %vm1933, 1.0, 0.0
        %v1950 = vpack.c.bf16 %v1935, %v1934
        %v1951 = vpack.c.bf16 %v1937, %v1936
        %v1952 = vpack.c.bf16 %v1939, %v1938
        %v1953 = vpack.c.bf16 %v1941, %v1940
        %v1954 = vpack.c.bf16 %v1943, %v1942
        %v1955 = vpack.c.bf16 %v1945, %v1944
        %v1956 = vpack.c.bf16 %v1947, %v1946
        %v1957 = vpack.c.bf16 %v1949, %v1948
        %1958 = vmatprep.subr.bf16.mxu0 0
        %1959 = vmatpush1.bf16.msra.mxu0 %v1957
        %1960 = vmatprep.subr.bf16.mxu0 0
        %1961 = vmatpush1.bf16.msra.mxu0 %v1956
        %1962 = vmatprep.subr.bf16.mxu0 0
        %1963 = vmatpush1.bf16.msra.mxu0 %v1955
        %1964 = vmatprep.subr.bf16.mxu0 0
        %1965 = vmatpush1.bf16.msra.mxu0 %v1954
        %1966 = vmatprep.subr.bf16.mxu0 0
        %1967 = vmatpush1.bf16.msra.mxu0 %v1953
        %1968 = vmatprep.subr.bf16.mxu0 0
        %1969 = vmatpush1.bf16.msra.mxu0 %v1952
        %1970 = vmatprep.subr.bf16.mxu0 0
        %1971 = vmatpush1.bf16.msra.mxu0 %v1951
        %1972 = vmatprep.subr.bf16.mxu0 0
        %1973 = vmatpush1.bf16.msra.mxu0 %v1950
        %1974 = vmatprep.subr.bf16.mxu0 0
        %1975 = vmatpush2.bf16.msra.mxu0 0
        %1976 = vmatprep.subr.bf16.mxu0 0
        %1977 = vmatpush2.bf16.msra.mxu0 0
        %1978 = vmatprep.subr.bf16.mxu0 0
        %1979 = vmatpush2.bf16.msra.mxu0 0
        %1980 = vmatprep.subr.bf16.mxu0 0
        %1981 = vmatpush2.bf16.msra.mxu0 0
        %1982 = vmatprep.subr.bf16.mxu0 0
        %1983 = vmatpush2.bf16.msra.mxu0 0
        %1984 = vmatprep.subr.bf16.mxu0 0
        %1985 = vmatpush2.bf16.msra.mxu0 0
        %1986 = vmatprep.subr.bf16.mxu0 0
        %1987 = vmatpush2.bf16.msra.mxu0 0
        %1988 = vmatprep.subr.bf16.mxu0 0
        %1989 = vmatpush2.bf16.msra.mxu0 0
        %1990 = vmatprep.mubr.bf16.mxu0 0
        %1991 = vmatmul.mubr.bf16.gmra.mxu0 %v1451
        %v1992 = vpop.f32.mrf.mxu0
        %v1993 = vadd.f32 0.0, %v1992
        %v1994 = vpop.f32.mrf.mxu0
        %v1995 = vpop.f32.mrf.mxu0
        %v1996 = vadd.f32 0.0, %v1995
        %v1997 = vpop.f32.mrf.mxu0
        %1998 = vdwg.mxu0
        %v1999 = vlaneseq
        %v2000 = vshrl.u32 %v1999, 7
        %v2001 = vsub.s32 5, %v2000
        %v2002 = vrot.slane %v566, %v2001
        %vm2003 = vcmp.eq.s32.totalorder %v551, %v2002
        %vm2004 = vcmp.eq.s32.totalorder %v552, %v2002
        %v2005 = vlaneseq
        %v2006 = vshrl.u32 %v2005, 7
        %v2007 = vsub.s32 5, %v2006
        %v2008 = vrot.slane %v558, %v2007
        %v2009 = vsel %vm2003, %v2008, 0.0
        %v2010 = vsel %vm2004, %v2008, 0.0
        %v2011 = vmul.f32 %v1993, %v2009
        %v2012 = vmul.f32 %v1996, %v2010
        %v2013 = vadd.f32 %v1912, %v2011
        %v2014 = vadd.f32 %v1913, %v2012
        %v2015 = vlaneseq
        %v2016 = vshrl.u32 %v2015, 7
        %v2017 = vsub.s32 6, %v2016
        %v2018 = vrot.slane %v562, %v2017
        %vm2019 = vcmp.eq.s32.totalorder %v535, %v2018
        %vm2020 = vcmp.eq.s32.totalorder %v536, %v2018
        %vm2021 = vcmp.eq.s32.totalorder %v537, %v2018
        %vm2022 = vcmp.eq.s32.totalorder %v538, %v2018
        %vm2023 = vcmp.eq.s32.totalorder %v539, %v2018
        %vm2024 = vcmp.eq.s32.totalorder %v540, %v2018
        %vm2025 = vcmp.eq.s32.totalorder %v541, %v2018
        %vm2026 = vcmp.eq.s32.totalorder %v542, %v2018
        %vm2027 = vcmp.eq.s32.totalorder %v543, %v2018
        %vm2028 = vcmp.eq.s32.totalorder %v544, %v2018
        %vm2029 = vcmp.eq.s32.totalorder %v545, %v2018
        %vm2030 = vcmp.eq.s32.totalorder %v546, %v2018
        %vm2031 = vcmp.eq.s32.totalorder %v547, %v2018
        %vm2032 = vcmp.eq.s32.totalorder %v548, %v2018
        %vm2033 = vcmp.eq.s32.totalorder %v549, %v2018
        %vm2034 = vcmp.eq.s32.totalorder %v550, %v2018
        %v2035 = vsel %vm2019, 1.0, 0.0
        %v2036 = vsel %vm2020, 1.0, 0.0
        %v2037 = vsel %vm2021, 1.0, 0.0
        %v2038 = vsel %vm2022, 1.0, 0.0
        %v2039 = vsel %vm2023, 1.0, 0.0
        %v2040 = vsel %vm2024, 1.0, 0.0
        %v2041 = vsel %vm2025, 1.0, 0.0
        %v2042 = vsel %vm2026, 1.0, 0.0
        %v2043 = vsel %vm2027, 1.0, 0.0
        %v2044 = vsel %vm2028, 1.0, 0.0
        %v2045 = vsel %vm2029, 1.0, 0.0
        %v2046 = vsel %vm2030, 1.0, 0.0
        %v2047 = vsel %vm2031, 1.0, 0.0
        %v2048 = vsel %vm2032, 1.0, 0.0
        %v2049 = vsel %vm2033, 1.0, 0.0
        %v2050 = vsel %vm2034, 1.0, 0.0
        %v2051 = vpack.c.bf16 %v2036, %v2035
        %v2052 = vpack.c.bf16 %v2038, %v2037
        %v2053 = vpack.c.bf16 %v2040, %v2039
        %v2054 = vpack.c.bf16 %v2042, %v2041
        %v2055 = vpack.c.bf16 %v2044, %v2043
        %v2056 = vpack.c.bf16 %v2046, %v2045
        %v2057 = vpack.c.bf16 %v2048, %v2047
        %v2058 = vpack.c.bf16 %v2050, %v2049
        %2059 = vmatprep.subr.bf16.mxu0 0
        %2060 = vmatpush1.bf16.msra.mxu0 %v2058
        %2061 = vmatprep.subr.bf16.mxu0 0
        %2062 = vmatpush1.bf16.msra.mxu0 %v2057
        %2063 = vmatprep.subr.bf16.mxu0 0
        %2064 = vmatpush1.bf16.msra.mxu0 %v2056
        %2065 = vmatprep.subr.bf16.mxu0 0
        %2066 = vmatpush1.bf16.msra.mxu0 %v2055
        %2067 = vmatprep.subr.bf16.mxu0 0
        %2068 = vmatpush1.bf16.msra.mxu0 %v2054
        %2069 = vmatprep.subr.bf16.mxu0 0
        %2070 = vmatpush1.bf16.msra.mxu0 %v2053
        %2071 = vmatprep.subr.bf16.mxu0 0
        %2072 = vmatpush1.bf16.msra.mxu0 %v2052
        %2073 = vmatprep.subr.bf16.mxu0 0
        %2074 = vmatpush1.bf16.msra.mxu0 %v2051
        %2075 = vmatprep.subr.bf16.mxu0 0
        %2076 = vmatpush2.bf16.msra.mxu0 0
        %2077 = vmatprep.subr.bf16.mxu0 0
        %2078 = vmatpush2.bf16.msra.mxu0 0
        %2079 = vmatprep.subr.bf16.mxu0 0
        %2080 = vmatpush2.bf16.msra.mxu0 0
        %2081 = vmatprep.subr.bf16.mxu0 0
        %2082 = vmatpush2.bf16.msra.mxu0 0
        %2083 = vmatprep.subr.bf16.mxu0 0
        %2084 = vmatpush2.bf16.msra.mxu0 0
        %2085 = vmatprep.subr.bf16.mxu0 0
        %2086 = vmatpush2.bf16.msra.mxu0 0
        %2087 = vmatprep.subr.bf16.mxu0 0
        %2088 = vmatpush2.bf16.msra.mxu0 0
        %2089 = vmatprep.subr.bf16.mxu0 0
        %2090 = vmatpush2.bf16.msra.mxu0 0
        %2091 = vmatprep.mubr.bf16.mxu0 0
        %2092 = vmatmul.mubr.bf16.gmra.mxu0 %v1451
        %v2093 = vpop.f32.mrf.mxu0
        %v2094 = vadd.f32 0.0, %v2093
        %v2095 = vpop.f32.mrf.mxu0
        %v2096 = vpop.f32.mrf.mxu0
        %v2097 = vadd.f32 0.0, %v2096
        %v2098 = vpop.f32.mrf.mxu0
        %2099 = vdwg.mxu0
        %v2100 = vlaneseq
        %v2101 = vshrl.u32 %v2100, 7
        %v2102 = vsub.s32 6, %v2101
        %v2103 = vrot.slane %v566, %v2102
        %vm2104 = vcmp.eq.s32.totalorder %v551, %v2103
        %vm2105 = vcmp.eq.s32.totalorder %v552, %v2103
        %v2106 = vlaneseq
        %v2107 = vshrl.u32 %v2106, 7
        %v2108 = vsub.s32 6, %v2107
        %v2109 = vrot.slane %v558, %v2108
        %v2110 = vsel %vm2104, %v2109, 0.0
        %v2111 = vsel %vm2105, %v2109, 0.0
        %v2112 = vmul.f32 %v2094, %v2110
        %v2113 = vmul.f32 %v2097, %v2111
        %v2114 = vadd.f32 %v2013, %v2112
        %v2115 = vadd.f32 %v2014, %v2113
        %v2116 = vlaneseq
        %v2117 = vshrl.u32 %v2116, 7
        %v2118 = vsub.s32 7, %v2117
        %v2119 = vrot.slane %v562, %v2118
        %vm2120 = vcmp.eq.s32.totalorder %v535, %v2119
        %vm2121 = vcmp.eq.s32.totalorder %v536, %v2119
        %vm2122 = vcmp.eq.s32.totalorder %v537, %v2119
        %vm2123 = vcmp.eq.s32.totalorder %v538, %v2119
        %vm2124 = vcmp.eq.s32.totalorder %v539, %v2119
        %vm2125 = vcmp.eq.s32.totalorder %v540, %v2119
        %vm2126 = vcmp.eq.s32.totalorder %v541, %v2119
        %vm2127 = vcmp.eq.s32.totalorder %v542, %v2119
        %vm2128 = vcmp.eq.s32.totalorder %v543, %v2119
        %vm2129 = vcmp.eq.s32.totalorder %v544, %v2119
        %vm2130 = vcmp.eq.s32.totalorder %v545, %v2119
        %vm2131 = vcmp.eq.s32.totalorder %v546, %v2119
        %vm2132 = vcmp.eq.s32.totalorder %v547, %v2119
        %vm2133 = vcmp.eq.s32.totalorder %v548, %v2119
        %vm2134 = vcmp.eq.s32.totalorder %v549, %v2119
        %vm2135 = vcmp.eq.s32.totalorder %v550, %v2119
        %v2136 = vsel %vm2120, 1.0, 0.0
        %v2137 = vsel %vm2121, 1.0, 0.0
        %v2138 = vsel %vm2122, 1.0, 0.0
        %v2139 = vsel %vm2123, 1.0, 0.0
        %v2140 = vsel %vm2124, 1.0, 0.0
        %v2141 = vsel %vm2125, 1.0, 0.0
        %v2142 = vsel %vm2126, 1.0, 0.0
        %v2143 = vsel %vm2127, 1.0, 0.0
        %v2144 = vsel %vm2128, 1.0, 0.0
        %v2145 = vsel %vm2129, 1.0, 0.0
        %v2146 = vsel %vm2130, 1.0, 0.0
        %v2147 = vsel %vm2131, 1.0, 0.0
        %v2148 = vsel %vm2132, 1.0, 0.0
        %v2149 = vsel %vm2133, 1.0, 0.0
        %v2150 = vsel %vm2134, 1.0, 0.0
        %v2151 = vsel %vm2135, 1.0, 0.0
        %v2152 = vpack.c.bf16 %v2137, %v2136
        %v2153 = vpack.c.bf16 %v2139, %v2138
        %v2154 = vpack.c.bf16 %v2141, %v2140
        %v2155 = vpack.c.bf16 %v2143, %v2142
        %v2156 = vpack.c.bf16 %v2145, %v2144
        %v2157 = vpack.c.bf16 %v2147, %v2146
        %v2158 = vpack.c.bf16 %v2149, %v2148
        %v2159 = vpack.c.bf16 %v2151, %v2150
        %2160 = vmatprep.subr.bf16.mxu0 0
        %2161 = vmatpush1.bf16.msra.mxu0 %v2159
        %2162 = vmatprep.subr.bf16.mxu0 0
        %2163 = vmatpush1.bf16.msra.mxu0 %v2158
        %2164 = vmatprep.subr.bf16.mxu0 0
        %2165 = vmatpush1.bf16.msra.mxu0 %v2157
        %2166 = vmatprep.subr.bf16.mxu0 0
        %2167 = vmatpush1.bf16.msra.mxu0 %v2156
        %2168 = vmatprep.subr.bf16.mxu0 0
        %2169 = vmatpush1.bf16.msra.mxu0 %v2155
        %2170 = vmatprep.subr.bf16.mxu0 0
        %2171 = vmatpush1.bf16.msra.mxu0 %v2154
        %2172 = vmatprep.subr.bf16.mxu0 0
        %2173 = vmatpush1.bf16.msra.mxu0 %v2153
        %2174 = vmatprep.subr.bf16.mxu0 0
        %2175 = vmatpush1.bf16.msra.mxu0 %v2152
        %2176 = vmatprep.subr.bf16.mxu0 0
        %2177 = vmatpush2.bf16.msra.mxu0 0
        %2178 = vmatprep.subr.bf16.mxu0 0
        %2179 = vmatpush2.bf16.msra.mxu0 0
        %2180 = vmatprep.subr.bf16.mxu0 0
        %2181 = vmatpush2.bf16.msra.mxu0 0
        %2182 = vmatprep.subr.bf16.mxu0 0
        %2183 = vmatpush2.bf16.msra.mxu0 0
        %2184 = vmatprep.subr.bf16.mxu0 0
        %2185 = vmatpush2.bf16.msra.mxu0 0
        %2186 = vmatprep.subr.bf16.mxu0 0
        %2187 = vmatpush2.bf16.msra.mxu0 0
        %2188 = vmatprep.subr.bf16.mxu0 0
        %2189 = vmatpush2.bf16.msra.mxu0 0
        %2190 = vmatprep.subr.bf16.mxu0 0
        %2191 = vmatpush2.bf16.msra.mxu0 0
        %2192 = vmatprep.mubr.bf16.mxu0 0
        %2193 = vmatmul.mubr.bf16.gmra.mxu0 %v1451
        %v2194 = vpop.f32.mrf.mxu0
        %v2195 = vadd.f32 0.0, %v2194
        %v2196 = vpop.f32.mrf.mxu0
        %v2197 = vpop.f32.mrf.mxu0
        %v2198 = vadd.f32 0.0, %v2197
        %v2199 = vpop.f32.mrf.mxu0
        %2200 = vdwg.mxu0
        %v2201 = vlaneseq
        %v2202 = vshrl.u32 %v2201, 7
        %v2203 = vsub.s32 7, %v2202
        %v2204 = vrot.slane %v566, %v2203
        %vm2205 = vcmp.eq.s32.totalorder %v551, %v2204
        %vm2206 = vcmp.eq.s32.totalorder %v552, %v2204
        %v2207 = vlaneseq
        %v2208 = vshrl.u32 %v2207, 7
        %v2209 = vsub.s32 7, %v2208
        %v2210 = vrot.slane %v558, %v2209
        %v2211 = vsel %vm2205, %v2210, 0.0
        %v2212 = vsel %vm2206, %v2210, 0.0
        %v2213 = vmul.f32 %v2195, %v2211
        %v2214 = vmul.f32 %v2198, %v2212
        %v2215 = vadd.f32 %v2114, %v2213
        %v2216 = vadd.f32 %v2115, %v2214
        %v2217 = vrot.slane %v2215, 4
        %v2218 = vadd.f32 %v2215, %v2217
        %v2219 = vrot.slane %v2218, 2
        %v2220 = vadd.f32 %v2218, %v2219
        %v2221 = vrot.slane %v2220, 1
        %v2222 = vadd.f32 %v2220, %v2221
        %v2223 = vrot.slane %v2216, 4
        %v2224 = vadd.f32 %v2216, %v2223
        %v2225 = vrot.slane %v2224, 2
        %v2226 = vadd.f32 %v2224, %v2225
        %v2227 = vrot.slane %v2226, 1
        %v2228 = vadd.f32 %v2226, %v2227
        %v2229 = vlaneseq
        %v2230 = vshrl.u32 %v2229, 7
        %v2231 = vsub.s32 0, %v2230
        %v2232 = vrot.slane %v563, %v2231
        %vm2233 = vcmp.eq.s32.totalorder %v535, %v2232
        %vm2234 = vcmp.eq.s32.totalorder %v536, %v2232
        %vm2235 = vcmp.eq.s32.totalorder %v537, %v2232
        %vm2236 = vcmp.eq.s32.totalorder %v538, %v2232
        %vm2237 = vcmp.eq.s32.totalorder %v539, %v2232
        %vm2238 = vcmp.eq.s32.totalorder %v540, %v2232
        %vm2239 = vcmp.eq.s32.totalorder %v541, %v2232
        %vm2240 = vcmp.eq.s32.totalorder %v542, %v2232
        %vm2241 = vcmp.eq.s32.totalorder %v543, %v2232
        %vm2242 = vcmp.eq.s32.totalorder %v544, %v2232
        %vm2243 = vcmp.eq.s32.totalorder %v545, %v2232
        %vm2244 = vcmp.eq.s32.totalorder %v546, %v2232
        %vm2245 = vcmp.eq.s32.totalorder %v547, %v2232
        %vm2246 = vcmp.eq.s32.totalorder %v548, %v2232
        %vm2247 = vcmp.eq.s32.totalorder %v549, %v2232
        %vm2248 = vcmp.eq.s32.totalorder %v550, %v2232
        %v2249 = vsel %vm2233, 1.0, 0.0
        %v2250 = vsel %vm2234, 1.0, 0.0
        %v2251 = vsel %vm2235, 1.0, 0.0
        %v2252 = vsel %vm2236, 1.0, 0.0
        %v2253 = vsel %vm2237, 1.0, 0.0
        %v2254 = vsel %vm2238, 1.0, 0.0
        %v2255 = vsel %vm2239, 1.0, 0.0
        %v2256 = vsel %vm2240, 1.0, 0.0
        %v2257 = vsel %vm2241, 1.0, 0.0
        %v2258 = vsel %vm2242, 1.0, 0.0
        %v2259 = vsel %vm2243, 1.0, 0.0
        %v2260 = vsel %vm2244, 1.0, 0.0
        %v2261 = vsel %vm2245, 1.0, 0.0
        %v2262 = vsel %vm2246, 1.0, 0.0
        %v2263 = vsel %vm2247, 1.0, 0.0
        %v2264 = vsel %vm2248, 1.0, 0.0
        %v2265 = vpack.c.bf16 %v2250, %v2249
        %v2266 = vpack.c.bf16 %v2252, %v2251
        %v2267 = vpack.c.bf16 %v2254, %v2253
        %v2268 = vpack.c.bf16 %v2256, %v2255
        %v2269 = vpack.c.bf16 %v2258, %v2257
        %v2270 = vpack.c.bf16 %v2260, %v2259
        %v2271 = vpack.c.bf16 %v2262, %v2261
        %v2272 = vpack.c.bf16 %v2264, %v2263
        %v2275 = vunpack.c.l.b16 %v573
        %v2276 = vunpack.c.l.b16 %v574
        %v2277 = vpack.c.b16 %v2276, %v2275
        %2279 = vmatprep.subr.bf16.mxu0 0
        %2280 = vmatpush1.bf16.msra.mxu0 %v2272
        %2281 = vmatprep.subr.bf16.mxu0 0
        %2282 = vmatpush1.bf16.msra.mxu0 %v2271
        %2283 = vmatprep.subr.bf16.mxu0 0
        %2284 = vmatpush1.bf16.msra.mxu0 %v2270
        %2285 = vmatprep.subr.bf16.mxu0 0
        %2286 = vmatpush1.bf16.msra.mxu0 %v2269
        %2287 = vmatprep.subr.bf16.mxu0 0
        %2288 = vmatpush1.bf16.msra.mxu0 %v2268
        %2289 = vmatprep.subr.bf16.mxu0 0
        %2290 = vmatpush1.bf16.msra.mxu0 %v2267
        %2291 = vmatprep.subr.bf16.mxu0 0
        %2292 = vmatpush1.bf16.msra.mxu0 %v2266
        %2293 = vmatprep.subr.bf16.mxu0 0
        %2294 = vmatpush1.bf16.msra.mxu0 %v2265
        %2295 = vmatprep.subr.bf16.mxu0 0
        %2296 = vmatpush2.bf16.msra.mxu0 0
        %2297 = vmatprep.subr.bf16.mxu0 0
        %2298 = vmatpush2.bf16.msra.mxu0 0
        %2299 = vmatprep.subr.bf16.mxu0 0
        %2300 = vmatpush2.bf16.msra.mxu0 0
        %2301 = vmatprep.subr.bf16.mxu0 0
        %2302 = vmatpush2.bf16.msra.mxu0 0
        %2303 = vmatprep.subr.bf16.mxu0 0
        %2304 = vmatpush2.bf16.msra.mxu0 0
        %2305 = vmatprep.subr.bf16.mxu0 0
        %2306 = vmatpush2.bf16.msra.mxu0 0
        %2307 = vmatprep.subr.bf16.mxu0 0
        %2308 = vmatpush2.bf16.msra.mxu0 0
        %2309 = vmatprep.subr.bf16.mxu0 0
        %2310 = vmatpush2.bf16.msra.mxu0 0
        %2311 = vmatprep.mubr.bf16.mxu0 0
        %2312 = vmatmul.mubr.bf16.gmra.mxu0 %v2277
        %v2313 = vpop.f32.mrf.mxu0
        %v2314 = vadd.f32 0.0, %v2313
        %v2315 = vpop.f32.mrf.mxu0
        %v2316 = vpop.f32.mrf.mxu0
        %v2317 = vadd.f32 0.0, %v2316
        %v2318 = vpop.f32.mrf.mxu0
        %2319 = vdwg.mxu0
        %v2320 = vlaneseq
        %v2321 = vshrl.u32 %v2320, 7
        %v2322 = vsub.s32 0, %v2321
        %v2323 = vrot.slane %v567, %v2322
        %vm2324 = vcmp.eq.s32.totalorder %v551, %v2323
        %vm2325 = vcmp.eq.s32.totalorder %v552, %v2323
        %v2326 = vlaneseq
        %v2327 = vshrl.u32 %v2326, 7
        %v2328 = vsub.s32 0, %v2327
        %v2329 = vrot.slane %v559, %v2328
        %v2330 = vsel %vm2324, %v2329, 0.0
        %v2331 = vsel %vm2325, %v2329, 0.0
        %v2332 = vmul.f32 %v2314, %v2330
        %v2333 = vmul.f32 %v2317, %v2331
        %v2334 = vadd.f32 %v2332, 0.0
        %v2335 = vadd.f32 %v2333, 0.0
        %v2336 = vlaneseq
        %v2337 = vshrl.u32 %v2336, 7
        %v2338 = vsub.s32 1, %v2337
        %v2339 = vrot.slane %v563, %v2338
        %vm2340 = vcmp.eq.s32.totalorder %v535, %v2339
        %vm2341 = vcmp.eq.s32.totalorder %v536, %v2339
        %vm2342 = vcmp.eq.s32.totalorder %v537, %v2339
        %vm2343 = vcmp.eq.s32.totalorder %v538, %v2339
        %vm2344 = vcmp.eq.s32.totalorder %v539, %v2339
        %vm2345 = vcmp.eq.s32.totalorder %v540, %v2339
        %vm2346 = vcmp.eq.s32.totalorder %v541, %v2339
        %vm2347 = vcmp.eq.s32.totalorder %v542, %v2339
        %vm2348 = vcmp.eq.s32.totalorder %v543, %v2339
        %vm2349 = vcmp.eq.s32.totalorder %v544, %v2339
        %vm2350 = vcmp.eq.s32.totalorder %v545, %v2339
        %vm2351 = vcmp.eq.s32.totalorder %v546, %v2339
        %vm2352 = vcmp.eq.s32.totalorder %v547, %v2339
        %vm2353 = vcmp.eq.s32.totalorder %v548, %v2339
        %vm2354 = vcmp.eq.s32.totalorder %v549, %v2339
        %vm2355 = vcmp.eq.s32.totalorder %v550, %v2339
        %v2356 = vsel %vm2340, 1.0, 0.0
        %v2357 = vsel %vm2341, 1.0, 0.0
        %v2358 = vsel %vm2342, 1.0, 0.0
        %v2359 = vsel %vm2343, 1.0, 0.0
        %v2360 = vsel %vm2344, 1.0, 0.0
        %v2361 = vsel %vm2345, 1.0, 0.0
        %v2362 = vsel %vm2346, 1.0, 0.0
        %v2363 = vsel %vm2347, 1.0, 0.0
        %v2364 = vsel %vm2348, 1.0, 0.0
        %v2365 = vsel %vm2349, 1.0, 0.0
        %v2366 = vsel %vm2350, 1.0, 0.0
        %v2367 = vsel %vm2351, 1.0, 0.0
        %v2368 = vsel %vm2352, 1.0, 0.0
        %v2369 = vsel %vm2353, 1.0, 0.0
        %v2370 = vsel %vm2354, 1.0, 0.0
        %v2371 = vsel %vm2355, 1.0, 0.0
        %v2372 = vpack.c.bf16 %v2357, %v2356
        %v2373 = vpack.c.bf16 %v2359, %v2358
        %v2374 = vpack.c.bf16 %v2361, %v2360
        %v2375 = vpack.c.bf16 %v2363, %v2362
        %v2376 = vpack.c.bf16 %v2365, %v2364
        %v2377 = vpack.c.bf16 %v2367, %v2366
        %v2378 = vpack.c.bf16 %v2369, %v2368
        %v2379 = vpack.c.bf16 %v2371, %v2370
        %2380 = vmatprep.subr.bf16.mxu0 0
        %2381 = vmatpush1.bf16.msra.mxu0 %v2379
        %2382 = vmatprep.subr.bf16.mxu0 0
        %2383 = vmatpush1.bf16.msra.mxu0 %v2378
        %2384 = vmatprep.subr.bf16.mxu0 0
        %2385 = vmatpush1.bf16.msra.mxu0 %v2377
        %2386 = vmatprep.subr.bf16.mxu0 0
        %2387 = vmatpush1.bf16.msra.mxu0 %v2376
        %2388 = vmatprep.subr.bf16.mxu0 0
        %2389 = vmatpush1.bf16.msra.mxu0 %v2375
        %2390 = vmatprep.subr.bf16.mxu0 0
        %2391 = vmatpush1.bf16.msra.mxu0 %v2374
        %2392 = vmatprep.subr.bf16.mxu0 0
        %2393 = vmatpush1.bf16.msra.mxu0 %v2373
        %2394 = vmatprep.subr.bf16.mxu0 0
        %2395 = vmatpush1.bf16.msra.mxu0 %v2372
        %2396 = vmatprep.subr.bf16.mxu0 0
        %2397 = vmatpush2.bf16.msra.mxu0 0
        %2398 = vmatprep.subr.bf16.mxu0 0
        %2399 = vmatpush2.bf16.msra.mxu0 0
        %2400 = vmatprep.subr.bf16.mxu0 0
        %2401 = vmatpush2.bf16.msra.mxu0 0
        %2402 = vmatprep.subr.bf16.mxu0 0
        %2403 = vmatpush2.bf16.msra.mxu0 0
        %2404 = vmatprep.subr.bf16.mxu0 0
        %2405 = vmatpush2.bf16.msra.mxu0 0
        %2406 = vmatprep.subr.bf16.mxu0 0
        %2407 = vmatpush2.bf16.msra.mxu0 0
        %2408 = vmatprep.subr.bf16.mxu0 0
        %2409 = vmatpush2.bf16.msra.mxu0 0
        %2410 = vmatprep.subr.bf16.mxu0 0
        %2411 = vmatpush2.bf16.msra.mxu0 0
        %2412 = vmatprep.mubr.bf16.mxu0 0
        %2413 = vmatmul.mubr.bf16.gmra.mxu0 %v2277
        %v2414 = vpop.f32.mrf.mxu0
        %v2415 = vadd.f32 0.0, %v2414
        %v2416 = vpop.f32.mrf.mxu0
        %v2417 = vpop.f32.mrf.mxu0
        %v2418 = vadd.f32 0.0, %v2417
        %v2419 = vpop.f32.mrf.mxu0
        %2420 = vdwg.mxu0
        %v2421 = vlaneseq
        %v2422 = vshrl.u32 %v2421, 7
        %v2423 = vsub.s32 1, %v2422
        %v2424 = vrot.slane %v567, %v2423
        %vm2425 = vcmp.eq.s32.totalorder %v551, %v2424
        %vm2426 = vcmp.eq.s32.totalorder %v552, %v2424
        %v2427 = vlaneseq
        %v2428 = vshrl.u32 %v2427, 7
        %v2429 = vsub.s32 1, %v2428
        %v2430 = vrot.slane %v559, %v2429
        %v2431 = vsel %vm2425, %v2430, 0.0
        %v2432 = vsel %vm2426, %v2430, 0.0
        %v2433 = vmul.f32 %v2415, %v2431
        %v2434 = vmul.f32 %v2418, %v2432
        %v2435 = vadd.f32 %v2334, %v2433
        %v2436 = vadd.f32 %v2335, %v2434
        %v2437 = vlaneseq
        %v2438 = vshrl.u32 %v2437, 7
        %v2439 = vsub.s32 2, %v2438
        %v2440 = vrot.slane %v563, %v2439
        %vm2441 = vcmp.eq.s32.totalorder %v535, %v2440
        %vm2442 = vcmp.eq.s32.totalorder %v536, %v2440
        %vm2443 = vcmp.eq.s32.totalorder %v537, %v2440
        %vm2444 = vcmp.eq.s32.totalorder %v538, %v2440
        %vm2445 = vcmp.eq.s32.totalorder %v539, %v2440
        %vm2446 = vcmp.eq.s32.totalorder %v540, %v2440
        %vm2447 = vcmp.eq.s32.totalorder %v541, %v2440
        %vm2448 = vcmp.eq.s32.totalorder %v542, %v2440
        %vm2449 = vcmp.eq.s32.totalorder %v543, %v2440
        %vm2450 = vcmp.eq.s32.totalorder %v544, %v2440
        %vm2451 = vcmp.eq.s32.totalorder %v545, %v2440
        %vm2452 = vcmp.eq.s32.totalorder %v546, %v2440
        %vm2453 = vcmp.eq.s32.totalorder %v547, %v2440
        %vm2454 = vcmp.eq.s32.totalorder %v548, %v2440
        %vm2455 = vcmp.eq.s32.totalorder %v549, %v2440
        %vm2456 = vcmp.eq.s32.totalorder %v550, %v2440
        %v2457 = vsel %vm2441, 1.0, 0.0
        %v2458 = vsel %vm2442, 1.0, 0.0
        %v2459 = vsel %vm2443, 1.0, 0.0
        %v2460 = vsel %vm2444, 1.0, 0.0
        %v2461 = vsel %vm2445, 1.0, 0.0
        %v2462 = vsel %vm2446, 1.0, 0.0
        %v2463 = vsel %vm2447, 1.0, 0.0
        %v2464 = vsel %vm2448, 1.0, 0.0
        %v2465 = vsel %vm2449, 1.0, 0.0
        %v2466 = vsel %vm2450, 1.0, 0.0
        %v2467 = vsel %vm2451, 1.0, 0.0
        %v2468 = vsel %vm2452, 1.0, 0.0
        %v2469 = vsel %vm2453, 1.0, 0.0
        %v2470 = vsel %vm2454, 1.0, 0.0
        %v2471 = vsel %vm2455, 1.0, 0.0
        %v2472 = vsel %vm2456, 1.0, 0.0
        %v2473 = vpack.c.bf16 %v2458, %v2457
        %v2474 = vpack.c.bf16 %v2460, %v2459
        %v2475 = vpack.c.bf16 %v2462, %v2461
        %v2476 = vpack.c.bf16 %v2464, %v2463
        %v2477 = vpack.c.bf16 %v2466, %v2465
        %v2478 = vpack.c.bf16 %v2468, %v2467
        %v2479 = vpack.c.bf16 %v2470, %v2469
        %v2480 = vpack.c.bf16 %v2472, %v2471
        %2481 = vmatprep.subr.bf16.mxu0 0
        %2482 = vmatpush1.bf16.msra.mxu0 %v2480
        %2483 = vmatprep.subr.bf16.mxu0 0
        %2484 = vmatpush1.bf16.msra.mxu0 %v2479
        %2485 = vmatprep.subr.bf16.mxu0 0
        %2486 = vmatpush1.bf16.msra.mxu0 %v2478
        %2487 = vmatprep.subr.bf16.mxu0 0
        %2488 = vmatpush1.bf16.msra.mxu0 %v2477
        %2489 = vmatprep.subr.bf16.mxu0 0
        %2490 = vmatpush1.bf16.msra.mxu0 %v2476
        %2491 = vmatprep.subr.bf16.mxu0 0
        %2492 = vmatpush1.bf16.msra.mxu0 %v2475
        %2493 = vmatprep.subr.bf16.mxu0 0
        %2494 = vmatpush1.bf16.msra.mxu0 %v2474
        %2495 = vmatprep.subr.bf16.mxu0 0
        %2496 = vmatpush1.bf16.msra.mxu0 %v2473
        %2497 = vmatprep.subr.bf16.mxu0 0
        %2498 = vmatpush2.bf16.msra.mxu0 0
        %2499 = vmatprep.subr.bf16.mxu0 0
        %2500 = vmatpush2.bf16.msra.mxu0 0
        %2501 = vmatprep.subr.bf16.mxu0 0
        %2502 = vmatpush2.bf16.msra.mxu0 0
        %2503 = vmatprep.subr.bf16.mxu0 0
        %2504 = vmatpush2.bf16.msra.mxu0 0
        %2505 = vmatprep.subr.bf16.mxu0 0
        %2506 = vmatpush2.bf16.msra.mxu0 0
        %2507 = vmatprep.subr.bf16.mxu0 0
        %2508 = vmatpush2.bf16.msra.mxu0 0
        %2509 = vmatprep.subr.bf16.mxu0 0
        %2510 = vmatpush2.bf16.msra.mxu0 0
        %2511 = vmatprep.subr.bf16.mxu0 0
        %2512 = vmatpush2.bf16.msra.mxu0 0
        %2513 = vmatprep.mubr.bf16.mxu0 0
        %2514 = vmatmul.mubr.bf16.gmra.mxu0 %v2277
        %v2515 = vpop.f32.mrf.mxu0
        %v2516 = vadd.f32 0.0, %v2515
        %v2517 = vpop.f32.mrf.mxu0
        %v2518 = vpop.f32.mrf.mxu0
        %v2519 = vadd.f32 0.0, %v2518
        %v2520 = vpop.f32.mrf.mxu0
        %2521 = vdwg.mxu0
        %v2522 = vlaneseq
        %v2523 = vshrl.u32 %v2522, 7
        %v2524 = vsub.s32 2, %v2523
        %v2525 = vrot.slane %v567, %v2524
        %vm2526 = vcmp.eq.s32.totalorder %v551, %v2525
        %vm2527 = vcmp.eq.s32.totalorder %v552, %v2525
        %v2528 = vlaneseq
        %v2529 = vshrl.u32 %v2528, 7
        %v2530 = vsub.s32 2, %v2529
        %v2531 = vrot.slane %v559, %v2530
        %v2532 = vsel %vm2526, %v2531, 0.0
        %v2533 = vsel %vm2527, %v2531, 0.0
        %v2534 = vmul.f32 %v2516, %v2532
        %v2535 = vmul.f32 %v2519, %v2533
        %v2536 = vadd.f32 %v2435, %v2534
        %v2537 = vadd.f32 %v2436, %v2535
        %v2538 = vlaneseq
        %v2539 = vshrl.u32 %v2538, 7
        %v2540 = vsub.s32 3, %v2539
        %v2541 = vrot.slane %v563, %v2540
        %vm2542 = vcmp.eq.s32.totalorder %v535, %v2541
        %vm2543 = vcmp.eq.s32.totalorder %v536, %v2541
        %vm2544 = vcmp.eq.s32.totalorder %v537, %v2541
        %vm2545 = vcmp.eq.s32.totalorder %v538, %v2541
        %vm2546 = vcmp.eq.s32.totalorder %v539, %v2541
        %vm2547 = vcmp.eq.s32.totalorder %v540, %v2541
        %vm2548 = vcmp.eq.s32.totalorder %v541, %v2541
        %vm2549 = vcmp.eq.s32.totalorder %v542, %v2541
        %vm2550 = vcmp.eq.s32.totalorder %v543, %v2541
        %vm2551 = vcmp.eq.s32.totalorder %v544, %v2541
        %vm2552 = vcmp.eq.s32.totalorder %v545, %v2541
        %vm2553 = vcmp.eq.s32.totalorder %v546, %v2541
        %vm2554 = vcmp.eq.s32.totalorder %v547, %v2541
        %vm2555 = vcmp.eq.s32.totalorder %v548, %v2541
        %vm2556 = vcmp.eq.s32.totalorder %v549, %v2541
        %vm2557 = vcmp.eq.s32.totalorder %v550, %v2541
        %v2558 = vsel %vm2542, 1.0, 0.0
        %v2559 = vsel %vm2543, 1.0, 0.0
        %v2560 = vsel %vm2544, 1.0, 0.0
        %v2561 = vsel %vm2545, 1.0, 0.0
        %v2562 = vsel %vm2546, 1.0, 0.0
        %v2563 = vsel %vm2547, 1.0, 0.0
        %v2564 = vsel %vm2548, 1.0, 0.0
        %v2565 = vsel %vm2549, 1.0, 0.0
        %v2566 = vsel %vm2550, 1.0, 0.0
        %v2567 = vsel %vm2551, 1.0, 0.0
        %v2568 = vsel %vm2552, 1.0, 0.0
        %v2569 = vsel %vm2553, 1.0, 0.0
        %v2570 = vsel %vm2554, 1.0, 0.0
        %v2571 = vsel %vm2555, 1.0, 0.0
        %v2572 = vsel %vm2556, 1.0, 0.0
        %v2573 = vsel %vm2557, 1.0, 0.0
        %v2574 = vpack.c.bf16 %v2559, %v2558
        %v2575 = vpack.c.bf16 %v2561, %v2560
        %v2576 = vpack.c.bf16 %v2563, %v2562
        %v2577 = vpack.c.bf16 %v2565, %v2564
        %v2578 = vpack.c.bf16 %v2567, %v2566
        %v2579 = vpack.c.bf16 %v2569, %v2568
        %v2580 = vpack.c.bf16 %v2571, %v2570
        %v2581 = vpack.c.bf16 %v2573, %v2572
        %2582 = vmatprep.subr.bf16.mxu0 0
        %2583 = vmatpush1.bf16.msra.mxu0 %v2581
        %2584 = vmatprep.subr.bf16.mxu0 0
        %2585 = vmatpush1.bf16.msra.mxu0 %v2580
        %2586 = vmatprep.subr.bf16.mxu0 0
        %2587 = vmatpush1.bf16.msra.mxu0 %v2579
        %2588 = vmatprep.subr.bf16.mxu0 0
        %2589 = vmatpush1.bf16.msra.mxu0 %v2578
        %2590 = vmatprep.subr.bf16.mxu0 0
        %2591 = vmatpush1.bf16.msra.mxu0 %v2577
        %2592 = vmatprep.subr.bf16.mxu0 0
        %2593 = vmatpush1.bf16.msra.mxu0 %v2576
        %2594 = vmatprep.subr.bf16.mxu0 0
        %2595 = vmatpush1.bf16.msra.mxu0 %v2575
        %2596 = vmatprep.subr.bf16.mxu0 0
        %2597 = vmatpush1.bf16.msra.mxu0 %v2574
        %2598 = vmatprep.subr.bf16.mxu0 0
        %2599 = vmatpush2.bf16.msra.mxu0 0
        %2600 = vmatprep.subr.bf16.mxu0 0
        %2601 = vmatpush2.bf16.msra.mxu0 0
        %2602 = vmatprep.subr.bf16.mxu0 0
        %2603 = vmatpush2.bf16.msra.mxu0 0
        %2604 = vmatprep.subr.bf16.mxu0 0
        %2605 = vmatpush2.bf16.msra.mxu0 0
        %2606 = vmatprep.subr.bf16.mxu0 0
        %2607 = vmatpush2.bf16.msra.mxu0 0
        %2608 = vmatprep.subr.bf16.mxu0 0
        %2609 = vmatpush2.bf16.msra.mxu0 0
        %2610 = vmatprep.subr.bf16.mxu0 0
        %2611 = vmatpush2.bf16.msra.mxu0 0
        %2612 = vmatprep.subr.bf16.mxu0 0
        %2613 = vmatpush2.bf16.msra.mxu0 0
        %2614 = vmatprep.mubr.bf16.mxu0 0
        %2615 = vmatmul.mubr.bf16.gmra.mxu0 %v2277
        %v2616 = vpop.f32.mrf.mxu0
        %v2617 = vadd.f32 0.0, %v2616
        %v2618 = vpop.f32.mrf.mxu0
        %v2619 = vpop.f32.mrf.mxu0
        %v2620 = vadd.f32 0.0, %v2619
        %v2621 = vpop.f32.mrf.mxu0
        %2622 = vdwg.mxu0
        %v2623 = vlaneseq
        %v2624 = vshrl.u32 %v2623, 7
        %v2625 = vsub.s32 3, %v2624
        %v2626 = vrot.slane %v567, %v2625
        %vm2627 = vcmp.eq.s32.totalorder %v551, %v2626
        %vm2628 = vcmp.eq.s32.totalorder %v552, %v2626
        %v2629 = vlaneseq
        %v2630 = vshrl.u32 %v2629, 7
        %v2631 = vsub.s32 3, %v2630
        %v2632 = vrot.slane %v559, %v2631
        %v2633 = vsel %vm2627, %v2632, 0.0
        %v2634 = vsel %vm2628, %v2632, 0.0
        %v2635 = vmul.f32 %v2617, %v2633
        %v2636 = vmul.f32 %v2620, %v2634
        %v2637 = vadd.f32 %v2536, %v2635
        %v2638 = vadd.f32 %v2537, %v2636
        %v2639 = vlaneseq
        %v2640 = vshrl.u32 %v2639, 7
        %v2641 = vsub.s32 4, %v2640
        %v2642 = vrot.slane %v563, %v2641
        %vm2643 = vcmp.eq.s32.totalorder %v535, %v2642
        %vm2644 = vcmp.eq.s32.totalorder %v536, %v2642
        %vm2645 = vcmp.eq.s32.totalorder %v537, %v2642
        %vm2646 = vcmp.eq.s32.totalorder %v538, %v2642
        %vm2647 = vcmp.eq.s32.totalorder %v539, %v2642
        %vm2648 = vcmp.eq.s32.totalorder %v540, %v2642
        %vm2649 = vcmp.eq.s32.totalorder %v541, %v2642
        %vm2650 = vcmp.eq.s32.totalorder %v542, %v2642
        %vm2651 = vcmp.eq.s32.totalorder %v543, %v2642
        %vm2652 = vcmp.eq.s32.totalorder %v544, %v2642
        %vm2653 = vcmp.eq.s32.totalorder %v545, %v2642
        %vm2654 = vcmp.eq.s32.totalorder %v546, %v2642
        %vm2655 = vcmp.eq.s32.totalorder %v547, %v2642
        %vm2656 = vcmp.eq.s32.totalorder %v548, %v2642
        %vm2657 = vcmp.eq.s32.totalorder %v549, %v2642
        %vm2658 = vcmp.eq.s32.totalorder %v550, %v2642
        %v2659 = vsel %vm2643, 1.0, 0.0
        %v2660 = vsel %vm2644, 1.0, 0.0
        %v2661 = vsel %vm2645, 1.0, 0.0
        %v2662 = vsel %vm2646, 1.0, 0.0
        %v2663 = vsel %vm2647, 1.0, 0.0
        %v2664 = vsel %vm2648, 1.0, 0.0
        %v2665 = vsel %vm2649, 1.0, 0.0
        %v2666 = vsel %vm2650, 1.0, 0.0
        %v2667 = vsel %vm2651, 1.0, 0.0
        %v2668 = vsel %vm2652, 1.0, 0.0
        %v2669 = vsel %vm2653, 1.0, 0.0
        %v2670 = vsel %vm2654, 1.0, 0.0
        %v2671 = vsel %vm2655, 1.0, 0.0
        %v2672 = vsel %vm2656, 1.0, 0.0
        %v2673 = vsel %vm2657, 1.0, 0.0
        %v2674 = vsel %vm2658, 1.0, 0.0
        %v2675 = vpack.c.bf16 %v2660, %v2659
        %v2676 = vpack.c.bf16 %v2662, %v2661
        %v2677 = vpack.c.bf16 %v2664, %v2663
        %v2678 = vpack.c.bf16 %v2666, %v2665
        %v2679 = vpack.c.bf16 %v2668, %v2667
        %v2680 = vpack.c.bf16 %v2670, %v2669
        %v2681 = vpack.c.bf16 %v2672, %v2671
        %v2682 = vpack.c.bf16 %v2674, %v2673
        %2683 = vmatprep.subr.bf16.mxu0 0
        %2684 = vmatpush1.bf16.msra.mxu0 %v2682
        %2685 = vmatprep.subr.bf16.mxu0 0
        %2686 = vmatpush1.bf16.msra.mxu0 %v2681
        %2687 = vmatprep.subr.bf16.mxu0 0
        %2688 = vmatpush1.bf16.msra.mxu0 %v2680
        %2689 = vmatprep.subr.bf16.mxu0 0
        %2690 = vmatpush1.bf16.msra.mxu0 %v2679
        %2691 = vmatprep.subr.bf16.mxu0 0
        %2692 = vmatpush1.bf16.msra.mxu0 %v2678
        %2693 = vmatprep.subr.bf16.mxu0 0
        %2694 = vmatpush1.bf16.msra.mxu0 %v2677
        %2695 = vmatprep.subr.bf16.mxu0 0
        %2696 = vmatpush1.bf16.msra.mxu0 %v2676
        %2697 = vmatprep.subr.bf16.mxu0 0
        %2698 = vmatpush1.bf16.msra.mxu0 %v2675
        %2699 = vmatprep.subr.bf16.mxu0 0
        %2700 = vmatpush2.bf16.msra.mxu0 0
        %2701 = vmatprep.subr.bf16.mxu0 0
        %2702 = vmatpush2.bf16.msra.mxu0 0
        %2703 = vmatprep.subr.bf16.mxu0 0
        %2704 = vmatpush2.bf16.msra.mxu0 0
        %2705 = vmatprep.subr.bf16.mxu0 0
        %2706 = vmatpush2.bf16.msra.mxu0 0
        %2707 = vmatprep.subr.bf16.mxu0 0
        %2708 = vmatpush2.bf16.msra.mxu0 0
        %2709 = vmatprep.subr.bf16.mxu0 0
        %2710 = vmatpush2.bf16.msra.mxu0 0
        %2711 = vmatprep.subr.bf16.mxu0 0
        %2712 = vmatpush2.bf16.msra.mxu0 0
        %2713 = vmatprep.subr.bf16.mxu0 0
        %2714 = vmatpush2.bf16.msra.mxu0 0
        %2715 = vmatprep.mubr.bf16.mxu0 0
        %2716 = vmatmul.mubr.bf16.gmra.mxu0 %v2277
        %v2717 = vpop.f32.mrf.mxu0
        %v2718 = vadd.f32 0.0, %v2717
        %v2719 = vpop.f32.mrf.mxu0
        %v2720 = vpop.f32.mrf.mxu0
        %v2721 = vadd.f32 0.0, %v2720
        %v2722 = vpop.f32.mrf.mxu0
        %2723 = vdwg.mxu0
        %v2724 = vlaneseq
        %v2725 = vshrl.u32 %v2724, 7
        %v2726 = vsub.s32 4, %v2725
        %v2727 = vrot.slane %v567, %v2726
        %vm2728 = vcmp.eq.s32.totalorder %v551, %v2727
        %vm2729 = vcmp.eq.s32.totalorder %v552, %v2727
        %v2730 = vlaneseq
        %v2731 = vshrl.u32 %v2730, 7
        %v2732 = vsub.s32 4, %v2731
        %v2733 = vrot.slane %v559, %v2732
        %v2734 = vsel %vm2728, %v2733, 0.0
        %v2735 = vsel %vm2729, %v2733, 0.0
        %v2736 = vmul.f32 %v2718, %v2734
        %v2737 = vmul.f32 %v2721, %v2735
        %v2738 = vadd.f32 %v2637, %v2736
        %v2739 = vadd.f32 %v2638, %v2737
        %v2740 = vlaneseq
        %v2741 = vshrl.u32 %v2740, 7
        %v2742 = vsub.s32 5, %v2741
        %v2743 = vrot.slane %v563, %v2742
        %vm2744 = vcmp.eq.s32.totalorder %v535, %v2743
        %vm2745 = vcmp.eq.s32.totalorder %v536, %v2743
        %vm2746 = vcmp.eq.s32.totalorder %v537, %v2743
        %vm2747 = vcmp.eq.s32.totalorder %v538, %v2743
        %vm2748 = vcmp.eq.s32.totalorder %v539, %v2743
        %vm2749 = vcmp.eq.s32.totalorder %v540, %v2743
        %vm2750 = vcmp.eq.s32.totalorder %v541, %v2743
        %vm2751 = vcmp.eq.s32.totalorder %v542, %v2743
        %vm2752 = vcmp.eq.s32.totalorder %v543, %v2743
        %vm2753 = vcmp.eq.s32.totalorder %v544, %v2743
        %vm2754 = vcmp.eq.s32.totalorder %v545, %v2743
        %vm2755 = vcmp.eq.s32.totalorder %v546, %v2743
        %vm2756 = vcmp.eq.s32.totalorder %v547, %v2743
        %vm2757 = vcmp.eq.s32.totalorder %v548, %v2743
        %vm2758 = vcmp.eq.s32.totalorder %v549, %v2743
        %vm2759 = vcmp.eq.s32.totalorder %v550, %v2743
        %v2760 = vsel %vm2744, 1.0, 0.0
        %v2761 = vsel %vm2745, 1.0, 0.0
        %v2762 = vsel %vm2746, 1.0, 0.0
        %v2763 = vsel %vm2747, 1.0, 0.0
        %v2764 = vsel %vm2748, 1.0, 0.0
        %v2765 = vsel %vm2749, 1.0, 0.0
        %v2766 = vsel %vm2750, 1.0, 0.0
        %v2767 = vsel %vm2751, 1.0, 0.0
        %v2768 = vsel %vm2752, 1.0, 0.0
        %v2769 = vsel %vm2753, 1.0, 0.0
        %v2770 = vsel %vm2754, 1.0, 0.0
        %v2771 = vsel %vm2755, 1.0, 0.0
        %v2772 = vsel %vm2756, 1.0, 0.0
        %v2773 = vsel %vm2757, 1.0, 0.0
        %v2774 = vsel %vm2758, 1.0, 0.0
        %v2775 = vsel %vm2759, 1.0, 0.0
        %v2776 = vpack.c.bf16 %v2761, %v2760
        %v2777 = vpack.c.bf16 %v2763, %v2762
        %v2778 = vpack.c.bf16 %v2765, %v2764
        %v2779 = vpack.c.bf16 %v2767, %v2766
        %v2780 = vpack.c.bf16 %v2769, %v2768
        %v2781 = vpack.c.bf16 %v2771, %v2770
        %v2782 = vpack.c.bf16 %v2773, %v2772
        %v2783 = vpack.c.bf16 %v2775, %v2774
        %2784 = vmatprep.subr.bf16.mxu0 0
        %2785 = vmatpush1.bf16.msra.mxu0 %v2783
        %2786 = vmatprep.subr.bf16.mxu0 0
        %2787 = vmatpush1.bf16.msra.mxu0 %v2782
        %2788 = vmatprep.subr.bf16.mxu0 0
        %2789 = vmatpush1.bf16.msra.mxu0 %v2781
        %2790 = vmatprep.subr.bf16.mxu0 0
        %2791 = vmatpush1.bf16.msra.mxu0 %v2780
        %2792 = vmatprep.subr.bf16.mxu0 0
        %2793 = vmatpush1.bf16.msra.mxu0 %v2779
        %2794 = vmatprep.subr.bf16.mxu0 0
        %2795 = vmatpush1.bf16.msra.mxu0 %v2778
        %2796 = vmatprep.subr.bf16.mxu0 0
        %2797 = vmatpush1.bf16.msra.mxu0 %v2777
        %2798 = vmatprep.subr.bf16.mxu0 0
        %2799 = vmatpush1.bf16.msra.mxu0 %v2776
        %2800 = vmatprep.subr.bf16.mxu0 0
        %2801 = vmatpush2.bf16.msra.mxu0 0
        %2802 = vmatprep.subr.bf16.mxu0 0
        %2803 = vmatpush2.bf16.msra.mxu0 0
        %2804 = vmatprep.subr.bf16.mxu0 0
        %2805 = vmatpush2.bf16.msra.mxu0 0
        %2806 = vmatprep.subr.bf16.mxu0 0
        %2807 = vmatpush2.bf16.msra.mxu0 0
        %2808 = vmatprep.subr.bf16.mxu0 0
        %2809 = vmatpush2.bf16.msra.mxu0 0
        %2810 = vmatprep.subr.bf16.mxu0 0
        %2811 = vmatpush2.bf16.msra.mxu0 0
        %2812 = vmatprep.subr.bf16.mxu0 0
        %2813 = vmatpush2.bf16.msra.mxu0 0
        %2814 = vmatprep.subr.bf16.mxu0 0
        %2815 = vmatpush2.bf16.msra.mxu0 0
        %2816 = vmatprep.mubr.bf16.mxu0 0
        %2817 = vmatmul.mubr.bf16.gmra.mxu0 %v2277
        %v2818 = vpop.f32.mrf.mxu0
        %v2819 = vadd.f32 0.0, %v2818
        %v2820 = vpop.f32.mrf.mxu0
        %v2821 = vpop.f32.mrf.mxu0
        %v2822 = vadd.f32 0.0, %v2821
        %v2823 = vpop.f32.mrf.mxu0
        %2824 = vdwg.mxu0
        %v2825 = vlaneseq
        %v2826 = vshrl.u32 %v2825, 7
        %v2827 = vsub.s32 5, %v2826
        %v2828 = vrot.slane %v567, %v2827
        %vm2829 = vcmp.eq.s32.totalorder %v551, %v2828
        %vm2830 = vcmp.eq.s32.totalorder %v552, %v2828
        %v2831 = vlaneseq
        %v2832 = vshrl.u32 %v2831, 7
        %v2833 = vsub.s32 5, %v2832
        %v2834 = vrot.slane %v559, %v2833
        %v2835 = vsel %vm2829, %v2834, 0.0
        %v2836 = vsel %vm2830, %v2834, 0.0
        %v2837 = vmul.f32 %v2819, %v2835
        %v2838 = vmul.f32 %v2822, %v2836
        %v2839 = vadd.f32 %v2738, %v2837
        %v2840 = vadd.f32 %v2739, %v2838
        %v2841 = vlaneseq
        %v2842 = vshrl.u32 %v2841, 7
        %v2843 = vsub.s32 6, %v2842
        %v2844 = vrot.slane %v563, %v2843
        %vm2845 = vcmp.eq.s32.totalorder %v535, %v2844
        %vm2846 = vcmp.eq.s32.totalorder %v536, %v2844
        %vm2847 = vcmp.eq.s32.totalorder %v537, %v2844
        %vm2848 = vcmp.eq.s32.totalorder %v538, %v2844
        %vm2849 = vcmp.eq.s32.totalorder %v539, %v2844
        %vm2850 = vcmp.eq.s32.totalorder %v540, %v2844
        %vm2851 = vcmp.eq.s32.totalorder %v541, %v2844
        %vm2852 = vcmp.eq.s32.totalorder %v542, %v2844
        %vm2853 = vcmp.eq.s32.totalorder %v543, %v2844
        %vm2854 = vcmp.eq.s32.totalorder %v544, %v2844
        %vm2855 = vcmp.eq.s32.totalorder %v545, %v2844
        %vm2856 = vcmp.eq.s32.totalorder %v546, %v2844
        %vm2857 = vcmp.eq.s32.totalorder %v547, %v2844
        %vm2858 = vcmp.eq.s32.totalorder %v548, %v2844
        %vm2859 = vcmp.eq.s32.totalorder %v549, %v2844
        %vm2860 = vcmp.eq.s32.totalorder %v550, %v2844
        %v2861 = vsel %vm2845, 1.0, 0.0
        %v2862 = vsel %vm2846, 1.0, 0.0
        %v2863 = vsel %vm2847, 1.0, 0.0
        %v2864 = vsel %vm2848, 1.0, 0.0
        %v2865 = vsel %vm2849, 1.0, 0.0
        %v2866 = vsel %vm2850, 1.0, 0.0
        %v2867 = vsel %vm2851, 1.0, 0.0
        %v2868 = vsel %vm2852, 1.0, 0.0
        %v2869 = vsel %vm2853, 1.0, 0.0
        %v2870 = vsel %vm2854, 1.0, 0.0
        %v2871 = vsel %vm2855, 1.0, 0.0
        %v2872 = vsel %vm2856, 1.0, 0.0
        %v2873 = vsel %vm2857, 1.0, 0.0
        %v2874 = vsel %vm2858, 1.0, 0.0
        %v2875 = vsel %vm2859, 1.0, 0.0
        %v2876 = vsel %vm2860, 1.0, 0.0
        %v2877 = vpack.c.bf16 %v2862, %v2861
        %v2878 = vpack.c.bf16 %v2864, %v2863
        %v2879 = vpack.c.bf16 %v2866, %v2865
        %v2880 = vpack.c.bf16 %v2868, %v2867
        %v2881 = vpack.c.bf16 %v2870, %v2869
        %v2882 = vpack.c.bf16 %v2872, %v2871
        %v2883 = vpack.c.bf16 %v2874, %v2873
        %v2884 = vpack.c.bf16 %v2876, %v2875
        %2885 = vmatprep.subr.bf16.mxu0 0
        %2886 = vmatpush1.bf16.msra.mxu0 %v2884
        %2887 = vmatprep.subr.bf16.mxu0 0
        %2888 = vmatpush1.bf16.msra.mxu0 %v2883
        %2889 = vmatprep.subr.bf16.mxu0 0
        %2890 = vmatpush1.bf16.msra.mxu0 %v2882
        %2891 = vmatprep.subr.bf16.mxu0 0
        %2892 = vmatpush1.bf16.msra.mxu0 %v2881
        %2893 = vmatprep.subr.bf16.mxu0 0
        %2894 = vmatpush1.bf16.msra.mxu0 %v2880
        %2895 = vmatprep.subr.bf16.mxu0 0
        %2896 = vmatpush1.bf16.msra.mxu0 %v2879
        %2897 = vmatprep.subr.bf16.mxu0 0
        %2898 = vmatpush1.bf16.msra.mxu0 %v2878
        %2899 = vmatprep.subr.bf16.mxu0 0
        %2900 = vmatpush1.bf16.msra.mxu0 %v2877
        %2901 = vmatprep.subr.bf16.mxu0 0
        %2902 = vmatpush2.bf16.msra.mxu0 0
        %2903 = vmatprep.subr.bf16.mxu0 0
        %2904 = vmatpush2.bf16.msra.mxu0 0
        %2905 = vmatprep.subr.bf16.mxu0 0
        %2906 = vmatpush2.bf16.msra.mxu0 0
        %2907 = vmatprep.subr.bf16.mxu0 0
        %2908 = vmatpush2.bf16.msra.mxu0 0
        %2909 = vmatprep.subr.bf16.mxu0 0
        %2910 = vmatpush2.bf16.msra.mxu0 0
        %2911 = vmatprep.subr.bf16.mxu0 0
        %2912 = vmatpush2.bf16.msra.mxu0 0
        %2913 = vmatprep.subr.bf16.mxu0 0
        %2914 = vmatpush2.bf16.msra.mxu0 0
        %2915 = vmatprep.subr.bf16.mxu0 0
        %2916 = vmatpush2.bf16.msra.mxu0 0
        %2917 = vmatprep.mubr.bf16.mxu0 0
        %2918 = vmatmul.mubr.bf16.gmra.mxu0 %v2277
        %v2919 = vpop.f32.mrf.mxu0
        %v2920 = vadd.f32 0.0, %v2919
        %v2921 = vpop.f32.mrf.mxu0
        %v2922 = vpop.f32.mrf.mxu0
        %v2923 = vadd.f32 0.0, %v2922
        %v2924 = vpop.f32.mrf.mxu0
        %2925 = vdwg.mxu0
        %v2926 = vlaneseq
        %v2927 = vshrl.u32 %v2926, 7
        %v2928 = vsub.s32 6, %v2927
        %v2929 = vrot.slane %v567, %v2928
        %vm2930 = vcmp.eq.s32.totalorder %v551, %v2929
        %vm2931 = vcmp.eq.s32.totalorder %v552, %v2929
        %v2932 = vlaneseq
        %v2933 = vshrl.u32 %v2932, 7
        %v2934 = vsub.s32 6, %v2933
        %v2935 = vrot.slane %v559, %v2934
        %v2936 = vsel %vm2930, %v2935, 0.0
        %v2937 = vsel %vm2931, %v2935, 0.0
        %v2938 = vmul.f32 %v2920, %v2936
        %v2939 = vmul.f32 %v2923, %v2937
        %v2940 = vadd.f32 %v2839, %v2938
        %v2941 = vadd.f32 %v2840, %v2939
        %v2942 = vlaneseq
        %v2943 = vshrl.u32 %v2942, 7
        %v2944 = vsub.s32 7, %v2943
        %v2945 = vrot.slane %v563, %v2944
        %vm2946 = vcmp.eq.s32.totalorder %v535, %v2945
        %vm2947 = vcmp.eq.s32.totalorder %v536, %v2945
        %vm2948 = vcmp.eq.s32.totalorder %v537, %v2945
        %vm2949 = vcmp.eq.s32.totalorder %v538, %v2945
        %vm2950 = vcmp.eq.s32.totalorder %v539, %v2945
        %vm2951 = vcmp.eq.s32.totalorder %v540, %v2945
        %vm2952 = vcmp.eq.s32.totalorder %v541, %v2945
        %vm2953 = vcmp.eq.s32.totalorder %v542, %v2945
        %vm2954 = vcmp.eq.s32.totalorder %v543, %v2945
        %vm2955 = vcmp.eq.s32.totalorder %v544, %v2945
        %vm2956 = vcmp.eq.s32.totalorder %v545, %v2945
        %vm2957 = vcmp.eq.s32.totalorder %v546, %v2945
        %vm2958 = vcmp.eq.s32.totalorder %v547, %v2945
        %vm2959 = vcmp.eq.s32.totalorder %v548, %v2945
        %vm2960 = vcmp.eq.s32.totalorder %v549, %v2945
        %vm2961 = vcmp.eq.s32.totalorder %v550, %v2945
        %v2962 = vsel %vm2946, 1.0, 0.0
        %v2963 = vsel %vm2947, 1.0, 0.0
        %v2964 = vsel %vm2948, 1.0, 0.0
        %v2965 = vsel %vm2949, 1.0, 0.0
        %v2966 = vsel %vm2950, 1.0, 0.0
        %v2967 = vsel %vm2951, 1.0, 0.0
        %v2968 = vsel %vm2952, 1.0, 0.0
        %v2969 = vsel %vm2953, 1.0, 0.0
        %v2970 = vsel %vm2954, 1.0, 0.0
        %v2971 = vsel %vm2955, 1.0, 0.0
        %v2972 = vsel %vm2956, 1.0, 0.0
        %v2973 = vsel %vm2957, 1.0, 0.0
        %v2974 = vsel %vm2958, 1.0, 0.0
        %v2975 = vsel %vm2959, 1.0, 0.0
        %v2976 = vsel %vm2960, 1.0, 0.0
        %v2977 = vsel %vm2961, 1.0, 0.0
        %v2978 = vpack.c.bf16 %v2963, %v2962
        %v2979 = vpack.c.bf16 %v2965, %v2964
        %v2980 = vpack.c.bf16 %v2967, %v2966
        %v2981 = vpack.c.bf16 %v2969, %v2968
        %v2982 = vpack.c.bf16 %v2971, %v2970
        %v2983 = vpack.c.bf16 %v2973, %v2972
        %v2984 = vpack.c.bf16 %v2975, %v2974
        %v2985 = vpack.c.bf16 %v2977, %v2976
        %2986 = vmatprep.subr.bf16.mxu0 0
        %2987 = vmatpush1.bf16.msra.mxu0 %v2985
        %2988 = vmatprep.subr.bf16.mxu0 0
        %2989 = vmatpush1.bf16.msra.mxu0 %v2984
        %2990 = vmatprep.subr.bf16.mxu0 0
        %2991 = vmatpush1.bf16.msra.mxu0 %v2983
        %2992 = vmatprep.subr.bf16.mxu0 0
        %2993 = vmatpush1.bf16.msra.mxu0 %v2982
        %2994 = vmatprep.subr.bf16.mxu0 0
        %2995 = vmatpush1.bf16.msra.mxu0 %v2981
        %2996 = vmatprep.subr.bf16.mxu0 0
        %2997 = vmatpush1.bf16.msra.mxu0 %v2980
        %2998 = vmatprep.subr.bf16.mxu0 0
        %2999 = vmatpush1.bf16.msra.mxu0 %v2979
        %3000 = vmatprep.subr.bf16.mxu0 0
        %3001 = vmatpush1.bf16.msra.mxu0 %v2978
        %3002 = vmatprep.subr.bf16.mxu0 0
        %3003 = vmatpush2.bf16.msra.mxu0 0
        %3004 = vmatprep.subr.bf16.mxu0 0
        %3005 = vmatpush2.bf16.msra.mxu0 0
        %3006 = vmatprep.subr.bf16.mxu0 0
        %3007 = vmatpush2.bf16.msra.mxu0 0
        %3008 = vmatprep.subr.bf16.mxu0 0
        %3009 = vmatpush2.bf16.msra.mxu0 0
        %3010 = vmatprep.subr.bf16.mxu0 0
        %3011 = vmatpush2.bf16.msra.mxu0 0
        %3012 = vmatprep.subr.bf16.mxu0 0
        %3013 = vmatpush2.bf16.msra.mxu0 0
        %3014 = vmatprep.subr.bf16.mxu0 0
        %3015 = vmatpush2.bf16.msra.mxu0 0
        %3016 = vmatprep.subr.bf16.mxu0 0
        %3017 = vmatpush2.bf16.msra.mxu0 0
        %3018 = vmatprep.mubr.bf16.mxu0 0
        %3019 = vmatmul.mubr.bf16.gmra.mxu0 %v2277
        %v3020 = vpop.f32.mrf.mxu0
        %v3021 = vadd.f32 0.0, %v3020
        %v3022 = vpop.f32.mrf.mxu0
        %v3023 = vpop.f32.mrf.mxu0
        %v3024 = vadd.f32 0.0, %v3023
        %v3025 = vpop.f32.mrf.mxu0
        %3026 = vdwg.mxu0
        %v3027 = vlaneseq
        %v3028 = vshrl.u32 %v3027, 7
        %v3029 = vsub.s32 7, %v3028
        %v3030 = vrot.slane %v567, %v3029
        %vm3031 = vcmp.eq.s32.totalorder %v551, %v3030
        %vm3032 = vcmp.eq.s32.totalorder %v552, %v3030
        %v3033 = vlaneseq
        %v3034 = vshrl.u32 %v3033, 7
        %v3035 = vsub.s32 7, %v3034
        %v3036 = vrot.slane %v559, %v3035
        %v3037 = vsel %vm3031, %v3036, 0.0
        %v3038 = vsel %vm3032, %v3036, 0.0
        %v3039 = vmul.f32 %v3021, %v3037
        %v3040 = vmul.f32 %v3024, %v3038
        %v3041 = vadd.f32 %v2940, %v3039
        %v3042 = vadd.f32 %v2941, %v3040
        %v3043 = vrot.slane %v3041, 4
        %v3044 = vadd.f32 %v3041, %v3043
        %v3045 = vrot.slane %v3044, 2
        %v3046 = vadd.f32 %v3044, %v3045
        %v3047 = vrot.slane %v3046, 1
        %v3048 = vadd.f32 %v3046, %v3047
        %v3049 = vrot.slane %v3042, 4
        %v3050 = vadd.f32 %v3042, %v3049
        %v3051 = vrot.slane %v3050, 2
        %v3052 = vadd.f32 %v3050, %v3051
        %v3053 = vrot.slane %v3052, 1
        %v3054 = vadd.f32 %v3052, %v3053
        %v3055 = vlaneseq
        %v3056 = vshrl.u32 %v3055, 7
        %v3057 = vsub.s32 0, %v3056
        %v3058 = vrot.slane %v564, %v3057
        %vm3059 = vcmp.eq.s32.totalorder %v535, %v3058
        %vm3060 = vcmp.eq.s32.totalorder %v536, %v3058
        %vm3061 = vcmp.eq.s32.totalorder %v537, %v3058
        %vm3062 = vcmp.eq.s32.totalorder %v538, %v3058
        %vm3063 = vcmp.eq.s32.totalorder %v539, %v3058
        %vm3064 = vcmp.eq.s32.totalorder %v540, %v3058
        %vm3065 = vcmp.eq.s32.totalorder %v541, %v3058
        %vm3066 = vcmp.eq.s32.totalorder %v542, %v3058
        %vm3067 = vcmp.eq.s32.totalorder %v543, %v3058
        %vm3068 = vcmp.eq.s32.totalorder %v544, %v3058
        %vm3069 = vcmp.eq.s32.totalorder %v545, %v3058
        %vm3070 = vcmp.eq.s32.totalorder %v546, %v3058
        %vm3071 = vcmp.eq.s32.totalorder %v547, %v3058
        %vm3072 = vcmp.eq.s32.totalorder %v548, %v3058
        %vm3073 = vcmp.eq.s32.totalorder %v549, %v3058
        %vm3074 = vcmp.eq.s32.totalorder %v550, %v3058
        %v3075 = vsel %vm3059, 1.0, 0.0
        %v3076 = vsel %vm3060, 1.0, 0.0
        %v3077 = vsel %vm3061, 1.0, 0.0
        %v3078 = vsel %vm3062, 1.0, 0.0
        %v3079 = vsel %vm3063, 1.0, 0.0
        %v3080 = vsel %vm3064, 1.0, 0.0
        %v3081 = vsel %vm3065, 1.0, 0.0
        %v3082 = vsel %vm3066, 1.0, 0.0
        %v3083 = vsel %vm3067, 1.0, 0.0
        %v3084 = vsel %vm3068, 1.0, 0.0
        %v3085 = vsel %vm3069, 1.0, 0.0
        %v3086 = vsel %vm3070, 1.0, 0.0
        %v3087 = vsel %vm3071, 1.0, 0.0
        %v3088 = vsel %vm3072, 1.0, 0.0
        %v3089 = vsel %vm3073, 1.0, 0.0
        %v3090 = vsel %vm3074, 1.0, 0.0
        %v3091 = vpack.c.bf16 %v3076, %v3075
        %v3092 = vpack.c.bf16 %v3078, %v3077
        %v3093 = vpack.c.bf16 %v3080, %v3079
        %v3094 = vpack.c.bf16 %v3082, %v3081
        %v3095 = vpack.c.bf16 %v3084, %v3083
        %v3096 = vpack.c.bf16 %v3086, %v3085
        %v3097 = vpack.c.bf16 %v3088, %v3087
        %v3098 = vpack.c.bf16 %v3090, %v3089
        %v3101 = vunpack.c.l.b16 %v575
        %v3102 = vunpack.c.l.b16 %v576
        %v3103 = vpack.c.b16 %v3102, %v3101
        %3105 = vmatprep.subr.bf16.mxu0 0
        %3106 = vmatpush1.bf16.msra.mxu0 %v3098
        %3107 = vmatprep.subr.bf16.mxu0 0
        %3108 = vmatpush1.bf16.msra.mxu0 %v3097
        %3109 = vmatprep.subr.bf16.mxu0 0
        %3110 = vmatpush1.bf16.msra.mxu0 %v3096
        %3111 = vmatprep.subr.bf16.mxu0 0
        %3112 = vmatpush1.bf16.msra.mxu0 %v3095
        %3113 = vmatprep.subr.bf16.mxu0 0
        %3114 = vmatpush1.bf16.msra.mxu0 %v3094
        %3115 = vmatprep.subr.bf16.mxu0 0
        %3116 = vmatpush1.bf16.msra.mxu0 %v3093
        %3117 = vmatprep.subr.bf16.mxu0 0
        %3118 = vmatpush1.bf16.msra.mxu0 %v3092
        %3119 = vmatprep.subr.bf16.mxu0 0
        %3120 = vmatpush1.bf16.msra.mxu0 %v3091
        %3121 = vmatprep.subr.bf16.mxu0 0
        %3122 = vmatpush2.bf16.msra.mxu0 0
        %3123 = vmatprep.subr.bf16.mxu0 0
        %3124 = vmatpush2.bf16.msra.mxu0 0
        %3125 = vmatprep.subr.bf16.mxu0 0
        %3126 = vmatpush2.bf16.msra.mxu0 0
        %3127 = vmatprep.subr.bf16.mxu0 0
        %3128 = vmatpush2.bf16.msra.mxu0 0
        %3129 = vmatprep.subr.bf16.mxu0 0
        %3130 = vmatpush2.bf16.msra.mxu0 0
        %3131 = vmatprep.subr.bf16.mxu0 0
        %3132 = vmatpush2.bf16.msra.mxu0 0
        %3133 = vmatprep.subr.bf16.mxu0 0
        %3134 = vmatpush2.bf16.msra.mxu0 0
        %3135 = vmatprep.subr.bf16.mxu0 0
        %3136 = vmatpush2.bf16.msra.mxu0 0
        %3137 = vmatprep.mubr.bf16.mxu0 0
        %3138 = vmatmul.mubr.bf16.gmra.mxu0 %v3103
        %v3139 = vpop.f32.mrf.mxu0
        %v3140 = vadd.f32 0.0, %v3139
        %v3141 = vpop.f32.mrf.mxu0
        %v3142 = vpop.f32.mrf.mxu0
        %v3143 = vadd.f32 0.0, %v3142
        %v3144 = vpop.f32.mrf.mxu0
        %3145 = vdwg.mxu0
        %v3146 = vlaneseq
        %v3147 = vshrl.u32 %v3146, 7
        %v3148 = vsub.s32 0, %v3147
        %v3149 = vrot.slane %v568, %v3148
        %vm3150 = vcmp.eq.s32.totalorder %v551, %v3149
        %vm3151 = vcmp.eq.s32.totalorder %v552, %v3149
        %v3152 = vlaneseq
        %v3153 = vshrl.u32 %v3152, 7
        %v3154 = vsub.s32 0, %v3153
        %v3155 = vrot.slane %v560, %v3154
        %v3156 = vsel %vm3150, %v3155, 0.0
        %v3157 = vsel %vm3151, %v3155, 0.0
        %v3158 = vmul.f32 %v3140, %v3156
        %v3159 = vmul.f32 %v3143, %v3157
        %v3160 = vadd.f32 %v3158, 0.0
        %v3161 = vadd.f32 %v3159, 0.0
        %v3162 = vlaneseq
        %v3163 = vshrl.u32 %v3162, 7
        %v3164 = vsub.s32 1, %v3163
        %v3165 = vrot.slane %v564, %v3164
        %vm3166 = vcmp.eq.s32.totalorder %v535, %v3165
        %vm3167 = vcmp.eq.s32.totalorder %v536, %v3165
        %vm3168 = vcmp.eq.s32.totalorder %v537, %v3165
        %vm3169 = vcmp.eq.s32.totalorder %v538, %v3165
        %vm3170 = vcmp.eq.s32.totalorder %v539, %v3165
        %vm3171 = vcmp.eq.s32.totalorder %v540, %v3165
        %vm3172 = vcmp.eq.s32.totalorder %v541, %v3165
        %vm3173 = vcmp.eq.s32.totalorder %v542, %v3165
        %vm3174 = vcmp.eq.s32.totalorder %v543, %v3165
        %vm3175 = vcmp.eq.s32.totalorder %v544, %v3165
        %vm3176 = vcmp.eq.s32.totalorder %v545, %v3165
        %vm3177 = vcmp.eq.s32.totalorder %v546, %v3165
        %vm3178 = vcmp.eq.s32.totalorder %v547, %v3165
        %vm3179 = vcmp.eq.s32.totalorder %v548, %v3165
        %vm3180 = vcmp.eq.s32.totalorder %v549, %v3165
        %vm3181 = vcmp.eq.s32.totalorder %v550, %v3165
        %v3182 = vsel %vm3166, 1.0, 0.0
        %v3183 = vsel %vm3167, 1.0, 0.0
        %v3184 = vsel %vm3168, 1.0, 0.0
        %v3185 = vsel %vm3169, 1.0, 0.0
        %v3186 = vsel %vm3170, 1.0, 0.0
        %v3187 = vsel %vm3171, 1.0, 0.0
        %v3188 = vsel %vm3172, 1.0, 0.0
        %v3189 = vsel %vm3173, 1.0, 0.0
        %v3190 = vsel %vm3174, 1.0, 0.0
        %v3191 = vsel %vm3175, 1.0, 0.0
        %v3192 = vsel %vm3176, 1.0, 0.0
        %v3193 = vsel %vm3177, 1.0, 0.0
        %v3194 = vsel %vm3178, 1.0, 0.0
        %v3195 = vsel %vm3179, 1.0, 0.0
        %v3196 = vsel %vm3180, 1.0, 0.0
        %v3197 = vsel %vm3181, 1.0, 0.0
        %v3198 = vpack.c.bf16 %v3183, %v3182
        %v3199 = vpack.c.bf16 %v3185, %v3184
        %v3200 = vpack.c.bf16 %v3187, %v3186
        %v3201 = vpack.c.bf16 %v3189, %v3188
        %v3202 = vpack.c.bf16 %v3191, %v3190
        %v3203 = vpack.c.bf16 %v3193, %v3192
        %v3204 = vpack.c.bf16 %v3195, %v3194
        %v3205 = vpack.c.bf16 %v3197, %v3196
        %3206 = vmatprep.subr.bf16.mxu0 0
        %3207 = vmatpush1.bf16.msra.mxu0 %v3205
        %3208 = vmatprep.subr.bf16.mxu0 0
        %3209 = vmatpush1.bf16.msra.mxu0 %v3204
        %3210 = vmatprep.subr.bf16.mxu0 0
        %3211 = vmatpush1.bf16.msra.mxu0 %v3203
        %3212 = vmatprep.subr.bf16.mxu0 0
        %3213 = vmatpush1.bf16.msra.mxu0 %v3202
        %3214 = vmatprep.subr.bf16.mxu0 0
        %3215 = vmatpush1.bf16.msra.mxu0 %v3201
        %3216 = vmatprep.subr.bf16.mxu0 0
        %3217 = vmatpush1.bf16.msra.mxu0 %v3200
        %3218 = vmatprep.subr.bf16.mxu0 0
        %3219 = vmatpush1.bf16.msra.mxu0 %v3199
        %3220 = vmatprep.subr.bf16.mxu0 0
        %3221 = vmatpush1.bf16.msra.mxu0 %v3198
        %3222 = vmatprep.subr.bf16.mxu0 0
        %3223 = vmatpush2.bf16.msra.mxu0 0
        %3224 = vmatprep.subr.bf16.mxu0 0
        %3225 = vmatpush2.bf16.msra.mxu0 0
        %3226 = vmatprep.subr.bf16.mxu0 0
        %3227 = vmatpush2.bf16.msra.mxu0 0
        %3228 = vmatprep.subr.bf16.mxu0 0
        %3229 = vmatpush2.bf16.msra.mxu0 0
        %3230 = vmatprep.subr.bf16.mxu0 0
        %3231 = vmatpush2.bf16.msra.mxu0 0
        %3232 = vmatprep.subr.bf16.mxu0 0
        %3233 = vmatpush2.bf16.msra.mxu0 0
        %3234 = vmatprep.subr.bf16.mxu0 0
        %3235 = vmatpush2.bf16.msra.mxu0 0
        %3236 = vmatprep.subr.bf16.mxu0 0
        %3237 = vmatpush2.bf16.msra.mxu0 0
        %3238 = vmatprep.mubr.bf16.mxu0 0
        %3239 = vmatmul.mubr.bf16.gmra.mxu0 %v3103
        %v3240 = vpop.f32.mrf.mxu0
        %v3241 = vadd.f32 0.0, %v3240
        %v3242 = vpop.f32.mrf.mxu0
        %v3243 = vpop.f32.mrf.mxu0
        %v3244 = vadd.f32 0.0, %v3243
        %v3245 = vpop.f32.mrf.mxu0
        %3246 = vdwg.mxu0
        %v3247 = vlaneseq
        %v3248 = vshrl.u32 %v3247, 7
        %v3249 = vsub.s32 1, %v3248
        %v3250 = vrot.slane %v568, %v3249
        %vm3251 = vcmp.eq.s32.totalorder %v551, %v3250
        %vm3252 = vcmp.eq.s32.totalorder %v552, %v3250
        %v3253 = vlaneseq
        %v3254 = vshrl.u32 %v3253, 7
        %v3255 = vsub.s32 1, %v3254
        %v3256 = vrot.slane %v560, %v3255
        %v3257 = vsel %vm3251, %v3256, 0.0
        %v3258 = vsel %vm3252, %v3256, 0.0
        %v3259 = vmul.f32 %v3241, %v3257
        %v3260 = vmul.f32 %v3244, %v3258
        %v3261 = vadd.f32 %v3160, %v3259
        %v3262 = vadd.f32 %v3161, %v3260
        %v3263 = vlaneseq
        %v3264 = vshrl.u32 %v3263, 7
        %v3265 = vsub.s32 2, %v3264
        %v3266 = vrot.slane %v564, %v3265
        %vm3267 = vcmp.eq.s32.totalorder %v535, %v3266
        %vm3268 = vcmp.eq.s32.totalorder %v536, %v3266
        %vm3269 = vcmp.eq.s32.totalorder %v537, %v3266
        %vm3270 = vcmp.eq.s32.totalorder %v538, %v3266
        %vm3271 = vcmp.eq.s32.totalorder %v539, %v3266
        %vm3272 = vcmp.eq.s32.totalorder %v540, %v3266
        %vm3273 = vcmp.eq.s32.totalorder %v541, %v3266
        %vm3274 = vcmp.eq.s32.totalorder %v542, %v3266
        %vm3275 = vcmp.eq.s32.totalorder %v543, %v3266
        %vm3276 = vcmp.eq.s32.totalorder %v544, %v3266
        %vm3277 = vcmp.eq.s32.totalorder %v545, %v3266
        %vm3278 = vcmp.eq.s32.totalorder %v546, %v3266
        %vm3279 = vcmp.eq.s32.totalorder %v547, %v3266
        %vm3280 = vcmp.eq.s32.totalorder %v548, %v3266
        %vm3281 = vcmp.eq.s32.totalorder %v549, %v3266
        %vm3282 = vcmp.eq.s32.totalorder %v550, %v3266
        %v3283 = vsel %vm3267, 1.0, 0.0
        %v3284 = vsel %vm3268, 1.0, 0.0
        %v3285 = vsel %vm3269, 1.0, 0.0
        %v3286 = vsel %vm3270, 1.0, 0.0
        %v3287 = vsel %vm3271, 1.0, 0.0
        %v3288 = vsel %vm3272, 1.0, 0.0
        %v3289 = vsel %vm3273, 1.0, 0.0
        %v3290 = vsel %vm3274, 1.0, 0.0
        %v3291 = vsel %vm3275, 1.0, 0.0
        %v3292 = vsel %vm3276, 1.0, 0.0
        %v3293 = vsel %vm3277, 1.0, 0.0
        %v3294 = vsel %vm3278, 1.0, 0.0
        %v3295 = vsel %vm3279, 1.0, 0.0
        %v3296 = vsel %vm3280, 1.0, 0.0
        %v3297 = vsel %vm3281, 1.0, 0.0
        %v3298 = vsel %vm3282, 1.0, 0.0
        %v3299 = vpack.c.bf16 %v3284, %v3283
        %v3300 = vpack.c.bf16 %v3286, %v3285
        %v3301 = vpack.c.bf16 %v3288, %v3287
        %v3302 = vpack.c.bf16 %v3290, %v3289
        %v3303 = vpack.c.bf16 %v3292, %v3291
        %v3304 = vpack.c.bf16 %v3294, %v3293
        %v3305 = vpack.c.bf16 %v3296, %v3295
        %v3306 = vpack.c.bf16 %v3298, %v3297
        %3307 = vmatprep.subr.bf16.mxu0 0
        %3308 = vmatpush1.bf16.msra.mxu0 %v3306
        %3309 = vmatprep.subr.bf16.mxu0 0
        %3310 = vmatpush1.bf16.msra.mxu0 %v3305
        %3311 = vmatprep.subr.bf16.mxu0 0
        %3312 = vmatpush1.bf16.msra.mxu0 %v3304
        %3313 = vmatprep.subr.bf16.mxu0 0
        %3314 = vmatpush1.bf16.msra.mxu0 %v3303
        %3315 = vmatprep.subr.bf16.mxu0 0
        %3316 = vmatpush1.bf16.msra.mxu0 %v3302
        %3317 = vmatprep.subr.bf16.mxu0 0
        %3318 = vmatpush1.bf16.msra.mxu0 %v3301
        %3319 = vmatprep.subr.bf16.mxu0 0
        %3320 = vmatpush1.bf16.msra.mxu0 %v3300
        %3321 = vmatprep.subr.bf16.mxu0 0
        %3322 = vmatpush1.bf16.msra.mxu0 %v3299
        %3323 = vmatprep.subr.bf16.mxu0 0
        %3324 = vmatpush2.bf16.msra.mxu0 0
        %3325 = vmatprep.subr.bf16.mxu0 0
        %3326 = vmatpush2.bf16.msra.mxu0 0
        %3327 = vmatprep.subr.bf16.mxu0 0
        %3328 = vmatpush2.bf16.msra.mxu0 0
        %3329 = vmatprep.subr.bf16.mxu0 0
        %3330 = vmatpush2.bf16.msra.mxu0 0
        %3331 = vmatprep.subr.bf16.mxu0 0
        %3332 = vmatpush2.bf16.msra.mxu0 0
        %3333 = vmatprep.subr.bf16.mxu0 0
        %3334 = vmatpush2.bf16.msra.mxu0 0
        %3335 = vmatprep.subr.bf16.mxu0 0
        %3336 = vmatpush2.bf16.msra.mxu0 0
        %3337 = vmatprep.subr.bf16.mxu0 0
        %3338 = vmatpush2.bf16.msra.mxu0 0
        %3339 = vmatprep.mubr.bf16.mxu0 0
        %3340 = vmatmul.mubr.bf16.gmra.mxu0 %v3103
        %v3341 = vpop.f32.mrf.mxu0
        %v3342 = vadd.f32 0.0, %v3341
        %v3343 = vpop.f32.mrf.mxu0
        %v3344 = vpop.f32.mrf.mxu0
        %v3345 = vadd.f32 0.0, %v3344
        %v3346 = vpop.f32.mrf.mxu0
        %3347 = vdwg.mxu0
        %v3348 = vlaneseq
        %v3349 = vshrl.u32 %v3348, 7
        %v3350 = vsub.s32 2, %v3349
        %v3351 = vrot.slane %v568, %v3350
        %vm3352 = vcmp.eq.s32.totalorder %v551, %v3351
        %vm3353 = vcmp.eq.s32.totalorder %v552, %v3351
        %v3354 = vlaneseq
        %v3355 = vshrl.u32 %v3354, 7
        %v3356 = vsub.s32 2, %v3355
        %v3357 = vrot.slane %v560, %v3356
        %v3358 = vsel %vm3352, %v3357, 0.0
        %v3359 = vsel %vm3353, %v3357, 0.0
        %v3360 = vmul.f32 %v3342, %v3358
        %v3361 = vmul.f32 %v3345, %v3359
        %v3362 = vadd.f32 %v3261, %v3360
        %v3363 = vadd.f32 %v3262, %v3361
        %v3364 = vlaneseq
        %v3365 = vshrl.u32 %v3364, 7
        %v3366 = vsub.s32 3, %v3365
        %v3367 = vrot.slane %v564, %v3366
        %vm3368 = vcmp.eq.s32.totalorder %v535, %v3367
        %vm3369 = vcmp.eq.s32.totalorder %v536, %v3367
        %vm3370 = vcmp.eq.s32.totalorder %v537, %v3367
        %vm3371 = vcmp.eq.s32.totalorder %v538, %v3367
        %vm3372 = vcmp.eq.s32.totalorder %v539, %v3367
        %vm3373 = vcmp.eq.s32.totalorder %v540, %v3367
        %vm3374 = vcmp.eq.s32.totalorder %v541, %v3367
        %vm3375 = vcmp.eq.s32.totalorder %v542, %v3367
        %vm3376 = vcmp.eq.s32.totalorder %v543, %v3367
        %vm3377 = vcmp.eq.s32.totalorder %v544, %v3367
        %vm3378 = vcmp.eq.s32.totalorder %v545, %v3367
        %vm3379 = vcmp.eq.s32.totalorder %v546, %v3367
        %vm3380 = vcmp.eq.s32.totalorder %v547, %v3367
        %vm3381 = vcmp.eq.s32.totalorder %v548, %v3367
        %vm3382 = vcmp.eq.s32.totalorder %v549, %v3367
        %vm3383 = vcmp.eq.s32.totalorder %v550, %v3367
        %v3384 = vsel %vm3368, 1.0, 0.0
        %v3385 = vsel %vm3369, 1.0, 0.0
        %v3386 = vsel %vm3370, 1.0, 0.0
        %v3387 = vsel %vm3371, 1.0, 0.0
        %v3388 = vsel %vm3372, 1.0, 0.0
        %v3389 = vsel %vm3373, 1.0, 0.0
        %v3390 = vsel %vm3374, 1.0, 0.0
        %v3391 = vsel %vm3375, 1.0, 0.0
        %v3392 = vsel %vm3376, 1.0, 0.0
        %v3393 = vsel %vm3377, 1.0, 0.0
        %v3394 = vsel %vm3378, 1.0, 0.0
        %v3395 = vsel %vm3379, 1.0, 0.0
        %v3396 = vsel %vm3380, 1.0, 0.0
        %v3397 = vsel %vm3381, 1.0, 0.0
        %v3398 = vsel %vm3382, 1.0, 0.0
        %v3399 = vsel %vm3383, 1.0, 0.0
        %v3400 = vpack.c.bf16 %v3385, %v3384
        %v3401 = vpack.c.bf16 %v3387, %v3386
        %v3402 = vpack.c.bf16 %v3389, %v3388
        %v3403 = vpack.c.bf16 %v3391, %v3390
        %v3404 = vpack.c.bf16 %v3393, %v3392
        %v3405 = vpack.c.bf16 %v3395, %v3394
        %v3406 = vpack.c.bf16 %v3397, %v3396
        %v3407 = vpack.c.bf16 %v3399, %v3398
        %3408 = vmatprep.subr.bf16.mxu0 0
        %3409 = vmatpush1.bf16.msra.mxu0 %v3407
        %3410 = vmatprep.subr.bf16.mxu0 0
        %3411 = vmatpush1.bf16.msra.mxu0 %v3406
        %3412 = vmatprep.subr.bf16.mxu0 0
        %3413 = vmatpush1.bf16.msra.mxu0 %v3405
        %3414 = vmatprep.subr.bf16.mxu0 0
        %3415 = vmatpush1.bf16.msra.mxu0 %v3404
        %3416 = vmatprep.subr.bf16.mxu0 0
        %3417 = vmatpush1.bf16.msra.mxu0 %v3403
        %3418 = vmatprep.subr.bf16.mxu0 0
        %3419 = vmatpush1.bf16.msra.mxu0 %v3402
        %3420 = vmatprep.subr.bf16.mxu0 0
        %3421 = vmatpush1.bf16.msra.mxu0 %v3401
        %3422 = vmatprep.subr.bf16.mxu0 0
        %3423 = vmatpush1.bf16.msra.mxu0 %v3400
        %3424 = vmatprep.subr.bf16.mxu0 0
        %3425 = vmatpush2.bf16.msra.mxu0 0
        %3426 = vmatprep.subr.bf16.mxu0 0
        %3427 = vmatpush2.bf16.msra.mxu0 0
        %3428 = vmatprep.subr.bf16.mxu0 0
        %3429 = vmatpush2.bf16.msra.mxu0 0
        %3430 = vmatprep.subr.bf16.mxu0 0
        %3431 = vmatpush2.bf16.msra.mxu0 0
        %3432 = vmatprep.subr.bf16.mxu0 0
        %3433 = vmatpush2.bf16.msra.mxu0 0
        %3434 = vmatprep.subr.bf16.mxu0 0
        %3435 = vmatpush2.bf16.msra.mxu0 0
        %3436 = vmatprep.subr.bf16.mxu0 0
        %3437 = vmatpush2.bf16.msra.mxu0 0
        %3438 = vmatprep.subr.bf16.mxu0 0
        %3439 = vmatpush2.bf16.msra.mxu0 0
        %3440 = vmatprep.mubr.bf16.mxu0 0
        %3441 = vmatmul.mubr.bf16.gmra.mxu0 %v3103
        %v3442 = vpop.f32.mrf.mxu0
        %v3443 = vadd.f32 0.0, %v3442
        %v3444 = vpop.f32.mrf.mxu0
        %v3445 = vpop.f32.mrf.mxu0
        %v3446 = vadd.f32 0.0, %v3445
        %v3447 = vpop.f32.mrf.mxu0
        %3448 = vdwg.mxu0
        %v3449 = vlaneseq
        %v3450 = vshrl.u32 %v3449, 7
        %v3451 = vsub.s32 3, %v3450
        %v3452 = vrot.slane %v568, %v3451
        %vm3453 = vcmp.eq.s32.totalorder %v551, %v3452
        %vm3454 = vcmp.eq.s32.totalorder %v552, %v3452
        %v3455 = vlaneseq
        %v3456 = vshrl.u32 %v3455, 7
        %v3457 = vsub.s32 3, %v3456
        %v3458 = vrot.slane %v560, %v3457
        %v3459 = vsel %vm3453, %v3458, 0.0
        %v3460 = vsel %vm3454, %v3458, 0.0
        %v3461 = vmul.f32 %v3443, %v3459
        %v3462 = vmul.f32 %v3446, %v3460
        %v3463 = vadd.f32 %v3362, %v3461
        %v3464 = vadd.f32 %v3363, %v3462
        %v3465 = vlaneseq
        %v3466 = vshrl.u32 %v3465, 7
        %v3467 = vsub.s32 4, %v3466
        %v3468 = vrot.slane %v564, %v3467
        %vm3469 = vcmp.eq.s32.totalorder %v535, %v3468
        %vm3470 = vcmp.eq.s32.totalorder %v536, %v3468
        %vm3471 = vcmp.eq.s32.totalorder %v537, %v3468
        %vm3472 = vcmp.eq.s32.totalorder %v538, %v3468
        %vm3473 = vcmp.eq.s32.totalorder %v539, %v3468
        %vm3474 = vcmp.eq.s32.totalorder %v540, %v3468
        %vm3475 = vcmp.eq.s32.totalorder %v541, %v3468
        %vm3476 = vcmp.eq.s32.totalorder %v542, %v3468
        %vm3477 = vcmp.eq.s32.totalorder %v543, %v3468
        %vm3478 = vcmp.eq.s32.totalorder %v544, %v3468
        %vm3479 = vcmp.eq.s32.totalorder %v545, %v3468
        %vm3480 = vcmp.eq.s32.totalorder %v546, %v3468
        %vm3481 = vcmp.eq.s32.totalorder %v547, %v3468
        %vm3482 = vcmp.eq.s32.totalorder %v548, %v3468
        %vm3483 = vcmp.eq.s32.totalorder %v549, %v3468
        %vm3484 = vcmp.eq.s32.totalorder %v550, %v3468
        %v3485 = vsel %vm3469, 1.0, 0.0
        %v3486 = vsel %vm3470, 1.0, 0.0
        %v3487 = vsel %vm3471, 1.0, 0.0
        %v3488 = vsel %vm3472, 1.0, 0.0
        %v3489 = vsel %vm3473, 1.0, 0.0
        %v3490 = vsel %vm3474, 1.0, 0.0
        %v3491 = vsel %vm3475, 1.0, 0.0
        %v3492 = vsel %vm3476, 1.0, 0.0
        %v3493 = vsel %vm3477, 1.0, 0.0
        %v3494 = vsel %vm3478, 1.0, 0.0
        %v3495 = vsel %vm3479, 1.0, 0.0
        %v3496 = vsel %vm3480, 1.0, 0.0
        %v3497 = vsel %vm3481, 1.0, 0.0
        %v3498 = vsel %vm3482, 1.0, 0.0
        %v3499 = vsel %vm3483, 1.0, 0.0
        %v3500 = vsel %vm3484, 1.0, 0.0
        %v3501 = vpack.c.bf16 %v3486, %v3485
        %v3502 = vpack.c.bf16 %v3488, %v3487
        %v3503 = vpack.c.bf16 %v3490, %v3489
        %v3504 = vpack.c.bf16 %v3492, %v3491
        %v3505 = vpack.c.bf16 %v3494, %v3493
        %v3506 = vpack.c.bf16 %v3496, %v3495
        %v3507 = vpack.c.bf16 %v3498, %v3497
        %v3508 = vpack.c.bf16 %v3500, %v3499
        %3509 = vmatprep.subr.bf16.mxu0 0
        %3510 = vmatpush1.bf16.msra.mxu0 %v3508
        %3511 = vmatprep.subr.bf16.mxu0 0
        %3512 = vmatpush1.bf16.msra.mxu0 %v3507
        %3513 = vmatprep.subr.bf16.mxu0 0
        %3514 = vmatpush1.bf16.msra.mxu0 %v3506
        %3515 = vmatprep.subr.bf16.mxu0 0
        %3516 = vmatpush1.bf16.msra.mxu0 %v3505
        %3517 = vmatprep.subr.bf16.mxu0 0
        %3518 = vmatpush1.bf16.msra.mxu0 %v3504
        %3519 = vmatprep.subr.bf16.mxu0 0
        %3520 = vmatpush1.bf16.msra.mxu0 %v3503
        %3521 = vmatprep.subr.bf16.mxu0 0
        %3522 = vmatpush1.bf16.msra.mxu0 %v3502
        %3523 = vmatprep.subr.bf16.mxu0 0
        %3524 = vmatpush1.bf16.msra.mxu0 %v3501
        %3525 = vmatprep.subr.bf16.mxu0 0
        %3526 = vmatpush2.bf16.msra.mxu0 0
        %3527 = vmatprep.subr.bf16.mxu0 0
        %3528 = vmatpush2.bf16.msra.mxu0 0
        %3529 = vmatprep.subr.bf16.mxu0 0
        %3530 = vmatpush2.bf16.msra.mxu0 0
        %3531 = vmatprep.subr.bf16.mxu0 0
        %3532 = vmatpush2.bf16.msra.mxu0 0
        %3533 = vmatprep.subr.bf16.mxu0 0
        %3534 = vmatpush2.bf16.msra.mxu0 0
        %3535 = vmatprep.subr.bf16.mxu0 0
        %3536 = vmatpush2.bf16.msra.mxu0 0
        %3537 = vmatprep.subr.bf16.mxu0 0
        %3538 = vmatpush2.bf16.msra.mxu0 0
        %3539 = vmatprep.subr.bf16.mxu0 0
        %3540 = vmatpush2.bf16.msra.mxu0 0
        %3541 = vmatprep.mubr.bf16.mxu0 0
        %3542 = vmatmul.mubr.bf16.gmra.mxu0 %v3103
        %v3543 = vpop.f32.mrf.mxu0
        %v3544 = vadd.f32 0.0, %v3543
        %v3545 = vpop.f32.mrf.mxu0
        %v3546 = vpop.f32.mrf.mxu0
        %v3547 = vadd.f32 0.0, %v3546
        %v3548 = vpop.f32.mrf.mxu0
        %3549 = vdwg.mxu0
        %v3550 = vlaneseq
        %v3551 = vshrl.u32 %v3550, 7
        %v3552 = vsub.s32 4, %v3551
        %v3553 = vrot.slane %v568, %v3552
        %vm3554 = vcmp.eq.s32.totalorder %v551, %v3553
        %vm3555 = vcmp.eq.s32.totalorder %v552, %v3553
        %v3556 = vlaneseq
        %v3557 = vshrl.u32 %v3556, 7
        %v3558 = vsub.s32 4, %v3557
        %v3559 = vrot.slane %v560, %v3558
        %v3560 = vsel %vm3554, %v3559, 0.0
        %v3561 = vsel %vm3555, %v3559, 0.0
        %v3562 = vmul.f32 %v3544, %v3560
        %v3563 = vmul.f32 %v3547, %v3561
        %v3564 = vadd.f32 %v3463, %v3562
        %v3565 = vadd.f32 %v3464, %v3563
        %v3566 = vlaneseq
        %v3567 = vshrl.u32 %v3566, 7
        %v3568 = vsub.s32 5, %v3567
        %v3569 = vrot.slane %v564, %v3568
        %vm3570 = vcmp.eq.s32.totalorder %v535, %v3569
        %vm3571 = vcmp.eq.s32.totalorder %v536, %v3569
        %vm3572 = vcmp.eq.s32.totalorder %v537, %v3569
        %vm3573 = vcmp.eq.s32.totalorder %v538, %v3569
        %vm3574 = vcmp.eq.s32.totalorder %v539, %v3569
        %vm3575 = vcmp.eq.s32.totalorder %v540, %v3569
        %vm3576 = vcmp.eq.s32.totalorder %v541, %v3569
        %vm3577 = vcmp.eq.s32.totalorder %v542, %v3569
        %vm3578 = vcmp.eq.s32.totalorder %v543, %v3569
        %vm3579 = vcmp.eq.s32.totalorder %v544, %v3569
        %vm3580 = vcmp.eq.s32.totalorder %v545, %v3569
        %vm3581 = vcmp.eq.s32.totalorder %v546, %v3569
        %vm3582 = vcmp.eq.s32.totalorder %v547, %v3569
        %vm3583 = vcmp.eq.s32.totalorder %v548, %v3569
        %vm3584 = vcmp.eq.s32.totalorder %v549, %v3569
        %vm3585 = vcmp.eq.s32.totalorder %v550, %v3569
        %v3586 = vsel %vm3570, 1.0, 0.0
        %v3587 = vsel %vm3571, 1.0, 0.0
        %v3588 = vsel %vm3572, 1.0, 0.0
        %v3589 = vsel %vm3573, 1.0, 0.0
        %v3590 = vsel %vm3574, 1.0, 0.0
        %v3591 = vsel %vm3575, 1.0, 0.0
        %v3592 = vsel %vm3576, 1.0, 0.0
        %v3593 = vsel %vm3577, 1.0, 0.0
        %v3594 = vsel %vm3578, 1.0, 0.0
        %v3595 = vsel %vm3579, 1.0, 0.0
        %v3596 = vsel %vm3580, 1.0, 0.0
        %v3597 = vsel %vm3581, 1.0, 0.0
        %v3598 = vsel %vm3582, 1.0, 0.0
        %v3599 = vsel %vm3583, 1.0, 0.0
        %v3600 = vsel %vm3584, 1.0, 0.0
        %v3601 = vsel %vm3585, 1.0, 0.0
        %v3602 = vpack.c.bf16 %v3587, %v3586
        %v3603 = vpack.c.bf16 %v3589, %v3588
        %v3604 = vpack.c.bf16 %v3591, %v3590
        %v3605 = vpack.c.bf16 %v3593, %v3592
        %v3606 = vpack.c.bf16 %v3595, %v3594
        %v3607 = vpack.c.bf16 %v3597, %v3596
        %v3608 = vpack.c.bf16 %v3599, %v3598
        %v3609 = vpack.c.bf16 %v3601, %v3600
        %3610 = vmatprep.subr.bf16.mxu0 0
        %3611 = vmatpush1.bf16.msra.mxu0 %v3609
        %3612 = vmatprep.subr.bf16.mxu0 0
        %3613 = vmatpush1.bf16.msra.mxu0 %v3608
        %3614 = vmatprep.subr.bf16.mxu0 0
        %3615 = vmatpush1.bf16.msra.mxu0 %v3607
        %3616 = vmatprep.subr.bf16.mxu0 0
        %3617 = vmatpush1.bf16.msra.mxu0 %v3606
        %3618 = vmatprep.subr.bf16.mxu0 0
        %3619 = vmatpush1.bf16.msra.mxu0 %v3605
        %3620 = vmatprep.subr.bf16.mxu0 0
        %3621 = vmatpush1.bf16.msra.mxu0 %v3604
        %3622 = vmatprep.subr.bf16.mxu0 0
        %3623 = vmatpush1.bf16.msra.mxu0 %v3603
        %3624 = vmatprep.subr.bf16.mxu0 0
        %3625 = vmatpush1.bf16.msra.mxu0 %v3602
        %3626 = vmatprep.subr.bf16.mxu0 0
        %3627 = vmatpush2.bf16.msra.mxu0 0
        %3628 = vmatprep.subr.bf16.mxu0 0
        %3629 = vmatpush2.bf16.msra.mxu0 0
        %3630 = vmatprep.subr.bf16.mxu0 0
        %3631 = vmatpush2.bf16.msra.mxu0 0
        %3632 = vmatprep.subr.bf16.mxu0 0
        %3633 = vmatpush2.bf16.msra.mxu0 0
        %3634 = vmatprep.subr.bf16.mxu0 0
        %3635 = vmatpush2.bf16.msra.mxu0 0
        %3636 = vmatprep.subr.bf16.mxu0 0
        %3637 = vmatpush2.bf16.msra.mxu0 0
        %3638 = vmatprep.subr.bf16.mxu0 0
        %3639 = vmatpush2.bf16.msra.mxu0 0
        %3640 = vmatprep.subr.bf16.mxu0 0
        %3641 = vmatpush2.bf16.msra.mxu0 0
        %3642 = vmatprep.mubr.bf16.mxu0 0
        %3643 = vmatmul.mubr.bf16.gmra.mxu0 %v3103
        %v3644 = vpop.f32.mrf.mxu0
        %v3645 = vadd.f32 0.0, %v3644
        %v3646 = vpop.f32.mrf.mxu0
        %v3647 = vpop.f32.mrf.mxu0
        %v3648 = vadd.f32 0.0, %v3647
        %v3649 = vpop.f32.mrf.mxu0
        %3650 = vdwg.mxu0
        %v3651 = vlaneseq
        %v3652 = vshrl.u32 %v3651, 7
        %v3653 = vsub.s32 5, %v3652
        %v3654 = vrot.slane %v568, %v3653
        %vm3655 = vcmp.eq.s32.totalorder %v551, %v3654
        %vm3656 = vcmp.eq.s32.totalorder %v552, %v3654
        %v3657 = vlaneseq
        %v3658 = vshrl.u32 %v3657, 7
        %v3659 = vsub.s32 5, %v3658
        %v3660 = vrot.slane %v560, %v3659
        %v3661 = vsel %vm3655, %v3660, 0.0
        %v3662 = vsel %vm3656, %v3660, 0.0
        %v3663 = vmul.f32 %v3645, %v3661
        %v3664 = vmul.f32 %v3648, %v3662
        %v3665 = vadd.f32 %v3564, %v3663
        %v3666 = vadd.f32 %v3565, %v3664
        %v3667 = vlaneseq
        %v3668 = vshrl.u32 %v3667, 7
        %v3669 = vsub.s32 6, %v3668
        %v3670 = vrot.slane %v564, %v3669
        %vm3671 = vcmp.eq.s32.totalorder %v535, %v3670
        %vm3672 = vcmp.eq.s32.totalorder %v536, %v3670
        %vm3673 = vcmp.eq.s32.totalorder %v537, %v3670
        %vm3674 = vcmp.eq.s32.totalorder %v538, %v3670
        %vm3675 = vcmp.eq.s32.totalorder %v539, %v3670
        %vm3676 = vcmp.eq.s32.totalorder %v540, %v3670
        %vm3677 = vcmp.eq.s32.totalorder %v541, %v3670
        %vm3678 = vcmp.eq.s32.totalorder %v542, %v3670
        %vm3679 = vcmp.eq.s32.totalorder %v543, %v3670
        %vm3680 = vcmp.eq.s32.totalorder %v544, %v3670
        %vm3681 = vcmp.eq.s32.totalorder %v545, %v3670
        %vm3682 = vcmp.eq.s32.totalorder %v546, %v3670
        %vm3683 = vcmp.eq.s32.totalorder %v547, %v3670
        %vm3684 = vcmp.eq.s32.totalorder %v548, %v3670
        %vm3685 = vcmp.eq.s32.totalorder %v549, %v3670
        %vm3686 = vcmp.eq.s32.totalorder %v550, %v3670
        %v3687 = vsel %vm3671, 1.0, 0.0
        %v3688 = vsel %vm3672, 1.0, 0.0
        %v3689 = vsel %vm3673, 1.0, 0.0
        %v3690 = vsel %vm3674, 1.0, 0.0
        %v3691 = vsel %vm3675, 1.0, 0.0
        %v3692 = vsel %vm3676, 1.0, 0.0
        %v3693 = vsel %vm3677, 1.0, 0.0
        %v3694 = vsel %vm3678, 1.0, 0.0
        %v3695 = vsel %vm3679, 1.0, 0.0
        %v3696 = vsel %vm3680, 1.0, 0.0
        %v3697 = vsel %vm3681, 1.0, 0.0
        %v3698 = vsel %vm3682, 1.0, 0.0
        %v3699 = vsel %vm3683, 1.0, 0.0
        %v3700 = vsel %vm3684, 1.0, 0.0
        %v3701 = vsel %vm3685, 1.0, 0.0
        %v3702 = vsel %vm3686, 1.0, 0.0
        %v3703 = vpack.c.bf16 %v3688, %v3687
        %v3704 = vpack.c.bf16 %v3690, %v3689
        %v3705 = vpack.c.bf16 %v3692, %v3691
        %v3706 = vpack.c.bf16 %v3694, %v3693
        %v3707 = vpack.c.bf16 %v3696, %v3695
        %v3708 = vpack.c.bf16 %v3698, %v3697
        %v3709 = vpack.c.bf16 %v3700, %v3699
        %v3710 = vpack.c.bf16 %v3702, %v3701
        %3711 = vmatprep.subr.bf16.mxu0 0
        %3712 = vmatpush1.bf16.msra.mxu0 %v3710
        %3713 = vmatprep.subr.bf16.mxu0 0
        %3714 = vmatpush1.bf16.msra.mxu0 %v3709
        %3715 = vmatprep.subr.bf16.mxu0 0
        %3716 = vmatpush1.bf16.msra.mxu0 %v3708
        %3717 = vmatprep.subr.bf16.mxu0 0
        %3718 = vmatpush1.bf16.msra.mxu0 %v3707
        %3719 = vmatprep.subr.bf16.mxu0 0
        %3720 = vmatpush1.bf16.msra.mxu0 %v3706
        %3721 = vmatprep.subr.bf16.mxu0 0
        %3722 = vmatpush1.bf16.msra.mxu0 %v3705
        %3723 = vmatprep.subr.bf16.mxu0 0
        %3724 = vmatpush1.bf16.msra.mxu0 %v3704
        %3725 = vmatprep.subr.bf16.mxu0 0
        %3726 = vmatpush1.bf16.msra.mxu0 %v3703
        %3727 = vmatprep.subr.bf16.mxu0 0
        %3728 = vmatpush2.bf16.msra.mxu0 0
        %3729 = vmatprep.subr.bf16.mxu0 0
        %3730 = vmatpush2.bf16.msra.mxu0 0
        %3731 = vmatprep.subr.bf16.mxu0 0
        %3732 = vmatpush2.bf16.msra.mxu0 0
        %3733 = vmatprep.subr.bf16.mxu0 0
        %3734 = vmatpush2.bf16.msra.mxu0 0
        %3735 = vmatprep.subr.bf16.mxu0 0
        %3736 = vmatpush2.bf16.msra.mxu0 0
        %3737 = vmatprep.subr.bf16.mxu0 0
        %3738 = vmatpush2.bf16.msra.mxu0 0
        %3739 = vmatprep.subr.bf16.mxu0 0
        %3740 = vmatpush2.bf16.msra.mxu0 0
        %3741 = vmatprep.subr.bf16.mxu0 0
        %3742 = vmatpush2.bf16.msra.mxu0 0
        %3743 = vmatprep.mubr.bf16.mxu0 0
        %3744 = vmatmul.mubr.bf16.gmra.mxu0 %v3103
        %v3745 = vpop.f32.mrf.mxu0
        %v3746 = vadd.f32 0.0, %v3745
        %v3747 = vpop.f32.mrf.mxu0
        %v3748 = vpop.f32.mrf.mxu0
        %v3749 = vadd.f32 0.0, %v3748
        %v3750 = vpop.f32.mrf.mxu0
        %3751 = vdwg.mxu0
        %v3752 = vlaneseq
        %v3753 = vshrl.u32 %v3752, 7
        %v3754 = vsub.s32 6, %v3753
        %v3755 = vrot.slane %v568, %v3754
        %vm3756 = vcmp.eq.s32.totalorder %v551, %v3755
        %vm3757 = vcmp.eq.s32.totalorder %v552, %v3755
        %v3758 = vlaneseq
        %v3759 = vshrl.u32 %v3758, 7
        %v3760 = vsub.s32 6, %v3759
        %v3761 = vrot.slane %v560, %v3760
        %v3762 = vsel %vm3756, %v3761, 0.0
        %v3763 = vsel %vm3757, %v3761, 0.0
        %v3764 = vmul.f32 %v3746, %v3762
        %v3765 = vmul.f32 %v3749, %v3763
        %v3766 = vadd.f32 %v3665, %v3764
        %v3767 = vadd.f32 %v3666, %v3765
        %v3768 = vlaneseq
        %v3769 = vshrl.u32 %v3768, 7
        %v3770 = vsub.s32 7, %v3769
        %v3771 = vrot.slane %v564, %v3770
        %vm3772 = vcmp.eq.s32.totalorder %v535, %v3771
        %vm3773 = vcmp.eq.s32.totalorder %v536, %v3771
        %vm3774 = vcmp.eq.s32.totalorder %v537, %v3771
        %vm3775 = vcmp.eq.s32.totalorder %v538, %v3771
        %vm3776 = vcmp.eq.s32.totalorder %v539, %v3771
        %vm3777 = vcmp.eq.s32.totalorder %v540, %v3771
        %vm3778 = vcmp.eq.s32.totalorder %v541, %v3771
        %vm3779 = vcmp.eq.s32.totalorder %v542, %v3771
        %vm3780 = vcmp.eq.s32.totalorder %v543, %v3771
        %vm3781 = vcmp.eq.s32.totalorder %v544, %v3771
        %vm3782 = vcmp.eq.s32.totalorder %v545, %v3771
        %vm3783 = vcmp.eq.s32.totalorder %v546, %v3771
        %vm3784 = vcmp.eq.s32.totalorder %v547, %v3771
        %vm3785 = vcmp.eq.s32.totalorder %v548, %v3771
        %vm3786 = vcmp.eq.s32.totalorder %v549, %v3771
        %vm3787 = vcmp.eq.s32.totalorder %v550, %v3771
        %v3788 = vsel %vm3772, 1.0, 0.0
        %v3789 = vsel %vm3773, 1.0, 0.0
        %v3790 = vsel %vm3774, 1.0, 0.0
        %v3791 = vsel %vm3775, 1.0, 0.0
        %v3792 = vsel %vm3776, 1.0, 0.0
        %v3793 = vsel %vm3777, 1.0, 0.0
        %v3794 = vsel %vm3778, 1.0, 0.0
        %v3795 = vsel %vm3779, 1.0, 0.0
        %v3796 = vsel %vm3780, 1.0, 0.0
        %v3797 = vsel %vm3781, 1.0, 0.0
        %v3798 = vsel %vm3782, 1.0, 0.0
        %v3799 = vsel %vm3783, 1.0, 0.0
        %v3800 = vsel %vm3784, 1.0, 0.0
        %v3801 = vsel %vm3785, 1.0, 0.0
        %v3802 = vsel %vm3786, 1.0, 0.0
        %v3803 = vsel %vm3787, 1.0, 0.0
        %v3804 = vpack.c.bf16 %v3789, %v3788
        %v3805 = vpack.c.bf16 %v3791, %v3790
        %v3806 = vpack.c.bf16 %v3793, %v3792
        %v3807 = vpack.c.bf16 %v3795, %v3794
        %v3808 = vpack.c.bf16 %v3797, %v3796
        %v3809 = vpack.c.bf16 %v3799, %v3798
        %v3810 = vpack.c.bf16 %v3801, %v3800
        %v3811 = vpack.c.bf16 %v3803, %v3802
        %3812 = vmatprep.subr.bf16.mxu0 0
        %3813 = vmatpush1.bf16.msra.mxu0 %v3811
        %3814 = vmatprep.subr.bf16.mxu0 0
        %3815 = vmatpush1.bf16.msra.mxu0 %v3810
        %3816 = vmatprep.subr.bf16.mxu0 0
        %3817 = vmatpush1.bf16.msra.mxu0 %v3809
        %3818 = vmatprep.subr.bf16.mxu0 0
        %3819 = vmatpush1.bf16.msra.mxu0 %v3808
        %3820 = vmatprep.subr.bf16.mxu0 0
        %3821 = vmatpush1.bf16.msra.mxu0 %v3807
        %3822 = vmatprep.subr.bf16.mxu0 0
        %3823 = vmatpush1.bf16.msra.mxu0 %v3806
        %3824 = vmatprep.subr.bf16.mxu0 0
        %3825 = vmatpush1.bf16.msra.mxu0 %v3805
        %3826 = vmatprep.subr.bf16.mxu0 0
        %3827 = vmatpush1.bf16.msra.mxu0 %v3804
        %3828 = vmatprep.subr.bf16.mxu0 0
        %3829 = vmatpush2.bf16.msra.mxu0 0
        %3830 = vmatprep.subr.bf16.mxu0 0
        %3831 = vmatpush2.bf16.msra.mxu0 0
        %3832 = vmatprep.subr.bf16.mxu0 0
        %3833 = vmatpush2.bf16.msra.mxu0 0
        %3834 = vmatprep.subr.bf16.mxu0 0
        %3835 = vmatpush2.bf16.msra.mxu0 0
        %3836 = vmatprep.subr.bf16.mxu0 0
        %3837 = vmatpush2.bf16.msra.mxu0 0
        %3838 = vmatprep.subr.bf16.mxu0 0
        %3839 = vmatpush2.bf16.msra.mxu0 0
        %3840 = vmatprep.subr.bf16.mxu0 0
        %3841 = vmatpush2.bf16.msra.mxu0 0
        %3842 = vmatprep.subr.bf16.mxu0 0
        %3843 = vmatpush2.bf16.msra.mxu0 0
        %3844 = vmatprep.mubr.bf16.mxu0 0
        %3845 = vmatmul.mubr.bf16.gmra.mxu0 %v3103
        %v3846 = vpop.f32.mrf.mxu0
        %v3847 = vadd.f32 0.0, %v3846
        %v3848 = vpop.f32.mrf.mxu0
        %v3849 = vpop.f32.mrf.mxu0
        %v3850 = vadd.f32 0.0, %v3849
        %v3851 = vpop.f32.mrf.mxu0
        %3852 = vdwg.mxu0
        %v3853 = vlaneseq
        %v3854 = vshrl.u32 %v3853, 7
        %v3855 = vsub.s32 7, %v3854
        %v3856 = vrot.slane %v568, %v3855
        %vm3857 = vcmp.eq.s32.totalorder %v551, %v3856
        %vm3858 = vcmp.eq.s32.totalorder %v552, %v3856
        %v3859 = vlaneseq
        %v3860 = vshrl.u32 %v3859, 7
        %v3861 = vsub.s32 7, %v3860
        %v3862 = vrot.slane %v560, %v3861
        %v3863 = vsel %vm3857, %v3862, 0.0
        %v3864 = vsel %vm3858, %v3862, 0.0
        %v3865 = vmul.f32 %v3847, %v3863
        %v3866 = vmul.f32 %v3850, %v3864
        %v3867 = vadd.f32 %v3766, %v3865
        %v3868 = vadd.f32 %v3767, %v3866
        %v3869 = vrot.slane %v3867, 4
        %v3870 = vadd.f32 %v3867, %v3869
        %v3871 = vrot.slane %v3870, 2
        %v3872 = vadd.f32 %v3870, %v3871
        %v3873 = vrot.slane %v3872, 1
        %v3874 = vadd.f32 %v3872, %v3873
        %v3875 = vrot.slane %v3868, 4
        %v3876 = vadd.f32 %v3868, %v3875
        %v3877 = vrot.slane %v3876, 2
        %v3878 = vadd.f32 %v3876, %v3877
        %v3879 = vrot.slane %v3878, 1
        %v3880 = vadd.f32 %v3878, %v3879
        %vm3881 = vcmask 1040384
        %v3882 = vsel %vm3881, %v1396, %v1402
        %vm3883 = vcmask 1041408
        %v3884 = vsel %vm3883, %v3882, %v2222
        %vm3885 = vcmask 1042432
        %v3886 = vsel %vm3885, %v3884, %v2228
        %vm3887 = vcmask 1043456
        %v3888 = vsel %vm3887, %v3886, %v3048
        %vm3889 = vcmask 1044480
        %v3890 = vsel %vm3889, %v3888, %v3054
        %vm3891 = vcmask 1045504
        %v3892 = vsel %vm3891, %v3890, %v3874
        %vm3893 = vcmask 1046528
        %v3894 = vsel %vm3893, %v3892, %v3880
        %v3895 = vld [vmem:[%s524] sm:$0xff]
        %v3896 = vadd.f32 %v3894, %v3895
        %v3897 = vld [vmem:[%s5] sm:$0xf]
        %v3898 = vld [vmem:[%s5 + $0x4] sm:$0xf]
        %v3899 = vld [vmem:[%s5 + $0x8] sm:$0xf]
        %v3900 = vld [vmem:[%s5 + $0xc] sm:$0xf]
        %v3901 = vld [vmem:[%s5 + $0x10] sm:$0xf]
        %v3902 = vld [vmem:[%s5 + $0x14] sm:$0xf]
        %v3903 = vld [vmem:[%s5 + $0x18] sm:$0xf]
        %v3904 = vld [vmem:[%s5 + $0x1c] sm:$0xf]
        %v3905 = vpack.c.bf16 %v3896, %v3896
        %v3914 = vunpack.c.l.b16 %v3897
        %v3915 = vunpack.c.l.b16 %v3898
        %v3916 = vunpack.c.l.b16 %v3899
        %v3917 = vunpack.c.l.b16 %v3900
        %v3918 = vunpack.c.l.b16 %v3901
        %v3919 = vunpack.c.l.b16 %v3902
        %v3920 = vunpack.c.l.b16 %v3903
        %v3921 = vunpack.c.l.b16 %v3904
        %v3922 = vpack.c.b16 %v3915, %v3914
        %v3923 = vpack.c.b16 %v3917, %v3916
        %v3924 = vpack.c.b16 %v3919, %v3918
        %v3925 = vpack.c.b16 %v3921, %v3920
        %vm3926 = vcmask 64512
        %v3928 = vsel %vm3926, %v3922, 0
        %v3931 = vsel %vm3926, %v3923, 0
        %v3934 = vsel %vm3926, %v3924, 0
        %v3937 = vsel %vm3926, %v3925, 0
        %v3940 = vsel %vm3887, %v3905, 0
        %3942 = vmatprep.subr.bf16.mxu0 0
        %3943 = vmatpush1.bf16.msra.mxu0 0
        %3944 = vmatprep.subr.bf16.mxu0 0
        %3945 = vmatpush1.bf16.msra.mxu0 0
        %3946 = vmatprep.subr.bf16.mxu0 0
        %3947 = vmatpush1.bf16.msra.mxu0 0
        %3948 = vmatprep.subr.bf16.mxu0 0
        %3949 = vmatpush1.bf16.msra.mxu0 0
        %3950 = vmatprep.subr.bf16.mxu0 0
        %3951 = vmatpush1.bf16.msra.mxu0 0
        %3952 = vmatprep.subr.bf16.mxu0 0
        %3953 = vmatpush1.bf16.msra.mxu0 0
        %3954 = vmatprep.subr.bf16.mxu0 0
        %3955 = vmatpush1.bf16.msra.mxu0 0
        %3956 = vmatprep.subr.bf16.mxu0 0
        %3957 = vmatpush1.bf16.msra.mxu0 %v3940
        %3958 = vmatprep.subr.bf16.mxu0 0
        %3959 = vmatpush2.bf16.msra.mxu0 0
        %3960 = vmatprep.subr.bf16.mxu0 0
        %3961 = vmatpush2.bf16.msra.mxu0 0
        %3962 = vmatprep.subr.bf16.mxu0 0
        %3963 = vmatpush2.bf16.msra.mxu0 0
        %3964 = vmatprep.subr.bf16.mxu0 0
        %3965 = vmatpush2.bf16.msra.mxu0 0
        %3966 = vmatprep.subr.bf16.mxu0 0
        %3967 = vmatpush2.bf16.msra.mxu0 0
        %3968 = vmatprep.subr.bf16.mxu0 0
        %3969 = vmatpush2.bf16.msra.mxu0 0
        %3970 = vmatprep.subr.bf16.mxu0 0
        %3971 = vmatpush2.bf16.msra.mxu0 0
        %3972 = vmatprep.subr.bf16.mxu0 0
        %3973 = vmatpush2.bf16.msra.mxu0 0
        %3974 = vmatprep.mubr.bf16.mxu0 0
        %3975 = vmatmul.mubr.bf16.gmra.mxu0 %v3928
        %v3976 = vpop.f32.mrf.mxu0
        %v3977 = vadd.f32 0.0, %v3976
        %v3978 = vpop.f32.mrf.mxu0
        %v3979 = vpop.f32.mrf.mxu0
        %v3980 = vadd.f32 0.0, %v3979
        %v3981 = vpop.f32.mrf.mxu0
        %3982 = vmatprep.mubr.bf16.mxu0 0
        %3983 = vmatmul.mubr.bf16.gmra.mxu0 %v3931
        %v3984 = vpop.f32.mrf.mxu0
        %v3985 = vadd.f32 0.0, %v3984
        %v3986 = vpop.f32.mrf.mxu0
        %v3987 = vpop.f32.mrf.mxu0
        %v3988 = vadd.f32 0.0, %v3987
        %v3989 = vpop.f32.mrf.mxu0
        %3990 = vmatprep.mubr.bf16.mxu0 0
        %3991 = vmatmul.mubr.bf16.gmra.mxu0 %v3934
        %v3992 = vpop.f32.mrf.mxu0
        %v3993 = vadd.f32 0.0, %v3992
        %v3994 = vpop.f32.mrf.mxu0
        %v3995 = vpop.f32.mrf.mxu0
        %v3996 = vadd.f32 0.0, %v3995
        %v3997 = vpop.f32.mrf.mxu0
        %3998 = vmatprep.mubr.bf16.mxu0 0
        %3999 = vmatmul.mubr.bf16.gmra.mxu0 %v3937
        %v4000 = vpop.f32.mrf.mxu0
        %v4001 = vadd.f32 0.0, %v4000
        %v4002 = vpop.f32.mrf.mxu0
        %v4003 = vpop.f32.mrf.mxu0
        %v4004 = vadd.f32 0.0, %v4003
        %v4005 = vpop.f32.mrf.mxu0
        %4006 = vdwg.mxu0
        %v4007 = vmax.f32 %v3977, 0.0
        %v4008 = vmax.f32 %v3980, 0.0
        %v4009 = vmax.f32 %v3985, 0.0
        %v4010 = vmax.f32 %v3988, 0.0
        %v4011 = vmax.f32 %v3993, 0.0
        %v4012 = vmax.f32 %v3996, 0.0
        %v4013 = vmax.f32 %v4001, 0.0
        %v4014 = vmax.f32 %v4004, 0.0
        %v4015 = vld [vmem:[%s6] sm:$0xf]
        %v4016 = vld [vmem:[%s6 + $0x4] sm:$0xf]
        %v4017 = vpack.c.bf16 %v4008, %v4007
        %v4018 = vpack.c.bf16 %v4010, %v4009
        %v4019 = vpack.c.bf16 %v4012, %v4011
        %v4020 = vpack.c.bf16 %v4014, %v4013
        %v4023 = vunpack.c.l.b16 %v4015
        %v4024 = vunpack.c.l.b16 %v4016
        %v4025 = vpack.c.b16 %v4024, %v4023
        %vm4026 = vcmask 523264
        %v4028 = vsel %vm4026, %v4025, 0
        %4030 = vmatprep.subr.bf16.mxu0 0
        %4031 = vmatpush1.bf16.msra.mxu0 0
        %4032 = vmatprep.subr.bf16.mxu0 0
        %4033 = vmatpush1.bf16.msra.mxu0 0
        %4034 = vmatprep.subr.bf16.mxu0 0
        %4035 = vmatpush1.bf16.msra.mxu0 0
        %4036 = vmatprep.subr.bf16.mxu0 0
        %4037 = vmatpush1.bf16.msra.mxu0 0
        %4038 = vmatprep.subr.bf16.mxu0 0
        %4039 = vmatpush1.bf16.msra.mxu0 %v4020
        %4040 = vmatprep.subr.bf16.mxu0 0
        %4041 = vmatpush1.bf16.msra.mxu0 %v4019
        %4042 = vmatprep.subr.bf16.mxu0 0
        %4043 = vmatpush1.bf16.msra.mxu0 %v4018
        %4044 = vmatprep.subr.bf16.mxu0 0
        %4045 = vmatpush1.bf16.msra.mxu0 %v4017
        %4046 = vmatprep.subr.bf16.mxu0 0
        %4047 = vmatpush2.bf16.msra.mxu0 0
        %4048 = vmatprep.subr.bf16.mxu0 0
        %4049 = vmatpush2.bf16.msra.mxu0 0
        %4050 = vmatprep.subr.bf16.mxu0 0
        %4051 = vmatpush2.bf16.msra.mxu0 0
        %4052 = vmatprep.subr.bf16.mxu0 0
        %4053 = vmatpush2.bf16.msra.mxu0 0
        %4054 = vmatprep.subr.bf16.mxu0 0
        %4055 = vmatpush2.bf16.msra.mxu0 0
        %4056 = vmatprep.subr.bf16.mxu0 0
        %4057 = vmatpush2.bf16.msra.mxu0 0
        %4058 = vmatprep.subr.bf16.mxu0 0
        %4059 = vmatpush2.bf16.msra.mxu0 0
        %4060 = vmatprep.subr.bf16.mxu0 0
        %4061 = vmatpush2.bf16.msra.mxu0 0
        %4062 = vmatprep.mubr.bf16.mxu0 0
        %4063 = vmatmul.mubr.bf16.gmra.mxu0 %v4028
        %v4064 = vpop.f32.mrf.mxu0
        %v4065 = vadd.f32 0.0, %v4064
        %v4066 = vpop.f32.mrf.mxu0
        %v4067 = vpop.f32.mrf.mxu0
        %v4068 = vadd.f32 0.0, %v4067
        %v4069 = vpop.f32.mrf.mxu0
        %4070 = vdwg.mxu0
        %v4071 = vmul.f32 %v4065, 1.442695
        %v4072 = vpow.pop %v4071
        %v4073 = vld [vmem:[%s528] sm:$0x1]
        %v4074 = vld [vmem:[%s528 + $0x1] sm:$0x1]
        %v4075 = vld [vmem:[%s528 + $0x2] sm:$0x1]
        %v4076 = vmul.f32 %v4073, %v4073
        %v4077 = vmul.f32 %v4074, %v4074
        %v4078 = vadd.f32 %v4076, %v4077
        %v4079 = vmul.f32 %v4075, %v4075
        %v4080 = vadd.f32 %v4078, %v4079
        %v4081 = vrsqrt.pop %v4080
        %v4082 = vmul.f32 %v4073, %v4081
        %v4083 = vmul.f32 %v4074, %v4081
        %v4084 = vmul.f32 %v4075, %v4081
        %v4085 = vmul.f32 %v4082, %v4083
        %v4086 = vmul.f32 %v4082, %v4084
        %v4087 = vmul.f32 %v4083, %v4084
        %v4088 = vmul.f32 %v4082, %v4082
        %v4089 = vmul.f32 %v4083, %v4083
        %v4090 = vmul.f32 %v4084, %v4084
        %v4091 = vmul.f32 %v4083, -0.48860252
        %v4092 = vmul.f32 %v4084, 0.48860252
        %v4093 = vmul.f32 %v4082, -0.48860252
        %v4094 = vmul.f32 %v4085, 1.0925485
        %v4095 = vmul.f32 %v4087, -1.0925485
        %v4096 = vmul.f32 %v4090, 0.9461747
        %v4097 = vsub.f32 %v4096, 0.31539157
        %v4098 = vmul.f32 %v4086, -1.0925485
        %v4099 = vsub.f32 %v4088, %v4089
        %v4100 = vmul.f32 %v4099, 0.54627424
        %v4101 = vmul.f32 %v4083, 0.5900436
        %v4102 = vmul.f32 %v4088, -3.0
        %v4103 = vadd.f32 %v4102, %v4089
        %v4104 = vmul.f32 %v4101, %v4103
        %v4105 = vmul.f32 %v4085, 2.8906114
        %v4106 = vmul.f32 %v4105, %v4084
        %v4107 = vmul.f32 %v4083, 0.4570458
        %v4108 = vmul.f32 %v4090, 5.0
        %v4109 = vsub.f32 1.0, %v4108
        %v4110 = vmul.f32 %v4107, %v4109
        %v4111 = vmul.f32 %v4084, 0.37317634
        %v4112 = vsub.f32 %v4108, 3.0
        %v4113 = vmul.f32 %v4111, %v4112
        %v4114 = vmul.f32 %v4082, 0.4570458
        %v4115 = vmul.f32 %v4114, %v4109
        %v4116 = vmul.f32 %v4084, 1.4453057
        %v4117 = vmul.f32 %v4116, %v4099
        %v4118 = vmul.f32 %v4082, 0.5900436
        %v4119 = vmul.f32 %v4089, 3.0
        %v4120 = vsub.f32 %v4088, %v4119
        %v4121 = vmul.f32 %v4118, %v4120
        %v4123 = vrot.slane %v4091, 7
        %v4126 = vrot.slane %v4092, 6
        %v4129 = vrot.slane %v4093, 5
        %v4132 = vrot.slane %v4094, 4
        %v4135 = vrot.slane %v4095, 3
        %v4138 = vrot.slane %v4097, 2
        %v4141 = vrot.slane %v4098, 1
        %v4144 = vrot.slane %v4104, 7
        %v4147 = vrot.slane %v4106, 6
        %v4150 = vrot.slane %v4110, 5
        %v4153 = vrot.slane %v4113, 4
        %v4156 = vrot.slane %v4115, 3
        %v4159 = vrot.slane %v4117, 2
        %v4162 = vrot.slane %v4121, 1
        %v4164 = vsel %vm3881, 0.2820948, %v4123
        %v4165 = vsel %vm3883, %v4164, %v4126
        %v4166 = vsel %vm3885, %v4165, %v4129
        %v4167 = vsel %vm3887, %v4166, %v4132
        %v4168 = vsel %vm3889, %v4167, %v4135
        %v4169 = vsel %vm3891, %v4168, %v4138
        %v4170 = vsel %vm3893, %v4169, %v4141
        %v4171 = vsel %vm3881, %v4100, %v4144
        %v4172 = vsel %vm3883, %v4171, %v4147
        %v4173 = vsel %vm3885, %v4172, %v4150
        %v4174 = vsel %vm3887, %v4173, %v4153
        %v4175 = vsel %vm3889, %v4174, %v4156
        %v4176 = vsel %vm3891, %v4175, %v4159
        %v4177 = vsel %vm3893, %v4176, %v4162
        %v4178 = vld [vmem:[%s7] sm:$0xf]
        %v4179 = vld [vmem:[%s7 + $0x4] sm:$0xf]
        %v4180 = vld [vmem:[%s7 + $0x8] sm:$0xf]
        %v4181 = vld [vmem:[%s7 + $0xc] sm:$0xf]
        %v4182 = vld [vmem:[%s7 + $0x10] sm:$0xf]
        %v4183 = vld [vmem:[%s7 + $0x14] sm:$0xf]
        %v4184 = vld [vmem:[%s7 + $0x18] sm:$0xf]
        %v4185 = vld [vmem:[%s7 + $0x1c] sm:$0xf]
        %v4186 = vpack.c.bf16 %v4177, %v4170
        %v4187 = vld [vmem:[%s8] sm:$0xf]
        %v4188 = vld [vmem:[%s8 + $0x4] sm:$0xf]
        %v4189 = vld [vmem:[%s8 + $0x8] sm:$0xf]
        %v4190 = vld [vmem:[%s8 + $0xc] sm:$0xf]
        %v4191 = vld [vmem:[%s8 + $0x10] sm:$0xf]
        %v4192 = vld [vmem:[%s8 + $0x14] sm:$0xf]
        %v4193 = vld [vmem:[%s8 + $0x18] sm:$0xf]
        %v4194 = vld [vmem:[%s8 + $0x1c] sm:$0xf]
        %v4195 = vpack.c.bf16 %v4068, %v4065
        %v4204 = vunpack.c.l.b16 %v4187
        %v4205 = vunpack.c.l.b16 %v4188
        %v4206 = vunpack.c.l.b16 %v4189
        %v4207 = vunpack.c.l.b16 %v4190
        %v4208 = vunpack.c.l.b16 %v4191
        %v4209 = vunpack.c.l.b16 %v4192
        %v4210 = vunpack.c.l.b16 %v4193
        %v4211 = vunpack.c.l.b16 %v4194
        %v4212 = vpack.c.b16 %v4205, %v4204
        %v4213 = vpack.c.b16 %v4207, %v4206
        %v4214 = vpack.c.b16 %v4209, %v4208
        %v4215 = vpack.c.b16 %v4211, %v4210
        %vm4216 = vcmask 130048
        %v4218 = vsel %vm4216, %v4212, 0
        %v4221 = vsel %vm4216, %v4213, 0
        %v4224 = vsel %vm4216, %v4214, 0
        %v4227 = vsel %vm4216, %v4215, 0
        %4229 = vmatprep.subr.bf16.mxu0 0
        %4230 = vmatpush1.bf16.msra.mxu0 0
        %4231 = vmatprep.subr.bf16.mxu0 0
        %4232 = vmatpush1.bf16.msra.mxu0 0
        %4233 = vmatprep.subr.bf16.mxu0 0
        %4234 = vmatpush1.bf16.msra.mxu0 0
        %4235 = vmatprep.subr.bf16.mxu0 0
        %4236 = vmatpush1.bf16.msra.mxu0 0
        %4237 = vmatprep.subr.bf16.mxu0 0
        %4238 = vmatpush1.bf16.msra.mxu0 0
        %4239 = vmatprep.subr.bf16.mxu0 0
        %4240 = vmatpush1.bf16.msra.mxu0 0
        %4241 = vmatprep.subr.bf16.mxu0 0
        %4242 = vmatpush1.bf16.msra.mxu0 0
        %4243 = vmatprep.subr.bf16.mxu0 0
        %4244 = vmatpush1.bf16.msra.mxu0 %v4195
        %4245 = vmatprep.subr.bf16.mxu0 0
        %4246 = vmatpush2.bf16.msra.mxu0 0
        %4247 = vmatprep.subr.bf16.mxu0 0
        %4248 = vmatpush2.bf16.msra.mxu0 0
        %4249 = vmatprep.subr.bf16.mxu0 0
        %4250 = vmatpush2.bf16.msra.mxu0 0
        %4251 = vmatprep.subr.bf16.mxu0 0
        %4252 = vmatpush2.bf16.msra.mxu0 0
        %4253 = vmatprep.subr.bf16.mxu0 0
        %4254 = vmatpush2.bf16.msra.mxu0 0
        %4255 = vmatprep.subr.bf16.mxu0 0
        %4256 = vmatpush2.bf16.msra.mxu0 0
        %4257 = vmatprep.subr.bf16.mxu0 0
        %4258 = vmatpush2.bf16.msra.mxu0 0
        %4259 = vmatprep.subr.bf16.mxu0 0
        %4260 = vmatpush2.bf16.msra.mxu0 0
        %4261 = vmatprep.mubr.bf16.mxu0 0
        %4262 = vmatmul.mubr.bf16.gmra.mxu0 %v4218
        %v4263 = vpop.f32.mrf.mxu0
        %v4264 = vadd.f32 0.0, %v4263
        %v4265 = vpop.f32.mrf.mxu0
        %v4266 = vpop.f32.mrf.mxu0
        %v4267 = vadd.f32 0.0, %v4266
        %v4268 = vpop.f32.mrf.mxu0
        %4269 = vmatprep.mubr.bf16.mxu0 0
        %4270 = vmatmul.mubr.bf16.gmra.mxu0 %v4221
        %v4271 = vpop.f32.mrf.mxu0
        %v4272 = vadd.f32 0.0, %v4271
        %v4273 = vpop.f32.mrf.mxu0
        %v4274 = vpop.f32.mrf.mxu0
        %v4275 = vadd.f32 0.0, %v4274
        %v4276 = vpop.f32.mrf.mxu0
        %4277 = vmatprep.mubr.bf16.mxu0 0
        %4278 = vmatmul.mubr.bf16.gmra.mxu0 %v4224
        %v4279 = vpop.f32.mrf.mxu0
        %v4280 = vadd.f32 0.0, %v4279
        %v4281 = vpop.f32.mrf.mxu0
        %v4282 = vpop.f32.mrf.mxu0
        %v4283 = vadd.f32 0.0, %v4282
        %v4284 = vpop.f32.mrf.mxu0
        %4285 = vmatprep.mubr.bf16.mxu0 0
        %4286 = vmatmul.mubr.bf16.gmra.mxu0 %v4227
        %v4287 = vpop.f32.mrf.mxu0
        %v4288 = vadd.f32 0.0, %v4287
        %v4289 = vpop.f32.mrf.mxu0
        %v4290 = vpop.f32.mrf.mxu0
        %v4291 = vadd.f32 0.0, %v4290
        %v4292 = vpop.f32.mrf.mxu0
        %4293 = vdwg.mxu0
        %v4302 = vunpack.c.l.b16 %v4178
        %v4303 = vunpack.c.l.b16 %v4179
        %v4304 = vunpack.c.l.b16 %v4180
        %v4305 = vunpack.c.l.b16 %v4181
        %v4306 = vunpack.c.l.b16 %v4182
        %v4307 = vunpack.c.l.b16 %v4183
        %v4308 = vunpack.c.l.b16 %v4184
        %v4309 = vunpack.c.l.b16 %v4185
        %v4310 = vpack.c.b16 %v4303, %v4302
        %v4311 = vpack.c.b16 %v4305, %v4304
        %v4312 = vpack.c.b16 %v4307, %v4306
        %v4313 = vpack.c.b16 %v4309, %v4308
        %v4315 = vsel %vm4216, %v4310, 0
        %v4318 = vsel %vm4216, %v4311, 0
        %v4321 = vsel %vm4216, %v4312, 0
        %v4324 = vsel %vm4216, %v4313, 0
        %4326 = vmatprep.subr.bf16.mxu0 0
        %4327 = vmatpush1.bf16.msra.mxu0 0
        %4328 = vmatprep.subr.bf16.mxu0 0
        %4329 = vmatpush1.bf16.msra.mxu0 0
        %4330 = vmatprep.subr.bf16.mxu0 0
        %4331 = vmatpush1.bf16.msra.mxu0 0
        %4332 = vmatprep.subr.bf16.mxu0 0
        %4333 = vmatpush1.bf16.msra.mxu0 0
        %4334 = vmatprep.subr.bf16.mxu0 0
        %4335 = vmatpush1.bf16.msra.mxu0 0
        %4336 = vmatprep.subr.bf16.mxu0 0
        %4337 = vmatpush1.bf16.msra.mxu0 0
        %4338 = vmatprep.subr.bf16.mxu0 0
        %4339 = vmatpush1.bf16.msra.mxu0 0
        %4340 = vmatprep.subr.bf16.mxu0 0
        %4341 = vmatpush1.bf16.msra.mxu0 %v4186
        %4342 = vmatprep.subr.bf16.mxu0 0
        %4343 = vmatpush2.bf16.msra.mxu0 0
        %4344 = vmatprep.subr.bf16.mxu0 0
        %4345 = vmatpush2.bf16.msra.mxu0 0
        %4346 = vmatprep.subr.bf16.mxu0 0
        %4347 = vmatpush2.bf16.msra.mxu0 0
        %4348 = vmatprep.subr.bf16.mxu0 0
        %4349 = vmatpush2.bf16.msra.mxu0 0
        %4350 = vmatprep.subr.bf16.mxu0 0
        %4351 = vmatpush2.bf16.msra.mxu0 0
        %4352 = vmatprep.subr.bf16.mxu0 0
        %4353 = vmatpush2.bf16.msra.mxu0 0
        %4354 = vmatprep.subr.bf16.mxu0 0
        %4355 = vmatpush2.bf16.msra.mxu0 0
        %4356 = vmatprep.subr.bf16.mxu0 0
        %4357 = vmatpush2.bf16.msra.mxu0 0
        %4358 = vmatprep.mubr.bf16.mxu0 0
        %4359 = vmatmul.mubr.bf16.gmra.mxu0 %v4315
        %v4360 = vpop.f32.mrf.mxu0
        %v4361 = vadd.f32 %v4264, %v4360
        %v4362 = vpop.f32.mrf.mxu0
        %v4363 = vpop.f32.mrf.mxu0
        %v4364 = vadd.f32 %v4267, %v4363
        %v4365 = vpop.f32.mrf.mxu0
        %4366 = vmatprep.mubr.bf16.mxu0 0
        %4367 = vmatmul.mubr.bf16.gmra.mxu0 %v4318
        %v4368 = vpop.f32.mrf.mxu0
        %v4369 = vadd.f32 %v4272, %v4368
        %v4370 = vpop.f32.mrf.mxu0
        %v4371 = vpop.f32.mrf.mxu0
        %v4372 = vadd.f32 %v4275, %v4371
        %v4373 = vpop.f32.mrf.mxu0
        %4374 = vmatprep.mubr.bf16.mxu0 0
        %4375 = vmatmul.mubr.bf16.gmra.mxu0 %v4321
        %v4376 = vpop.f32.mrf.mxu0
        %v4377 = vadd.f32 %v4280, %v4376
        %v4378 = vpop.f32.mrf.mxu0
        %v4379 = vpop.f32.mrf.mxu0
        %v4380 = vadd.f32 %v4283, %v4379
        %v4381 = vpop.f32.mrf.mxu0
        %4382 = vmatprep.mubr.bf16.mxu0 0
        %4383 = vmatmul.mubr.bf16.gmra.mxu0 %v4324
        %v4384 = vpop.f32.mrf.mxu0
        %v4385 = vadd.f32 %v4288, %v4384
        %v4386 = vpop.f32.mrf.mxu0
        %v4387 = vpop.f32.mrf.mxu0
        %v4388 = vadd.f32 %v4291, %v4387
        %v4389 = vpop.f32.mrf.mxu0
        %4390 = vdwg.mxu0
        %v4391 = vmax.f32 %v4361, 0.0
        %v4392 = vmax.f32 %v4364, 0.0
        %v4393 = vmax.f32 %v4369, 0.0
        %v4394 = vmax.f32 %v4372, 0.0
        %v4395 = vmax.f32 %v4377, 0.0
        %v4396 = vmax.f32 %v4380, 0.0
        %v4397 = vmax.f32 %v4385, 0.0
        %v4398 = vmax.f32 %v4388, 0.0
        %v4399 = vld [vmem:[%s9] sm:$0xf]
        %v4400 = vld [vmem:[%s9 + $0x4] sm:$0xf]
        %v4401 = vld [vmem:[%s9 + $0x8] sm:$0xf]
        %v4402 = vld [vmem:[%s9 + $0xc] sm:$0xf]
        %v4403 = vld [vmem:[%s9 + $0x10] sm:$0xf]
        %v4404 = vld [vmem:[%s9 + $0x14] sm:$0xf]
        %v4405 = vld [vmem:[%s9 + $0x18] sm:$0xf]
        %v4406 = vld [vmem:[%s9 + $0x1c] sm:$0xf]
        %v4407 = vpack.c.bf16 %v4392, %v4391
        %v4408 = vpack.c.bf16 %v4394, %v4393
        %v4409 = vpack.c.bf16 %v4396, %v4395
        %v4410 = vpack.c.bf16 %v4398, %v4397
        %v4419 = vunpack.c.l.b16 %v4399
        %v4420 = vunpack.c.l.b16 %v4400
        %v4421 = vunpack.c.l.b16 %v4401
        %v4422 = vunpack.c.l.b16 %v4402
        %v4423 = vunpack.c.l.b16 %v4403
        %v4424 = vunpack.c.l.b16 %v4404
        %v4425 = vunpack.c.l.b16 %v4405
        %v4426 = vunpack.c.l.b16 %v4406
        %v4427 = vpack.c.b16 %v4420, %v4419
        %v4428 = vpack.c.b16 %v4422, %v4421
        %v4429 = vpack.c.b16 %v4424, %v4423
        %v4430 = vpack.c.b16 %v4426, %v4425
        %v4432 = vsel %vm4026, %v4427, 0
        %v4435 = vsel %vm4026, %v4428, 0
        %v4438 = vsel %vm4026, %v4429, 0
        %v4441 = vsel %vm4026, %v4430, 0
        %4443 = vmatprep.subr.bf16.mxu0 0
        %4444 = vmatpush1.bf16.msra.mxu0 0
        %4445 = vmatprep.subr.bf16.mxu0 0
        %4446 = vmatpush1.bf16.msra.mxu0 0
        %4447 = vmatprep.subr.bf16.mxu0 0
        %4448 = vmatpush1.bf16.msra.mxu0 0
        %4449 = vmatprep.subr.bf16.mxu0 0
        %4450 = vmatpush1.bf16.msra.mxu0 0
        %4451 = vmatprep.subr.bf16.mxu0 0
        %4452 = vmatpush1.bf16.msra.mxu0 %v4410
        %4453 = vmatprep.subr.bf16.mxu0 0
        %4454 = vmatpush1.bf16.msra.mxu0 %v4409
        %4455 = vmatprep.subr.bf16.mxu0 0
        %4456 = vmatpush1.bf16.msra.mxu0 %v4408
        %4457 = vmatprep.subr.bf16.mxu0 0
        %4458 = vmatpush1.bf16.msra.mxu0 %v4407
        %4459 = vmatprep.subr.bf16.mxu0 0
        %4460 = vmatpush2.bf16.msra.mxu0 0
        %4461 = vmatprep.subr.bf16.mxu0 0
        %4462 = vmatpush2.bf16.msra.mxu0 0
        %4463 = vmatprep.subr.bf16.mxu0 0
        %4464 = vmatpush2.bf16.msra.mxu0 0
        %4465 = vmatprep.subr.bf16.mxu0 0
        %4466 = vmatpush2.bf16.msra.mxu0 0
        %4467 = vmatprep.subr.bf16.mxu0 0
        %4468 = vmatpush2.bf16.msra.mxu0 0
        %4469 = vmatprep.subr.bf16.mxu0 0
        %4470 = vmatpush2.bf16.msra.mxu0 0
        %4471 = vmatprep.subr.bf16.mxu0 0
        %4472 = vmatpush2.bf16.msra.mxu0 0
        %4473 = vmatprep.subr.bf16.mxu0 0
        %4474 = vmatpush2.bf16.msra.mxu0 0
        %4475 = vmatprep.mubr.bf16.mxu0 0
        %4476 = vmatmul.mubr.bf16.gmra.mxu0 %v4432
        %v4477 = vpop.f32.mrf.mxu0
        %v4478 = vadd.f32 0.0, %v4477
        %v4479 = vpop.f32.mrf.mxu0
        %v4480 = vpop.f32.mrf.mxu0
        %v4481 = vadd.f32 0.0, %v4480
        %v4482 = vpop.f32.mrf.mxu0
        %4483 = vmatprep.mubr.bf16.mxu0 0
        %4484 = vmatmul.mubr.bf16.gmra.mxu0 %v4435
        %v4485 = vpop.f32.mrf.mxu0
        %v4486 = vadd.f32 0.0, %v4485
        %v4487 = vpop.f32.mrf.mxu0
        %v4488 = vpop.f32.mrf.mxu0
        %v4489 = vadd.f32 0.0, %v4488
        %v4490 = vpop.f32.mrf.mxu0
        %4491 = vmatprep.mubr.bf16.mxu0 0
        %4492 = vmatmul.mubr.bf16.gmra.mxu0 %v4438
        %v4493 = vpop.f32.mrf.mxu0
        %v4494 = vadd.f32 0.0, %v4493
        %v4495 = vpop.f32.mrf.mxu0
        %v4496 = vpop.f32.mrf.mxu0
        %v4497 = vadd.f32 0.0, %v4496
        %v4498 = vpop.f32.mrf.mxu0
        %4499 = vmatprep.mubr.bf16.mxu0 0
        %4500 = vmatmul.mubr.bf16.gmra.mxu0 %v4441
        %v4501 = vpop.f32.mrf.mxu0
        %v4502 = vadd.f32 0.0, %v4501
        %v4503 = vpop.f32.mrf.mxu0
        %v4504 = vpop.f32.mrf.mxu0
        %v4505 = vadd.f32 0.0, %v4504
        %v4506 = vpop.f32.mrf.mxu0
        %4507 = vdwg.mxu0
        %v4508 = vmax.f32 %v4478, 0.0
        %v4509 = vmax.f32 %v4481, 0.0
        %v4510 = vmax.f32 %v4486, 0.0
        %v4511 = vmax.f32 %v4489, 0.0
        %v4512 = vmax.f32 %v4494, 0.0
        %v4513 = vmax.f32 %v4497, 0.0
        %v4514 = vmax.f32 %v4502, 0.0
        %v4515 = vmax.f32 %v4505, 0.0
        %v4516 = vld [vmem:[%s10] sm:$0x3]
        %v4517 = vpack.c.bf16 %v4509, %v4508
        %v4518 = vpack.c.bf16 %v4511, %v4510
        %v4519 = vpack.c.bf16 %v4513, %v4512
        %v4520 = vpack.c.bf16 %v4515, %v4514
        %v4522 = vsel %vm4026, %v4516, 0
        %4524 = vmatprep.subr.bf16.mxu0 0
        %4525 = vmatpush1.bf16.msra.mxu0 0
        %4526 = vmatprep.subr.bf16.mxu0 0
        %4527 = vmatpush1.bf16.msra.mxu0 0
        %4528 = vmatprep.subr.bf16.mxu0 0
        %4529 = vmatpush1.bf16.msra.mxu0 0
        %4530 = vmatprep.subr.bf16.mxu0 0
        %4531 = vmatpush1.bf16.msra.mxu0 0
        %4532 = vmatprep.subr.bf16.mxu0 0
        %4533 = vmatpush1.bf16.msra.mxu0 %v4520
        %4534 = vmatprep.subr.bf16.mxu0 0
        %4535 = vmatpush1.bf16.msra.mxu0 %v4519
        %4536 = vmatprep.subr.bf16.mxu0 0
        %4537 = vmatpush1.bf16.msra.mxu0 %v4518
        %4538 = vmatprep.subr.bf16.mxu0 0
        %4539 = vmatpush1.bf16.msra.mxu0 %v4517
        %4540 = vmatprep.subr.bf16.mxu0 0
        %4541 = vmatpush2.bf16.msra.mxu0 0
        %4542 = vmatprep.subr.bf16.mxu0 0
        %4543 = vmatpush2.bf16.msra.mxu0 0
        %4544 = vmatprep.subr.bf16.mxu0 0
        %4545 = vmatpush2.bf16.msra.mxu0 0
        %4546 = vmatprep.subr.bf16.mxu0 0
        %4547 = vmatpush2.bf16.msra.mxu0 0
        %4548 = vmatprep.subr.bf16.mxu0 0
        %4549 = vmatpush2.bf16.msra.mxu0 0
        %4550 = vmatprep.subr.bf16.mxu0 0
        %4551 = vmatpush2.bf16.msra.mxu0 0
        %4552 = vmatprep.subr.bf16.mxu0 0
        %4553 = vmatpush2.bf16.msra.mxu0 0
        %4554 = vmatprep.subr.bf16.mxu0 0
        %4555 = vmatpush2.bf16.msra.mxu0 0
        %4556 = vmatprep.mubr.bf16.mxu0 0
        %4557 = vmatmul.mubr.bf16.gmra.mxu0 %v4522
        %v4558 = vpop.f32.mrf.mxu0
        %v4559 = vadd.f32 0.0, %v4558
        %v4560 = vpop.f32.mrf.mxu0
        %v4561 = vpop.f32.mrf.mxu0
        %v4562 = vpop.f32.mrf.mxu0
        %4563 = vdwg.mxu0
        %v4564 = vxor.u32 %v4559, 2147483648
        %v4565 = vmul.f32 %v4564, 1.442695
        %v4566 = vpow.pop %v4565
        %v4567 = vadd.f32 %v4566, 1.0
        %v4568 = vrcp.pop %v4567
        %v4569 = vmul.f32 1.0, %v4568
        %v4571 = vrot.slane %v4569, 7
        %v4573 = vsel %vm3881, %v4072, %v4571
        %4574 = vst [vmem:[%s532] sm:$0xf] %v4573
        %p4575 = scmp.lt.s32.totalorder %s22, 3
        %s4576 = scalar_select %p4575, %s22, 3
        %s4577 = smul.addr %s4576, 4
        %s4578 = scalar_lea.vmem %s11, %s4577
        // Predicated region
        $region141: #{ngp_forward.1} parent=131 // pred_check
          %p4579 = pneg %p291
        $region142: #{ngp_forward.1} parent=131 // pred_check_branch
          %4581 = sbr.rel (%p4579) target = $region144
        $region143: #{ngp_forward.1} parent=131 // pred_region
          _
        $region144: #{ngp_forward.1} parent=131 // pred_fallthru
          _
      $region132: #{ngp_forward.1} parent=5 // pred_fallthru
        _
      %p4582 = scmp.le.s32.totalorder 2, %s17
      // Predicated region
      $region145: #{ngp_forward.1} parent=5 // pred_check
        %p4583 = pneg %p4582
      $region146: #{ngp_forward.1} parent=5 // pred_check_branch
        %4585 = sbr.rel (%p4583) target = $region148
      $region147: #{ngp_forward.1} parent=5 // pred_region
        %s4586 = ssub.s32 %s17, 2
        // Predicated region
        $region149: #{ngp_forward.1} parent=147 // pred_check
          %p4587 = pneg %p297
        $region150: #{ngp_forward.1} parent=147 // pred_check_branch
          %4589 = sbr.rel (%p4587) target = $region152
        $region151: #{ngp_forward.1} parent=147 // pred_region
          %p4590 = scmp.lt.s32.totalorder %s23, 3
          %s4591 = scalar_select %p4590, %s23, 3
          %s4592 = smul.addr %s4591, 4
          %s4593 = scalar_lea.vmem %s11, %s4592
        $region152: #{ngp_forward.1} parent=147 // pred_fallthru
          _
      $region148: #{ngp_forward.1} parent=5 // pred_fallthru
        _
    $region6: #{ngp_forward.1} parent=1 // loop_footer
      %s21 = sadd.s32 1, %s17
    $region7: #{ngp_forward.1} parent=1 // loop_footer_branch
      %16 = sbr.rel target = $region3
    $region8: #{ngp_forward.1} parent=1 // loop_exit
      _

</llo_original>
